<compile_context>
chip_gen: v5e
topology: v5e:2x2
jax: 0.10.0
libtpu: 0.0.40
codegen_flags: <defaults>
</compile_context>

<pallas_src>
import functools

import jax
import jax.numpy as jnp
from jax.experimental import pallas as pl
from jax.experimental.pallas import tpu as pltpu

# -----------------------------------------------------------------------------
# Static layout constants.  Input 36x32 is implied by nn.Linear(192, 64):
#   36x32 --s2--> 17x15 --s2--> 8x7 --s1--> 6x5 --s1--> 4x3, and 16*4*3 = 192.
# Conv-1 output is stored phase-decomposed: 4 parity blocks of 9x8 rows per image
# (288 rows / image).  Later layers store row-major on a width-8 grid.
# -----------------------------------------------------------------------------
_S1_STRIDE = 4 * 9 * 8            # 288 rows / image: conv-1 out (phased layout)
_S2_ROWS = _S2_STRIDE = 8 * 8     # conv-2 out rows / image (8x8 grid, 8x7 valid)
_S3_ROWS = _S3_STRIDE = 6 * 8     # conv-3 out rows / image (6x8 grid, 6x5 valid)
_S4_ROWS = _S4_STRIDE = 4 * 8     # conv-4 out rows / image (4x8 grid, 4x3 valid)
_SLACK = 8                        # slack rows so tap-slab over-reads stay in-bounds

# Conv-2 tap row-offsets into the phase-decomposed conv-1 output:
#   phase id = 2*(kh&1) + (kw&1); within-phase shift = (kh//2)*8 + (kw//2).
_TAPS_PHASE = tuple((2 * (kh % 2) + (kw % 2)) * 72 + (kh // 2) * 8 + (kw // 2)
                    for kh in range(3) for kw in range(3))
# Stride-1 conv tap row-offsets into a width-8 row-major layout.
_TAPS_W8 = tuple(kh * 8 + kw for kh in range(3) for kw in range(3))

_EPS = 1e-5


# ------------------------------ the fused kernel ------------------------------

def _actor_kernel(x1_ref,                                   # (1, gb*288, 9) bf16
                  wblob_ref,                                # (72, 40)       bf16
                  sh_ref,                                   # (1, 104+A)     f32
                  fc1w_ref,                                 # (12, 16, 64)   f32
                  fc2w_ref,                                 # (64, A)        f32
                  o_ref,                                    # (1, gb, A)     f32
                  s1, s2, s3, s4, stage):                   # VMEM scratch
    f32 = jnp.float32
    gb = o_ref.shape[1]                                     # images in this grid step
    act = o_ref.shape[2]

    # Unpack the two packed operand blobs (static lane slices at multiples of 8).
    c2w = wblob_ref[:, 0:8].astype(f32)                     # (72, 8)
    c3w = wblob_ref[:, 8:16].astype(f32)                    # (72, 8)
    c4w = wblob_ref[:, 16:32].astype(f32)                   # (72, 16)
    c1w = wblob_ref[0:9, 32:40]                             # (9, 8) bf16
    c1s = sh_ref[:, 0:8]
    c2s = sh_ref[:, 8:16]
    c3s = sh_ref[:, 16:24]
    c4s = sh_ref[:, 24:40]
    fc1b = sh_ref[:, 40:104]
    fc2b = sh_ref[:, 104:104 + act]

    # Zero ONLY the slack rows: the last image's tap slabs over-read up to 2 rows past
    # its block; those rows feed discarded junk outputs but must be in-bounds & finite.
    s1[gb * _S1_STRIDE:, :] = jnp.zeros((_SLACK, 8), f32)
    s2[gb * _S2_STRIDE:, :] = jnp.zeros((_SLACK, 8), f32)
    s3[gb * _S3_STRIDE:, :] = jnp.zeros((_SLACK, 8), f32)

    # ---- conv1 (1->8, s2) + BN + ReLU: ONE matmul over the whole phased-im2col block.
    y1 = jnp.dot(x1_ref[0], c1w, preferred_element_type=f32)          # (gb*288, 8)
    s1[0:gb * _S1_STRIDE, :] = jnp.maximum(y1 + c1s, 0.0)

    # ---- conv2..conv4: the 9 taps are folded into the contraction dim (K = 72). ------
    def conv_layer(src, dst, w, shift, rows_out, src_stride, taps):
        for n in range(gb):
            base = n * src_stride
            for t, off in enumerate(taps):
                stage[0:rows_out, t * 8:(t + 1) * 8] = (
                    src[base + off:base + off + rows_out, :])
            y = jnp.dot(stage[0:rows_out, :], w, preferred_element_type=f32)
            dst[n * rows_out:(n + 1) * rows_out, :] = jnp.maximum(y + shift, 0.0)

    conv_layer(s1, s2, c2w, c2s, _S2_ROWS, _S1_STRIDE, _TAPS_PHASE)
    conv_layer(s2, s3, c3w, c3s, _S3_ROWS, _S2_STRIDE, _TAPS_W8)
    conv_layer(s3, s4, c4w, c4s, _S4_ROWS, _S3_STRIDE, _TAPS_W8)

    # ---- head: Flatten -> Linear(192,64) -> Linear(64,A) -> exact Softmax. ------------
    # fc1w is pre-permuted to (pixel, cin, cout), so PyTorch's channel-major Flatten is a
    # sum of 12 image-batched (gb,16)@(16,64) matmuls (no transpose anywhere).
    h = jnp.zeros((gb, 64), f32)
    for p in range(12):
        i, j = divmod(p, 3)
        pix = i * 8 + j
        if gb == 1:
            rows = s4[pix:pix + 1, :]                                  # (1, 16)
        else:
            rows = jnp.concatenate(
                [s4[n * _S4_STRIDE + pix:n * _S4_STRIDE + pix + 1, :]
                 for n in range(gb)], axis=0)                          # (gb, 16)
        h = h + jnp.dot(rows, fc1w_ref[p], preferred_element_type=f32)
    h = h + fc1b
    logits = jnp.dot(h, fc2w_ref[...], preferred_element_type=f32) + fc2b
    m = jnp.max(logits, axis=-1, keepdims=True)
    e = jnp.exp(logits - m)
    # Exact divide (NOT approx reciprocal) so the probabilities sum to 1.
    o_ref[0] = e / jnp.sum(e, axis=-1, keepdims=True)


# ------------------------------ plain-JAX glue ---------------------------------

def _fold_conv_bn(w, b, gamma, beta, mean, var):
    """Fold conv bias + inference-mode BatchNorm into per-tap weights and a shift.

    w: (Cout, Cin, 3, 3).  Returns (w_taps: (9, Cin, Cout), shift: (1, Cout)) such that
    BN(conv(x, w) + b) == sum_t patch_t @ w_taps[t] + shift.
    """
    scale = gamma / jnp.sqrt(var + _EPS)                              # (Cout,)
    shift = (beta + (b - mean) * scale).reshape(1, -1)                # (1, Cout)
    w_taps = jnp.transpose(w, (2, 3, 1, 0)).reshape(9, w.shape[1], w.shape[0]) * scale
    return w_taps, shift


def _l1_im2col_phased(x):
    """Conv-1 im2col with rows ordered (image, phase(p,q), u, v).

    x: (N, 36, 32).  Row n*288 + (2p+q)*72 + u*8 + v holds the 3x3 patch feeding conv-1
    output pixel (i, j) = (2u+p, 2v+q); rows with i >= 17 or j >= 15 are zero padding.
    """
    n = x.shape[0]
    cols = [x[:, kh:kh + 33:2, kw:kw + 29:2]
            for kh in range(3) for kw in range(3)]                    # 9 x (N, 17, 15)
    p = jnp.stack(cols, axis=-1)                                      # (N, 17, 15, 9)
    p = jnp.pad(p, ((0, 0), (0, 1), (0, 1), (0, 0)))                  # (N, 18, 16, 9)
    p = p.reshape(n, 9, 2, 8, 2, 9)                                   # (N, u, p, v, q, t)
    p = jnp.transpose(p, (0, 2, 4, 1, 3, 5))                          # (N, p, q, u, v, t)
    return p.reshape(n * _S1_STRIDE, 9)


@functools.partial(jax.jit, static_argnames=("block_batch",))
def actor_forward(x_nchw, params, block_batch=2):
    """Fused Actor forward.  x_nchw: (N, 1, 36, 32) -> softmax probs (N, A), i.e. the
    parameters of torch.distributions.Categorical."""
    c1, c2, c3, c4, (w1, b1, w2, b2) = params
    n_img = x_nchw.shape[0]
    act = w2.shape[1]
    gb = block_batch if (block_batch and n_img % block_batch == 0) else 1
    grid = n_img // gb

    # Layer-1 im2col (depends only on the input), bf16: the kernel's only sizable DMA.
    x1 = _l1_im2col_phased(x_nchw[:, 0]).astype(jnp.bfloat16)
    x1 = x1.reshape(grid, gb * _S1_STRIDE, 9)

    # Fold conv bias + BN into per-tap weights / per-channel shifts; pack into 2 blobs.
    c1w, c1s = _fold_conv_bn(*c1)                                     # (9,1,8),  (1,8)
    c2w, c2s = _fold_conv_bn(*c2)                                     # (9,8,8),  (1,8)
    c3w, c3s = _fold_conv_bn(*c3)                                     # (9,8,8),  (1,8)
    c4w, c4s = _fold_conv_bn(*c4)                                     # (9,8,16), (1,16)
    wblob = jnp.zeros((72, 40), jnp.float32)
    wblob = wblob.at[:, 0:8].set(c2w.reshape(72, 8))
    wblob = wblob.at[:, 8:16].set(c3w.reshape(72, 8))
    wblob = wblob.at[:, 16:32].set(c4w.reshape(72, 16))
    wblob = wblob.at[0:9, 32:40].set(c1w.reshape(9, 8))
    wblob = wblob.astype(jnp.bfloat16)
    shifts = jnp.concatenate(
        [c1s, c2s, c3s, c4s, b1.reshape(1, 64), b2.reshape(1, act)], axis=1)
    # Pre-permute Linear(192, 64): torch flatten index = c*12 + (i*3 + j).
    fc1w = w1.reshape(16, 12, 64).transpose(1, 0, 2)                  # (12, 16, 64)

    out = pl.pallas_call(
        _actor_kernel,
        out_shape=jax.ShapeDtypeStruct((grid, gb, act), jnp.float32),
        grid=(grid,),
        in_specs=[
            pl.BlockSpec((1, gb * _S1_STRIDE, 9), lambda g: (g, 0, 0)),
            pl.BlockSpec(wblob.shape, lambda g: (0, 0)),
            pl.BlockSpec(shifts.shape, lambda g: (0, 0)),
            pl.BlockSpec(fc1w.shape, lambda g: (0, 0, 0)),
            pl.BlockSpec(w2.shape, lambda g: (0, 0)),
        ],
        out_specs=pl.BlockSpec((1, gb, act), lambda g: (g, 0, 0)),
        scratch_shapes=[
            pltpu.VMEM((gb * _S1_STRIDE + _SLACK, 8), jnp.float32),   # conv-1 out (phased)
            pltpu.VMEM((gb * _S2_STRIDE + _SLACK, 8), jnp.float32),   # conv-2 out
            pltpu.VMEM((gb * _S3_STRIDE + _SLACK, 8), jnp.float32),   # conv-3 out
            pltpu.VMEM((gb * _S4_STRIDE, 16), jnp.float32),           # conv-4 out
            pltpu.VMEM((_S2_ROWS, 72), jnp.float32),                  # tap-fold staging
        ],
        compiler_params=pltpu.CompilerParams(
            dimension_semantics=("parallel",)),
    )(x1, wblob, shifts, fc1w, w2)
    return out.reshape(n_img, act)


# -------------------- plain-JAX reference (numerics check only) -----------------

def _ref_conv_block(x, p, stride):
    w, b, gamma, beta, mean, var = p
    y = jax.lax.conv_general_dilated(
        x, w, window_strides=(stride, stride), padding="VALID",
        dimension_numbers=("NCHW", "OIHW", "NCHW"))
    y = y + b[None, :, None, None]
    y = (y - mean[None, :, None, None]) * (gamma / jnp.sqrt(var + _EPS))[None, :, None, None]
    y = y + beta[None, :, None, None]
    return jnp.maximum(y, 0.0)


@jax.jit
def actor_forward_ref(x_nchw, params):
    c1, c2, c3, c4, (w1, b1, w2, b2) = params
    h = _ref_conv_block(x_nchw, c1, 2)
    h = _ref_conv_block(h, c2, 2)
    h = _ref_conv_block(h, c3, 1)
    h = _ref_conv_block(h, c4, 1)
    f = h.reshape(h.shape[0], -1)            # NCHW flatten (channel-major), like torch
    z = f @ w1 + b1
    logits = z @ w2 + b2
    return jax.nn.softmax(logits, axis=-1)


# ------------------------------ parameter init ----------------------------------

def _init_conv_block(key, cin, cout):
    k1, k2, k3, k4, k5, k6 = jax.random.split(key, 6)
    w = 0.1 * jax.random.normal(k1, (cout, cin, 3, 3), jnp.float32)
    b = 0.1 * jax.random.normal(k2, (cout,), jnp.float32)
    gamma = 1.0 + 0.1 * jax.random.normal(k3, (cout,), jnp.float32)
    beta = 0.1 * jax.random.normal(k4, (cout,), jnp.float32)
    mean = 0.1 * jax.random.normal(k5, (cout,), jnp.float32)
    var = 1.0 + 0.5 * jax.random.uniform(k6, (cout,), jnp.float32)
    return (w, b, gamma, beta, mean, var)


def init_params(key, action_size):
    k1, k2, k3, k4, k5, k6, k7, k8 = jax.random.split(key, 8)
    c1 = _init_conv_block(k1, 1, 8)
    c2 = _init_conv_block(k2, 8, 8)
    c3 = _init_conv_block(k3, 8, 8)
    c4 = _init_conv_block(k4, 8, 16)
    w1 = 0.1 * jax.random.normal(k5, (192, 64), jnp.float32)
    b1 = 0.1 * jax.random.normal(k6, (64,), jnp.float32)
    w2 = 0.1 * jax.random.normal(k7, (64, action_size), jnp.float32)
    b2 = 0.1 * jax.random.normal(k8, (action_size,), jnp.float32)
    return (c1, c2, c3, c4, (w1, b1, w2, b2))


# ----------------------------------- main ---------------------------------------

if __name__ == "__main__":
    key = jax.random.PRNGKey(0)
    kx, kp = jax.random.split(key)
    action_size = 6
    # Spatial size chosen so the conv stack yields 16*4*3 = 192 features, matching
    # nn.Linear(192, 64):  36x32 -> 17x15 -> 8x7 -> 6x5 -> 4x3.
    x = jax.random.normal(kx, (4, 1, 36, 32), jnp.float32)            # NCHW, like PyTorch
    params = init_params(kp, action_size)

    probs = jax.block_until_ready(actor_forward(x, params))           # grid=(2,), 2 img/step
    ref = jax.block_until_ready(actor_forward_ref(x, params))

    assert probs.shape == (4, action_size), probs.shape
    assert bool(jnp.all(jnp.isfinite(probs)))
    assert bool(jnp.allclose(jnp.sum(probs, axis=1), 1.0, atol=1e-3))
    err = float(jnp.max(jnp.abs(probs - ref)))
    assert err < 1e-2, f"Pallas kernel disagrees with plain-JAX reference: max|diff|={err}"
    print("KERNEL_OK")
</pallas_src>

<mosaic_0001>
module attributes {stable_mosaic.version = 11 : i64} {
  func.func @_actor_kernel(%arg0: i32, %arg1: memref<1x576x9xbf16, #tpu.memory_space<vmem>>, %arg2: memref<72x40xbf16, #tpu.memory_space<vmem>>, %arg3: memref<1x110xf32, #tpu.memory_space<vmem>>, %arg4: memref<12x16x64xf32, #tpu.memory_space<vmem>>, %arg5: memref<64x6xf32, #tpu.memory_space<vmem>>, %arg6: memref<1x2x6xf32, #tpu.memory_space<vmem>>, %arg7: memref<584x8xf32, #tpu.memory_space<vmem>>, %arg8: memref<136x8xf32, #tpu.memory_space<vmem>>, %arg9: memref<104x8xf32, #tpu.memory_space<vmem>>, %arg10: memref<64x16xf32, #tpu.memory_space<vmem>>, %arg11: memref<64x72xf32, #tpu.memory_space<vmem>>) attributes {dimension_semantics = [#tpu.dimension_semantics<parallel>], iteration_bounds = array<i64: 2>, scalar_prefetch = 0 : i64, scratch_operands = 5 : i64, tpu.core_type = #tpu.core_type<tc>, window_params = [{transform_indices = @transform_0, window_bounds = array<i64: 1, 576, 9>}, {pipeline_mode = #tpu.pipeline_mode<synchronous>, transform_indices = @transform_1, window_bounds = array<i64: 72, 40>}, {pipeline_mode = #tpu.pipeline_mode<synchronous>, transform_indices = @transform_2, window_bounds = array<i64: 1, 110>}, {pipeline_mode = #tpu.pipeline_mode<synchronous>, transform_indices = @transform_3, window_bounds = array<i64: 12, 16, 64>}, {pipeline_mode = #tpu.pipeline_mode<synchronous>, transform_indices = @transform_4, window_bounds = array<i64: 64, 6>}, {transform_indices = @transform_5, window_bounds = array<i64: 1, 2, 6>}]} {
    %c0 = arith.constant 0 : index
    %c0_0 = arith.constant 0 : index
    %0 = vector.load %arg2[%c0, %c0_0] : memref<72x40xbf16, #tpu.memory_space<vmem>>, vector<72x8xbf16>
    %1 = arith.extf %0 : vector<72x8xbf16> to vector<72x8xf32>
    %c0_1 = arith.constant 0 : index
    %c8 = arith.constant 8 : index
    %2 = vector.load %arg2[%c0_1, %c8] : memref<72x40xbf16, #tpu.memory_space<vmem>>, vector<72x8xbf16>
    %3 = arith.extf %2 : vector<72x8xbf16> to vector<72x8xf32>
    %c0_2 = arith.constant 0 : index
    %c16 = arith.constant 16 : index
    %4 = vector.load %arg2[%c0_2, %c16] : memref<72x40xbf16, #tpu.memory_space<vmem>>, vector<72x16xbf16>
    %5 = arith.extf %4 : vector<72x16xbf16> to vector<72x16xf32>
    %c0_3 = arith.constant 0 : index
    %c32 = arith.constant 32 : index
    %6 = vector.load %arg2[%c0_3, %c32] : memref<72x40xbf16, #tpu.memory_space<vmem>>, vector<9x8xbf16>
    %c0_4 = arith.constant 0 : index
    %c0_5 = arith.constant 0 : index
    %7 = vector.load %arg3[%c0_4, %c0_5] : memref<1x110xf32, #tpu.memory_space<vmem>>, vector<1x8xf32>
    %c0_6 = arith.constant 0 : index
    %c8_7 = arith.constant 8 : index
    %8 = vector.load %arg3[%c0_6, %c8_7] : memref<1x110xf32, #tpu.memory_space<vmem>>, vector<1x8xf32>
    %c0_8 = arith.constant 0 : index
    %c16_9 = arith.constant 16 : index
    %9 = vector.load %arg3[%c0_8, %c16_9] : memref<1x110xf32, #tpu.memory_space<vmem>>, vector<1x8xf32>
    %c0_10 = arith.constant 0 : index
    %c24 = arith.constant 24 : index
    %10 = vector.load %arg3[%c0_10, %c24] : memref<1x110xf32, #tpu.memory_space<vmem>>, vector<1x16xf32>
    %c0_11 = arith.constant 0 : index
    %c40 = arith.constant 40 : index
    %11 = vector.load %arg3[%c0_11, %c40] : memref<1x110xf32, #tpu.memory_space<vmem>>, vector<1x64xf32>
    %c0_12 = arith.constant 0 : index
    %c104 = arith.constant 104 : index
    %12 = vector.load %arg3[%c0_12, %c104] : memref<1x110xf32, #tpu.memory_space<vmem>>, vector<1x6xf32>
    %cst = arith.constant 0.000000e+00 : f32
    %13 = vector.broadcast %cst : f32 to vector<8x8xf32>
    %c576 = arith.constant 576 : index
    %c0_13 = arith.constant 0 : index
    %14 = vector.load %arg7[%c576, %c0_13] : memref<584x8xf32, #tpu.memory_space<vmem>>, vector<8x8xf32>
    tpu.vector_store %arg7[%c576, %c0_13], %13 {strides = array<i32>} : memref<584x8xf32, #tpu.memory_space<vmem>>, vector<8x8xf32>,
    %cst_14 = arith.constant 0.000000e+00 : f32
    %15 = vector.broadcast %cst_14 : f32 to vector<8x8xf32>
    %c128 = arith.constant 128 : index
    %c0_15 = arith.constant 0 : index
    %16 = vector.load %arg8[%c128, %c0_15] : memref<136x8xf32, #tpu.memory_space<vmem>>, vector<8x8xf32>
    tpu.vector_store %arg8[%c128, %c0_15], %15 {strides = array<i32>} : memref<136x8xf32, #tpu.memory_space<vmem>>, vector<8x8xf32>,
    %cst_16 = arith.constant 0.000000e+00 : f32
    %17 = vector.broadcast %cst_16 : f32 to vector<8x8xf32>
    %c96 = arith.constant 96 : index
    %c0_17 = arith.constant 0 : index
    %18 = vector.load %arg9[%c96, %c0_17] : memref<104x8xf32, #tpu.memory_space<vmem>>, vector<8x8xf32>
    tpu.vector_store %arg9[%c96, %c0_17], %17 {strides = array<i32>} : memref<104x8xf32, #tpu.memory_space<vmem>>, vector<8x8xf32>,
    %c0_18 = arith.constant 0 : index
    %c0_19 = arith.constant 0 : index
    %c0_20 = arith.constant 0 : index
    %19 = vector.load %arg1[%c0_18, %c0_19, %c0_20] : memref<1x576x9xbf16, #tpu.memory_space<vmem>>, vector<1x576x9xbf16>
    %20 = vector.shape_cast %19 : vector<1x576x9xbf16> to vector<576x9xbf16>
    %cst_21 = arith.constant dense<0.000000e+00> : vector<576x8xf32>
    %21 = tpu.matmul %20, %6, %cst_21 {dimension_numbers = #tpu.dot_dimension_numbers<[1], [0], [0], [1], [0, 0, 1, 1], [], []>} : vector<576x9xbf16>, vector<9x8xbf16>, vector<576x8xf32> -> vector<576x8xf32>
    %22 = vector.broadcast %7 : vector<1x8xf32> to vector<576x8xf32>
    %23 = arith.addf %21, %22 : vector<576x8xf32>
    %cst_22 = arith.constant 0.000000e+00 : f32
    %24 = vector.broadcast %cst_22 : f32 to vector<576x8xf32>
    %25 = arith.maximumf %23, %24 : vector<576x8xf32>
    %c0_23 = arith.constant 0 : index
    %c0_24 = arith.constant 0 : index
    %26 = vector.load %arg7[%c0_23, %c0_24] : memref<584x8xf32, #tpu.memory_space<vmem>>, vector<576x8xf32>
    tpu.vector_store %arg7[%c0_23, %c0_24], %25 {strides = array<i32>} : memref<584x8xf32, #tpu.memory_space<vmem>>, vector<576x8xf32>,
    %c0_25 = arith.constant 0 : index
    %c0_26 = arith.constant 0 : index
    %27 = vector.load %arg7[%c0_25, %c0_26] : memref<584x8xf32, #tpu.memory_space<vmem>>, vector<64x8xf32>
    %c0_27 = arith.constant 0 : index
    %c0_28 = arith.constant 0 : index
    %28 = vector.load %arg11[%c0_27, %c0_28] : memref<64x72xf32, #tpu.memory_space<vmem>>, vector<64x8xf32>
    tpu.vector_store %arg11[%c0_27, %c0_28], %27 {strides = array<i32>} : memref<64x72xf32, #tpu.memory_space<vmem>>, vector<64x8xf32>,
    %c72 = arith.constant 72 : index
    %c0_29 = arith.constant 0 : index
    %29 = vector.load %arg7[%c72, %c0_29] : memref<584x8xf32, #tpu.memory_space<vmem>>, vector<64x8xf32>
    %c0_30 = arith.constant 0 : index
    %c8_31 = arith.constant 8 : index
    %30 = vector.load %arg11[%c0_30, %c8_31] : memref<64x72xf32, #tpu.memory_space<vmem>>, vector<64x8xf32>
    tpu.vector_store %arg11[%c0_30, %c8_31], %29 {strides = array<i32>} : memref<64x72xf32, #tpu.memory_space<vmem>>, vector<64x8xf32>,
    %c1 = arith.constant 1 : index
    %c0_32 = arith.constant 0 : index
    %31 = vector.load %arg7[%c1, %c0_32] : memref<584x8xf32, #tpu.memory_space<vmem>>, vector<64x8xf32>
    %c0_33 = arith.constant 0 : index
    %c16_34 = arith.constant 16 : index
    %32 = vector.load %arg11[%c0_33, %c16_34] : memref<64x72xf32, #tpu.memory_space<vmem>>, vector<64x8xf32>
    tpu.vector_store %arg11[%c0_33, %c16_34], %31 {strides = array<i32>} : memref<64x72xf32, #tpu.memory_space<vmem>>, vector<64x8xf32>,
    %c144 = arith.constant 144 : index
    %c0_35 = arith.constant 0 : index
    %33 = vector.load %arg7[%c144, %c0_35] : memref<584x8xf32, #tpu.memory_space<vmem>>, vector<64x8xf32>
    %c0_36 = arith.constant 0 : index
    %c24_37 = arith.constant 24 : index
    %34 = vector.load %arg11[%c0_36, %c24_37] : memref<64x72xf32, #tpu.memory_space<vmem>>, vector<64x8xf32>
    tpu.vector_store %arg11[%c0_36, %c24_37], %33 {strides = array<i32>} : memref<64x72xf32, #tpu.memory_space<vmem>>, vector<64x8xf32>,
    %c216 = arith.constant 216 : index
    %c0_38 = arith.constant 0 : index
    %35 = vector.load %arg7[%c216, %c0_38] : memref<584x8xf32, #tpu.memory_space<vmem>>, vector<64x8xf32>
    %c0_39 = arith.constant 0 : index
    %c32_40 = arith.constant 32 : index
    %36 = vector.load %arg11[%c0_39, %c32_40] : memref<64x72xf32, #tpu.memory_space<vmem>>, vector<64x8xf32>
    tpu.vector_store %arg11[%c0_39, %c32_40], %35 {strides = array<i32>} : memref<64x72xf32, #tpu.memory_space<vmem>>, vector<64x8xf32>,
    %c145 = arith.constant 145 : index
    %c0_41 = arith.constant 0 : index
    %37 = vector.load %arg7[%c145, %c0_41] : memref<584x8xf32, #tpu.memory_space<vmem>>, vector<64x8xf32>
    %c0_42 = arith.constant 0 : index
    %c40_43 = arith.constant 40 : index
    %38 = vector.load %arg11[%c0_42, %c40_43] : memref<64x72xf32, #tpu.memory_space<vmem>>, vector<64x8xf32>
    tpu.vector_store %arg11[%c0_42, %c40_43], %37 {strides = array<i32>} : memref<64x72xf32, #tpu.memory_space<vmem>>, vector<64x8xf32>,
    %c8_44 = arith.constant 8 : index
    %c0_45 = arith.constant 0 : index
    %39 = vector.load %arg7[%c8_44, %c0_45] : memref<584x8xf32, #tpu.memory_space<vmem>>, vector<64x8xf32>
    %c0_46 = arith.constant 0 : index
    %c48 = arith.constant 48 : index
    %40 = vector.load %arg11[%c0_46, %c48] : memref<64x72xf32, #tpu.memory_space<vmem>>, vector<64x8xf32>
    tpu.vector_store %arg11[%c0_46, %c48], %39 {strides = array<i32>} : memref<64x72xf32, #tpu.memory_space<vmem>>, vector<64x8xf32>,
    %c80 = arith.constant 80 : index
    %c0_47 = arith.constant 0 : index
    %41 = vector.load %arg7[%c80, %c0_47] : memref<584x8xf32, #tpu.memory_space<vmem>>, vector<64x8xf32>
    %c0_48 = arith.constant 0 : index
    %c56 = arith.constant 56 : index
    %42 = vector.load %arg11[%c0_48, %c56] : memref<64x72xf32, #tpu.memory_space<vmem>>, vector<64x8xf32>
    tpu.vector_store %arg11[%c0_48, %c56], %41 {strides = array<i32>} : memref<64x72xf32, #tpu.memory_space<vmem>>, vector<64x8xf32>,
    %c9 = arith.constant 9 : index
    %c0_49 = arith.constant 0 : index
    %43 = vector.load %arg7[%c9, %c0_49] : memref<584x8xf32, #tpu.memory_space<vmem>>, vector<64x8xf32>
    %c0_50 = arith.constant 0 : index
    %c64 = arith.constant 64 : index
    %44 = vector.load %arg11[%c0_50, %c64] : memref<64x72xf32, #tpu.memory_space<vmem>>, vector<64x8xf32>
    tpu.vector_store %arg11[%c0_50, %c64], %43 {strides = array<i32>} : memref<64x72xf32, #tpu.memory_space<vmem>>, vector<64x8xf32>,
    %c0_51 = arith.constant 0 : index
    %c0_52 = arith.constant 0 : index
    %45 = vector.load %arg11[%c0_51, %c0_52] : memref<64x72xf32, #tpu.memory_space<vmem>>, vector<64x72xf32>
    %cst_53 = arith.constant dense<0.000000e+00> : vector<64x8xf32>
    %46 = tpu.matmul %45, %1, %cst_53 {dimension_numbers = #tpu.dot_dimension_numbers<[1], [0], [0], [1], [0, 0, 1, 1], [], []>} : vector<64x72xf32>, vector<72x8xf32>, vector<64x8xf32> -> vector<64x8xf32>
    %47 = vector.broadcast %8 : vector<1x8xf32> to vector<64x8xf32>
    %48 = arith.addf %46, %47 : vector<64x8xf32>
    %cst_54 = arith.constant 0.000000e+00 : f32
    %49 = vector.broadcast %cst_54 : f32 to vector<64x8xf32>
    %50 = arith.maximumf %48, %49 : vector<64x8xf32>
    %c0_55 = arith.constant 0 : index
    %c0_56 = arith.constant 0 : index
    %51 = vector.load %arg8[%c0_55, %c0_56] : memref<136x8xf32, #tpu.memory_space<vmem>>, vector<64x8xf32>
    tpu.vector_store %arg8[%c0_55, %c0_56], %50 {strides = array<i32>} : memref<136x8xf32, #tpu.memory_space<vmem>>, vector<64x8xf32>,
    %c288 = arith.constant 288 : index
    %c0_57 = arith.constant 0 : index
    %52 = vector.load %arg7[%c288, %c0_57] : memref<584x8xf32, #tpu.memory_space<vmem>>, vector<64x8xf32>
    %c0_58 = arith.constant 0 : index
    %c0_59 = arith.constant 0 : index
    %53 = vector.load %arg11[%c0_58, %c0_59] : memref<64x72xf32, #tpu.memory_space<vmem>>, vector<64x8xf32>
    tpu.vector_store %arg11[%c0_58, %c0_59], %52 {strides = array<i32>} : memref<64x72xf32, #tpu.memory_space<vmem>>, vector<64x8xf32>,
    %c360 = arith.constant 360 : index
    %c0_60 = arith.constant 0 : index
    %54 = vector.load %arg7[%c360, %c0_60] : memref<584x8xf32, #tpu.memory_space<vmem>>, vector<64x8xf32>
    %c0_61 = arith.constant 0 : index
    %c8_62 = arith.constant 8 : index
    %55 = vector.load %arg11[%c0_61, %c8_62] : memref<64x72xf32, #tpu.memory_space<vmem>>, vector<64x8xf32>
    tpu.vector_store %arg11[%c0_61, %c8_62], %54 {strides = array<i32>} : memref<64x72xf32, #tpu.memory_space<vmem>>, vector<64x8xf32>,
    %c289 = arith.constant 289 : index
    %c0_63 = arith.constant 0 : index
    %56 = vector.load %arg7[%c289, %c0_63] : memref<584x8xf32, #tpu.memory_space<vmem>>, vector<64x8xf32>
    %c0_64 = arith.constant 0 : index
    %c16_65 = arith.constant 16 : index
    %57 = vector.load %arg11[%c0_64, %c16_65] : memref<64x72xf32, #tpu.memory_space<vmem>>, vector<64x8xf32>
    tpu.vector_store %arg11[%c0_64, %c16_65], %56 {strides = array<i32>} : memref<64x72xf32, #tpu.memory_space<vmem>>, vector<64x8xf32>,
    %c432 = arith.constant 432 : index
    %c0_66 = arith.constant 0 : index
    %58 = vector.load %arg7[%c432, %c0_66] : memref<584x8xf32, #tpu.memory_space<vmem>>, vector<64x8xf32>
    %c0_67 = arith.constant 0 : index
    %c24_68 = arith.constant 24 : index
    %59 = vector.load %arg11[%c0_67, %c24_68] : memref<64x72xf32, #tpu.memory_space<vmem>>, vector<64x8xf32>
    tpu.vector_store %arg11[%c0_67, %c24_68], %58 {strides = array<i32>} : memref<64x72xf32, #tpu.memory_space<vmem>>, vector<64x8xf32>,
    %c504 = arith.constant 504 : index
    %c0_69 = arith.constant 0 : index
    %60 = vector.load %arg7[%c504, %c0_69] : memref<584x8xf32, #tpu.memory_space<vmem>>, vector<64x8xf32>
    %c0_70 = arith.constant 0 : index
    %c32_71 = arith.constant 32 : index
    %61 = vector.load %arg11[%c0_70, %c32_71] : memref<64x72xf32, #tpu.memory_space<vmem>>, vector<64x8xf32>
    tpu.vector_store %arg11[%c0_70, %c32_71], %60 {strides = array<i32>} : memref<64x72xf32, #tpu.memory_space<vmem>>, vector<64x8xf32>,
    %c433 = arith.constant 433 : index
    %c0_72 = arith.constant 0 : index
    %62 = vector.load %arg7[%c433, %c0_72] : memref<584x8xf32, #tpu.memory_space<vmem>>, vector<64x8xf32>
    %c0_73 = arith.constant 0 : index
    %c40_74 = arith.constant 40 : index
    %63 = vector.load %arg11[%c0_73, %c40_74] : memref<64x72xf32, #tpu.memory_space<vmem>>, vector<64x8xf32>
    tpu.vector_store %arg11[%c0_73, %c40_74], %62 {strides = array<i32>} : memref<64x72xf32, #tpu.memory_space<vmem>>, vector<64x8xf32>,
    %c296 = arith.constant 296 : index
    %c0_75 = arith.constant 0 : index
    %64 = vector.load %arg7[%c296, %c0_75] : memref<584x8xf32, #tpu.memory_space<vmem>>, vector<64x8xf32>
    %c0_76 = arith.constant 0 : index
    %c48_77 = arith.constant 48 : index
    %65 = vector.load %arg11[%c0_76, %c48_77] : memref<64x72xf32, #tpu.memory_space<vmem>>, vector<64x8xf32>
    tpu.vector_store %arg11[%c0_76, %c48_77], %64 {strides = array<i32>} : memref<64x72xf32, #tpu.memory_space<vmem>>, vector<64x8xf32>,
    %c368 = arith.constant 368 : index
    %c0_78 = arith.constant 0 : index
    %66 = vector.load %arg7[%c368, %c0_78] : memref<584x8xf32, #tpu.memory_space<vmem>>, vector<64x8xf32>
    %c0_79 = arith.constant 0 : index
    %c56_80 = arith.constant 56 : index
    %67 = vector.load %arg11[%c0_79, %c56_80] : memref<64x72xf32, #tpu.memory_space<vmem>>, vector<64x8xf32>
    tpu.vector_store %arg11[%c0_79, %c56_80], %66 {strides = array<i32>} : memref<64x72xf32, #tpu.memory_space<vmem>>, vector<64x8xf32>,
    %c297 = arith.constant 297 : index
    %c0_81 = arith.constant 0 : index
    %68 = vector.load %arg7[%c297, %c0_81] : memref<584x8xf32, #tpu.memory_space<vmem>>, vector<64x8xf32>
    %c0_82 = arith.constant 0 : index
    %c64_83 = arith.constant 64 : index
    %69 = vector.load %arg11[%c0_82, %c64_83] : memref<64x72xf32, #tpu.memory_space<vmem>>, vector<64x8xf32>
    tpu.vector_store %arg11[%c0_82, %c64_83], %68 {strides = array<i32>} : memref<64x72xf32, #tpu.memory_space<vmem>>, vector<64x8xf32>,
    %c0_84 = arith.constant 0 : index
    %c0_85 = arith.constant 0 : index
    %70 = vector.load %arg11[%c0_84, %c0_85] : memref<64x72xf32, #tpu.memory_space<vmem>>, vector<64x72xf32>
    %cst_86 = arith.constant dense<0.000000e+00> : vector<64x8xf32>
    %71 = tpu.matmul %70, %1, %cst_86 {dimension_numbers = #tpu.dot_dimension_numbers<[1], [0], [0], [1], [0, 0, 1, 1], [], []>} : vector<64x72xf32>, vector<72x8xf32>, vector<64x8xf32> -> vector<64x8xf32>
    %72 = vector.broadcast %8 : vector<1x8xf32> to vector<64x8xf32>
    %73 = arith.addf %71, %72 : vector<64x8xf32>
    %cst_87 = arith.constant 0.000000e+00 : f32
    %74 = vector.broadcast %cst_87 : f32 to vector<64x8xf32>
    %75 = arith.maximumf %73, %74 : vector<64x8xf32>
    %c64_88 = arith.constant 64 : index
    %c0_89 = arith.constant 0 : index
    %76 = vector.load %arg8[%c64_88, %c0_89] : memref<136x8xf32, #tpu.memory_space<vmem>>, vector<64x8xf32>
    tpu.vector_store %arg8[%c64_88, %c0_89], %75 {strides = array<i32>} : memref<136x8xf32, #tpu.memory_space<vmem>>, vector<64x8xf32>,
    %c0_90 = arith.constant 0 : index
    %c0_91 = arith.constant 0 : index
    %77 = vector.load %arg8[%c0_90, %c0_91] : memref<136x8xf32, #tpu.memory_space<vmem>>, vector<48x8xf32>
    %c0_92 = arith.constant 0 : index
    %c0_93 = arith.constant 0 : index
    %78 = vector.load %arg11[%c0_92, %c0_93] : memref<64x72xf32, #tpu.memory_space<vmem>>, vector<48x8xf32>
    tpu.vector_store %arg11[%c0_92, %c0_93], %77 {strides = array<i32>} : memref<64x72xf32, #tpu.memory_space<vmem>>, vector<48x8xf32>,
    %c1_94 = arith.constant 1 : index
    %c0_95 = arith.constant 0 : index
    %79 = vector.load %arg8[%c1_94, %c0_95] : memref<136x8xf32, #tpu.memory_space<vmem>>, vector<48x8xf32>
    %c0_96 = arith.constant 0 : index
    %c8_97 = arith.constant 8 : index
    %80 = vector.load %arg11[%c0_96, %c8_97] : memref<64x72xf32, #tpu.memory_space<vmem>>, vector<48x8xf32>
    tpu.vector_store %arg11[%c0_96, %c8_97], %79 {strides = array<i32>} : memref<64x72xf32, #tpu.memory_space<vmem>>, vector<48x8xf32>,
    %c2 = arith.constant 2 : index
    %c0_98 = arith.constant 0 : index
    %81 = vector.load %arg8[%c2, %c0_98] : memref<136x8xf32, #tpu.memory_space<vmem>>, vector<48x8xf32>
    %c0_99 = arith.constant 0 : index
    %c16_100 = arith.constant 16 : index
    %82 = vector.load %arg11[%c0_99, %c16_100] : memref<64x72xf32, #tpu.memory_space<vmem>>, vector<48x8xf32>
    tpu.vector_store %arg11[%c0_99, %c16_100], %81 {strides = array<i32>} : memref<64x72xf32, #tpu.memory_space<vmem>>, vector<48x8xf32>,
    %c8_101 = arith.constant 8 : index
    %c0_102 = arith.constant 0 : index
    %83 = vector.load %arg8[%c8_101, %c0_102] : memref<136x8xf32, #tpu.memory_space<vmem>>, vector<48x8xf32>
    %c0_103 = arith.constant 0 : index
    %c24_104 = arith.constant 24 : index
    %84 = vector.load %arg11[%c0_103, %c24_104] : memref<64x72xf32, #tpu.memory_space<vmem>>, vector<48x8xf32>
    tpu.vector_store %arg11[%c0_103, %c24_104], %83 {strides = array<i32>} : memref<64x72xf32, #tpu.memory_space<vmem>>, vector<48x8xf32>,
    %c9_105 = arith.constant 9 : index
    %c0_106 = arith.constant 0 : index
    %85 = vector.load %arg8[%c9_105, %c0_106] : memref<136x8xf32, #tpu.memory_space<vmem>>, vector<48x8xf32>
    %c0_107 = arith.constant 0 : index
    %c32_108 = arith.constant 32 : index
    %86 = vector.load %arg11[%c0_107, %c32_108] : memref<64x72xf32, #tpu.memory_space<vmem>>, vector<48x8xf32>
    tpu.vector_store %arg11[%c0_107, %c32_108], %85 {strides = array<i32>} : memref<64x72xf32, #tpu.memory_space<vmem>>, vector<48x8xf32>,
    %c10 = arith.constant 10 : index
    %c0_109 = arith.constant 0 : index
    %87 = vector.load %arg8[%c10, %c0_109] : memref<136x8xf32, #tpu.memory_space<vmem>>, vector<48x8xf32>
    %c0_110 = arith.constant 0 : index
    %c40_111 = arith.constant 40 : index
    %88 = vector.load %arg11[%c0_110, %c40_111] : memref<64x72xf32, #tpu.memory_space<vmem>>, vector<48x8xf32>
    tpu.vector_store %arg11[%c0_110, %c40_111], %87 {strides = array<i32>} : memref<64x72xf32, #tpu.memory_space<vmem>>, vector<48x8xf32>,
    %c16_112 = arith.constant 16 : index
    %c0_113 = arith.constant 0 : index
    %89 = vector.load %arg8[%c16_112, %c0_113] : memref<136x8xf32, #tpu.memory_space<vmem>>, vector<48x8xf32>
    %c0_114 = arith.constant 0 : index
    %c48_115 = arith.constant 48 : index
    %90 = vector.load %arg11[%c0_114, %c48_115] : memref<64x72xf32, #tpu.memory_space<vmem>>, vector<48x8xf32>
    tpu.vector_store %arg11[%c0_114, %c48_115], %89 {strides = array<i32>} : memref<64x72xf32, #tpu.memory_space<vmem>>, vector<48x8xf32>,
    %c17 = arith.constant 17 : index
    %c0_116 = arith.constant 0 : index
    %91 = vector.load %arg8[%c17, %c0_116] : memref<136x8xf32, #tpu.memory_space<vmem>>, vector<48x8xf32>
    %c0_117 = arith.constant 0 : index
    %c56_118 = arith.constant 56 : index
    %92 = vector.load %arg11[%c0_117, %c56_118] : memref<64x72xf32, #tpu.memory_space<vmem>>, vector<48x8xf32>
    tpu.vector_store %arg11[%c0_117, %c56_118], %91 {strides = array<i32>} : memref<64x72xf32, #tpu.memory_space<vmem>>, vector<48x8xf32>,
    %c18 = arith.constant 18 : index
    %c0_119 = arith.constant 0 : index
    %93 = vector.load %arg8[%c18, %c0_119] : memref<136x8xf32, #tpu.memory_space<vmem>>, vector<48x8xf32>
    %c0_120 = arith.constant 0 : index
    %c64_121 = arith.constant 64 : index
    %94 = vector.load %arg11[%c0_120, %c64_121] : memref<64x72xf32, #tpu.memory_space<vmem>>, vector<48x8xf32>
    tpu.vector_store %arg11[%c0_120, %c64_121], %93 {strides = array<i32>} : memref<64x72xf32, #tpu.memory_space<vmem>>, vector<48x8xf32>,
    %c0_122 = arith.constant 0 : index
    %c0_123 = arith.constant 0 : index
    %95 = vector.load %arg11[%c0_122, %c0_123] : memref<64x72xf32, #tpu.memory_space<vmem>>, vector<48x72xf32>
    %cst_124 = arith.constant dense<0.000000e+00> : vector<48x8xf32>
    %96 = tpu.matmul %95, %3, %cst_124 {dimension_numbers = #tpu.dot_dimension_numbers<[1], [0], [0], [1], [0, 0, 1, 1], [], []>} : vector<48x72xf32>, vector<72x8xf32>, vector<48x8xf32> -> vector<48x8xf32>
    %97 = vector.broadcast %9 : vector<1x8xf32> to vector<48x8xf32>
    %98 = arith.addf %96, %97 : vector<48x8xf32>
    %cst_125 = arith.constant 0.000000e+00 : f32
    %99 = vector.broadcast %cst_125 : f32 to vector<48x8xf32>
    %100 = arith.maximumf %98, %99 : vector<48x8xf32>
    %c0_126 = arith.constant 0 : index
    %c0_127 = arith.constant 0 : index
    %101 = vector.load %arg9[%c0_126, %c0_127] : memref<104x8xf32, #tpu.memory_space<vmem>>, vector<48x8xf32>
    tpu.vector_store %arg9[%c0_126, %c0_127], %100 {strides = array<i32>} : memref<104x8xf32, #tpu.memory_space<vmem>>, vector<48x8xf32>,
    %c64_128 = arith.constant 64 : index
    %c0_129 = arith.constant 0 : index
    %102 = vector.load %arg8[%c64_128, %c0_129] : memref<136x8xf32, #tpu.memory_space<vmem>>, vector<48x8xf32>
    %c0_130 = arith.constant 0 : index
    %c0_131 = arith.constant 0 : index
    %103 = vector.load %arg11[%c0_130, %c0_131] : memref<64x72xf32, #tpu.memory_space<vmem>>, vector<48x8xf32>
    tpu.vector_store %arg11[%c0_130, %c0_131], %102 {strides = array<i32>} : memref<64x72xf32, #tpu.memory_space<vmem>>, vector<48x8xf32>,
    %c65 = arith.constant 65 : index
    %c0_132 = arith.constant 0 : index
    %104 = vector.load %arg8[%c65, %c0_132] : memref<136x8xf32, #tpu.memory_space<vmem>>, vector<48x8xf32>
    %c0_133 = arith.constant 0 : index
    %c8_134 = arith.constant 8 : index
    %105 = vector.load %arg11[%c0_133, %c8_134] : memref<64x72xf32, #tpu.memory_space<vmem>>, vector<48x8xf32>
    tpu.vector_store %arg11[%c0_133, %c8_134], %104 {strides = array<i32>} : memref<64x72xf32, #tpu.memory_space<vmem>>, vector<48x8xf32>,
    %c66 = arith.constant 66 : index
    %c0_135 = arith.constant 0 : index
    %106 = vector.load %arg8[%c66, %c0_135] : memref<136x8xf32, #tpu.memory_space<vmem>>, vector<48x8xf32>
    %c0_136 = arith.constant 0 : index
    %c16_137 = arith.constant 16 : index
    %107 = vector.load %arg11[%c0_136, %c16_137] : memref<64x72xf32, #tpu.memory_space<vmem>>, vector<48x8xf32>
    tpu.vector_store %arg11[%c0_136, %c16_137], %106 {strides = array<i32>} : memref<64x72xf32, #tpu.memory_space<vmem>>, vector<48x8xf32>,
    %c72_138 = arith.constant 72 : index
    %c0_139 = arith.constant 0 : index
    %108 = vector.load %arg8[%c72_138, %c0_139] : memref<136x8xf32, #tpu.memory_space<vmem>>, vector<48x8xf32>
    %c0_140 = arith.constant 0 : index
    %c24_141 = arith.constant 24 : index
    %109 = vector.load %arg11[%c0_140, %c24_141] : memref<64x72xf32, #tpu.memory_space<vmem>>, vector<48x8xf32>
    tpu.vector_store %arg11[%c0_140, %c24_141], %108 {strides = array<i32>} : memref<64x72xf32, #tpu.memory_space<vmem>>, vector<48x8xf32>,
    %c73 = arith.constant 73 : index
    %c0_142 = arith.constant 0 : index
    %110 = vector.load %arg8[%c73, %c0_142] : memref<136x8xf32, #tpu.memory_space<vmem>>, vector<48x8xf32>
    %c0_143 = arith.constant 0 : index
    %c32_144 = arith.constant 32 : index
    %111 = vector.load %arg11[%c0_143, %c32_144] : memref<64x72xf32, #tpu.memory_space<vmem>>, vector<48x8xf32>
    tpu.vector_store %arg11[%c0_143, %c32_144], %110 {strides = array<i32>} : memref<64x72xf32, #tpu.memory_space<vmem>>, vector<48x8xf32>,
    %c74 = arith.constant 74 : index
    %c0_145 = arith.constant 0 : index
    %112 = vector.load %arg8[%c74, %c0_145] : memref<136x8xf32, #tpu.memory_space<vmem>>, vector<48x8xf32>
    %c0_146 = arith.constant 0 : index
    %c40_147 = arith.constant 40 : index
    %113 = vector.load %arg11[%c0_146, %c40_147] : memref<64x72xf32, #tpu.memory_space<vmem>>, vector<48x8xf32>
    tpu.vector_store %arg11[%c0_146, %c40_147], %112 {strides = array<i32>} : memref<64x72xf32, #tpu.memory_space<vmem>>, vector<48x8xf32>,
    %c80_148 = arith.constant 80 : index
    %c0_149 = arith.constant 0 : index
    %114 = vector.load %arg8[%c80_148, %c0_149] : memref<136x8xf32, #tpu.memory_space<vmem>>, vector<48x8xf32>
    %c0_150 = arith.constant 0 : index
    %c48_151 = arith.constant 48 : index
    %115 = vector.load %arg11[%c0_150, %c48_151] : memref<64x72xf32, #tpu.memory_space<vmem>>, vector<48x8xf32>
    tpu.vector_store %arg11[%c0_150, %c48_151], %114 {strides = array<i32>} : memref<64x72xf32, #tpu.memory_space<vmem>>, vector<48x8xf32>,
    %c81 = arith.constant 81 : index
    %c0_152 = arith.constant 0 : index
    %116 = vector.load %arg8[%c81, %c0_152] : memref<136x8xf32, #tpu.memory_space<vmem>>, vector<48x8xf32>
    %c0_153 = arith.constant 0 : index
    %c56_154 = arith.constant 56 : index
    %117 = vector.load %arg11[%c0_153, %c56_154] : memref<64x72xf32, #tpu.memory_space<vmem>>, vector<48x8xf32>
    tpu.vector_store %arg11[%c0_153, %c56_154], %116 {strides = array<i32>} : memref<64x72xf32, #tpu.memory_space<vmem>>, vector<48x8xf32>,
    %c82 = arith.constant 82 : index
    %c0_155 = arith.constant 0 : index
    %118 = vector.load %arg8[%c82, %c0_155] : memref<136x8xf32, #tpu.memory_space<vmem>>, vector<48x8xf32>
    %c0_156 = arith.constant 0 : index
    %c64_157 = arith.constant 64 : index
    %119 = vector.load %arg11[%c0_156, %c64_157] : memref<64x72xf32, #tpu.memory_space<vmem>>, vector<48x8xf32>
    tpu.vector_store %arg11[%c0_156, %c64_157], %118 {strides = array<i32>} : memref<64x72xf32, #tpu.memory_space<vmem>>, vector<48x8xf32>,
    %c0_158 = arith.constant 0 : index
    %c0_159 = arith.constant 0 : index
    %120 = vector.load %arg11[%c0_158, %c0_159] : memref<64x72xf32, #tpu.memory_space<vmem>>, vector<48x72xf32>
    %cst_160 = arith.constant dense<0.000000e+00> : vector<48x8xf32>
    %121 = tpu.matmul %120, %3, %cst_160 {dimension_numbers = #tpu.dot_dimension_numbers<[1], [0], [0], [1], [0, 0, 1, 1], [], []>} : vector<48x72xf32>, vector<72x8xf32>, vector<48x8xf32> -> vector<48x8xf32>
    %122 = vector.broadcast %9 : vector<1x8xf32> to vector<48x8xf32>
    %123 = arith.addf %121, %122 : vector<48x8xf32>
    %cst_161 = arith.constant 0.000000e+00 : f32
    %124 = vector.broadcast %cst_161 : f32 to vector<48x8xf32>
    %125 = arith.maximumf %123, %124 : vector<48x8xf32>
    %c48_162 = arith.constant 48 : index
    %c0_163 = arith.constant 0 : index
    %126 = vector.load %arg9[%c48_162, %c0_163] : memref<104x8xf32, #tpu.memory_space<vmem>>, vector<48x8xf32>
    tpu.vector_store %arg9[%c48_162, %c0_163], %125 {strides = array<i32>} : memref<104x8xf32, #tpu.memory_space<vmem>>, vector<48x8xf32>,
    %c0_164 = arith.constant 0 : index
    %c0_165 = arith.constant 0 : index
    %127 = vector.load %arg9[%c0_164, %c0_165] : memref<104x8xf32, #tpu.memory_space<vmem>>, vector<32x8xf32>
    %c0_166 = arith.constant 0 : index
    %c0_167 = arith.constant 0 : index
    %128 = vector.load %arg11[%c0_166, %c0_167] : memref<64x72xf32, #tpu.memory_space<vmem>>, vector<32x8xf32>
    tpu.vector_store %arg11[%c0_166, %c0_167], %127 {strides = array<i32>} : memref<64x72xf32, #tpu.memory_space<vmem>>, vector<32x8xf32>,
    %c1_168 = arith.constant 1 : index
    %c0_169 = arith.constant 0 : index
    %129 = vector.load %arg9[%c1_168, %c0_169] : memref<104x8xf32, #tpu.memory_space<vmem>>, vector<32x8xf32>
    %c0_170 = arith.constant 0 : index
    %c8_171 = arith.constant 8 : index
    %130 = vector.load %arg11[%c0_170, %c8_171] : memref<64x72xf32, #tpu.memory_space<vmem>>, vector<32x8xf32>
    tpu.vector_store %arg11[%c0_170, %c8_171], %129 {strides = array<i32>} : memref<64x72xf32, #tpu.memory_space<vmem>>, vector<32x8xf32>,
    %c2_172 = arith.constant 2 : index
    %c0_173 = arith.constant 0 : index
    %131 = vector.load %arg9[%c2_172, %c0_173] : memref<104x8xf32, #tpu.memory_space<vmem>>, vector<32x8xf32>
    %c0_174 = arith.constant 0 : index
    %c16_175 = arith.constant 16 : index
    %132 = vector.load %arg11[%c0_174, %c16_175] : memref<64x72xf32, #tpu.memory_space<vmem>>, vector<32x8xf32>
    tpu.vector_store %arg11[%c0_174, %c16_175], %131 {strides = array<i32>} : memref<64x72xf32, #tpu.memory_space<vmem>>, vector<32x8xf32>,
    %c8_176 = arith.constant 8 : index
    %c0_177 = arith.constant 0 : index
    %133 = vector.load %arg9[%c8_176, %c0_177] : memref<104x8xf32, #tpu.memory_space<vmem>>, vector<32x8xf32>
    %c0_178 = arith.constant 0 : index
    %c24_179 = arith.constant 24 : index
    %134 = vector.load %arg11[%c0_178, %c24_179] : memref<64x72xf32, #tpu.memory_space<vmem>>, vector<32x8xf32>
    tpu.vector_store %arg11[%c0_178, %c24_179], %133 {strides = array<i32>} : memref<64x72xf32, #tpu.memory_space<vmem>>, vector<32x8xf32>,
    %c9_180 = arith.constant 9 : index
    %c0_181 = arith.constant 0 : index
    %135 = vector.load %arg9[%c9_180, %c0_181] : memref<104x8xf32, #tpu.memory_space<vmem>>, vector<32x8xf32>
    %c0_182 = arith.constant 0 : index
    %c32_183 = arith.constant 32 : index
    %136 = vector.load %arg11[%c0_182, %c32_183] : memref<64x72xf32, #tpu.memory_space<vmem>>, vector<32x8xf32>
    tpu.vector_store %arg11[%c0_182, %c32_183], %135 {strides = array<i32>} : memref<64x72xf32, #tpu.memory_space<vmem>>, vector<32x8xf32>,
    %c10_184 = arith.constant 10 : index
    %c0_185 = arith.constant 0 : index
    %137 = vector.load %arg9[%c10_184, %c0_185] : memref<104x8xf32, #tpu.memory_space<vmem>>, vector<32x8xf32>
    %c0_186 = arith.constant 0 : index
    %c40_187 = arith.constant 40 : index
    %138 = vector.load %arg11[%c0_186, %c40_187] : memref<64x72xf32, #tpu.memory_space<vmem>>, vector<32x8xf32>
    tpu.vector_store %arg11[%c0_186, %c40_187], %137 {strides = array<i32>} : memref<64x72xf32, #tpu.memory_space<vmem>>, vector<32x8xf32>,
    %c16_188 = arith.constant 16 : index
    %c0_189 = arith.constant 0 : index
    %139 = vector.load %arg9[%c16_188, %c0_189] : memref<104x8xf32, #tpu.memory_space<vmem>>, vector<32x8xf32>
    %c0_190 = arith.constant 0 : index
    %c48_191 = arith.constant 48 : index
    %140 = vector.load %arg11[%c0_190, %c48_191] : memref<64x72xf32, #tpu.memory_space<vmem>>, vector<32x8xf32>
    tpu.vector_store %arg11[%c0_190, %c48_191], %139 {strides = array<i32>} : memref<64x72xf32, #tpu.memory_space<vmem>>, vector<32x8xf32>,
    %c17_192 = arith.constant 17 : index
    %c0_193 = arith.constant 0 : index
    %141 = vector.load %arg9[%c17_192, %c0_193] : memref<104x8xf32, #tpu.memory_space<vmem>>, vector<32x8xf32>
    %c0_194 = arith.constant 0 : index
    %c56_195 = arith.constant 56 : index
    %142 = vector.load %arg11[%c0_194, %c56_195] : memref<64x72xf32, #tpu.memory_space<vmem>>, vector<32x8xf32>
    tpu.vector_store %arg11[%c0_194, %c56_195], %141 {strides = array<i32>} : memref<64x72xf32, #tpu.memory_space<vmem>>, vector<32x8xf32>,
    %c18_196 = arith.constant 18 : index
    %c0_197 = arith.constant 0 : index
    %143 = vector.load %arg9[%c18_196, %c0_197] : memref<104x8xf32, #tpu.memory_space<vmem>>, vector<32x8xf32>
    %c0_198 = arith.constant 0 : index
    %c64_199 = arith.constant 64 : index
    %144 = vector.load %arg11[%c0_198, %c64_199] : memref<64x72xf32, #tpu.memory_space<vmem>>, vector<32x8xf32>
    tpu.vector_store %arg11[%c0_198, %c64_199], %143 {strides = array<i32>} : memref<64x72xf32, #tpu.memory_space<vmem>>, vector<32x8xf32>,
    %c0_200 = arith.constant 0 : index
    %c0_201 = arith.constant 0 : index
    %145 = vector.load %arg11[%c0_200, %c0_201] : memref<64x72xf32, #tpu.memory_space<vmem>>, vector<32x72xf32>
    %cst_202 = arith.constant dense<0.000000e+00> : vector<32x16xf32>
    %146 = tpu.matmul %145, %5, %cst_202 {dimension_numbers = #tpu.dot_dimension_numbers<[1], [0], [0], [1], [0, 0, 1, 1], [], []>} : vector<32x72xf32>, vector<72x16xf32>, vector<32x16xf32> -> vector<32x16xf32>
    %147 = vector.broadcast %10 : vector<1x16xf32> to vector<32x16xf32>
    %148 = arith.addf %146, %147 : vector<32x16xf32>
    %cst_203 = arith.constant 0.000000e+00 : f32
    %149 = vector.broadcast %cst_203 : f32 to vector<32x16xf32>
    %150 = arith.maximumf %148, %149 : vector<32x16xf32>
    %c0_204 = arith.constant 0 : index
    %c0_205 = arith.constant 0 : index
    %151 = vector.load %arg10[%c0_204, %c0_205] : memref<64x16xf32, #tpu.memory_space<vmem>>, vector<32x16xf32>
    tpu.vector_store %arg10[%c0_204, %c0_205], %150 {strides = array<i32>} : memref<64x16xf32, #tpu.memory_space<vmem>>, vector<32x16xf32>,
    %c48_206 = arith.constant 48 : index
    %c0_207 = arith.constant 0 : index
    %152 = vector.load %arg9[%c48_206, %c0_207] : memref<104x8xf32, #tpu.memory_space<vmem>>, vector<32x8xf32>
    %c0_208 = arith.constant 0 : index
    %c0_209 = arith.constant 0 : index
    %153 = vector.load %arg11[%c0_208, %c0_209] : memref<64x72xf32, #tpu.memory_space<vmem>>, vector<32x8xf32>
    tpu.vector_store %arg11[%c0_208, %c0_209], %152 {strides = array<i32>} : memref<64x72xf32, #tpu.memory_space<vmem>>, vector<32x8xf32>,
    %c49 = arith.constant 49 : index
    %c0_210 = arith.constant 0 : index
    %154 = vector.load %arg9[%c49, %c0_210] : memref<104x8xf32, #tpu.memory_space<vmem>>, vector<32x8xf32>
    %c0_211 = arith.constant 0 : index
    %c8_212 = arith.constant 8 : index
    %155 = vector.load %arg11[%c0_211, %c8_212] : memref<64x72xf32, #tpu.memory_space<vmem>>, vector<32x8xf32>
    tpu.vector_store %arg11[%c0_211, %c8_212], %154 {strides = array<i32>} : memref<64x72xf32, #tpu.memory_space<vmem>>, vector<32x8xf32>,
    %c50 = arith.constant 50 : index
    %c0_213 = arith.constant 0 : index
    %156 = vector.load %arg9[%c50, %c0_213] : memref<104x8xf32, #tpu.memory_space<vmem>>, vector<32x8xf32>
    %c0_214 = arith.constant 0 : index
    %c16_215 = arith.constant 16 : index
    %157 = vector.load %arg11[%c0_214, %c16_215] : memref<64x72xf32, #tpu.memory_space<vmem>>, vector<32x8xf32>
    tpu.vector_store %arg11[%c0_214, %c16_215], %156 {strides = array<i32>} : memref<64x72xf32, #tpu.memory_space<vmem>>, vector<32x8xf32>,
    %c56_216 = arith.constant 56 : index
    %c0_217 = arith.constant 0 : index
    %158 = vector.load %arg9[%c56_216, %c0_217] : memref<104x8xf32, #tpu.memory_space<vmem>>, vector<32x8xf32>
    %c0_218 = arith.constant 0 : index
    %c24_219 = arith.constant 24 : index
    %159 = vector.load %arg11[%c0_218, %c24_219] : memref<64x72xf32, #tpu.memory_space<vmem>>, vector<32x8xf32>
    tpu.vector_store %arg11[%c0_218, %c24_219], %158 {strides = array<i32>} : memref<64x72xf32, #tpu.memory_space<vmem>>, vector<32x8xf32>,
    %c57 = arith.constant 57 : index
    %c0_220 = arith.constant 0 : index
    %160 = vector.load %arg9[%c57, %c0_220] : memref<104x8xf32, #tpu.memory_space<vmem>>, vector<32x8xf32>
    %c0_221 = arith.constant 0 : index
    %c32_222 = arith.constant 32 : index
    %161 = vector.load %arg11[%c0_221, %c32_222] : memref<64x72xf32, #tpu.memory_space<vmem>>, vector<32x8xf32>
    tpu.vector_store %arg11[%c0_221, %c32_222], %160 {strides = array<i32>} : memref<64x72xf32, #tpu.memory_space<vmem>>, vector<32x8xf32>,
    %c58 = arith.constant 58 : index
    %c0_223 = arith.constant 0 : index
    %162 = vector.load %arg9[%c58, %c0_223] : memref<104x8xf32, #tpu.memory_space<vmem>>, vector<32x8xf32>
    %c0_224 = arith.constant 0 : index
    %c40_225 = arith.constant 40 : index
    %163 = vector.load %arg11[%c0_224, %c40_225] : memref<64x72xf32, #tpu.memory_space<vmem>>, vector<32x8xf32>
    tpu.vector_store %arg11[%c0_224, %c40_225], %162 {strides = array<i32>} : memref<64x72xf32, #tpu.memory_space<vmem>>, vector<32x8xf32>,
    %c64_226 = arith.constant 64 : index
    %c0_227 = arith.constant 0 : index
    %164 = vector.load %arg9[%c64_226, %c0_227] : memref<104x8xf32, #tpu.memory_space<vmem>>, vector<32x8xf32>
    %c0_228 = arith.constant 0 : index
    %c48_229 = arith.constant 48 : index
    %165 = vector.load %arg11[%c0_228, %c48_229] : memref<64x72xf32, #tpu.memory_space<vmem>>, vector<32x8xf32>
    tpu.vector_store %arg11[%c0_228, %c48_229], %164 {strides = array<i32>} : memref<64x72xf32, #tpu.memory_space<vmem>>, vector<32x8xf32>,
    %c65_230 = arith.constant 65 : index
    %c0_231 = arith.constant 0 : index
    %166 = vector.load %arg9[%c65_230, %c0_231] : memref<104x8xf32, #tpu.memory_space<vmem>>, vector<32x8xf32>
    %c0_232 = arith.constant 0 : index
    %c56_233 = arith.constant 56 : index
    %167 = vector.load %arg11[%c0_232, %c56_233] : memref<64x72xf32, #tpu.memory_space<vmem>>, vector<32x8xf32>
    tpu.vector_store %arg11[%c0_232, %c56_233], %166 {strides = array<i32>} : memref<64x72xf32, #tpu.memory_space<vmem>>, vector<32x8xf32>,
    %c66_234 = arith.constant 66 : index
    %c0_235 = arith.constant 0 : index
    %168 = vector.load %arg9[%c66_234, %c0_235] : memref<104x8xf32, #tpu.memory_space<vmem>>, vector<32x8xf32>
    %c0_236 = arith.constant 0 : index
    %c64_237 = arith.constant 64 : index
    %169 = vector.load %arg11[%c0_236, %c64_237] : memref<64x72xf32, #tpu.memory_space<vmem>>, vector<32x8xf32>
    tpu.vector_store %arg11[%c0_236, %c64_237], %168 {strides = array<i32>} : memref<64x72xf32, #tpu.memory_space<vmem>>, vector<32x8xf32>,
    %c0_238 = arith.constant 0 : index
    %c0_239 = arith.constant 0 : index
    %170 = vector.load %arg11[%c0_238, %c0_239] : memref<64x72xf32, #tpu.memory_space<vmem>>, vector<32x72xf32>
    %cst_240 = arith.constant dense<0.000000e+00> : vector<32x16xf32>
    %171 = tpu.matmul %170, %5, %cst_240 {dimension_numbers = #tpu.dot_dimension_numbers<[1], [0], [0], [1], [0, 0, 1, 1], [], []>} : vector<32x72xf32>, vector<72x16xf32>, vector<32x16xf32> -> vector<32x16xf32>
    %172 = vector.broadcast %10 : vector<1x16xf32> to vector<32x16xf32>
    %173 = arith.addf %171, %172 : vector<32x16xf32>
    %cst_241 = arith.constant 0.000000e+00 : f32
    %174 = vector.broadcast %cst_241 : f32 to vector<32x16xf32>
    %175 = arith.maximumf %173, %174 : vector<32x16xf32>
    %c32_242 = arith.constant 32 : index
    %c0_243 = arith.constant 0 : index
    %176 = vector.load %arg10[%c32_242, %c0_243] : memref<64x16xf32, #tpu.memory_space<vmem>>, vector<32x16xf32>
    tpu.vector_store %arg10[%c32_242, %c0_243], %175 {strides = array<i32>} : memref<64x16xf32, #tpu.memory_space<vmem>>, vector<32x16xf32>,
    %cst_244 = arith.constant 0.000000e+00 : f32
    %177 = vector.broadcast %cst_244 : f32 to vector<2x64xf32>
    %c0_245 = arith.constant 0 : index
    %c0_246 = arith.constant 0 : index
    %178 = vector.load %arg10[%c0_245, %c0_246] : memref<64x16xf32, #tpu.memory_space<vmem>>, vector<1x16xf32>
    %c32_247 = arith.constant 32 : index
    %c0_248 = arith.constant 0 : index
    %179 = vector.load %arg10[%c32_247, %c0_248] : memref<64x16xf32, #tpu.memory_space<vmem>>, vector<1x16xf32>
    %180 = tpu.concatenate %178, %179 in 0 : vector<1x16xf32>, vector<1x16xf32> -> vector<2x16xf32>
    %c0_249 = arith.constant 0 : index
    %c0_250 = arith.constant 0 : index
    %c0_251 = arith.constant 0 : index
    %181 = vector.load %arg4[%c0_249, %c0_250, %c0_251] : memref<12x16x64xf32, #tpu.memory_space<vmem>>, vector<1x16x64xf32>
    %182 = vector.shape_cast %181 : vector<1x16x64xf32> to vector<16x64xf32>
    %cst_252 = arith.constant dense<0.000000e+00> : vector<2x64xf32>
    %183 = tpu.matmul %180, %182, %cst_252 {dimension_numbers = #tpu.dot_dimension_numbers<[1], [0], [0], [1], [0, 0, 1, 1], [], []>} : vector<2x16xf32>, vector<16x64xf32>, vector<2x64xf32> -> vector<2x64xf32>
    %184 = arith.addf %177, %183 : vector<2x64xf32>
    %c1_253 = arith.constant 1 : index
    %c0_254 = arith.constant 0 : index
    %185 = vector.load %arg10[%c1_253, %c0_254] : memref<64x16xf32, #tpu.memory_space<vmem>>, vector<1x16xf32>
    %c33 = arith.constant 33 : index
    %c0_255 = arith.constant 0 : index
    %186 = vector.load %arg10[%c33, %c0_255] : memref<64x16xf32, #tpu.memory_space<vmem>>, vector<1x16xf32>
    %187 = tpu.concatenate %185, %186 in 0 : vector<1x16xf32>, vector<1x16xf32> -> vector<2x16xf32>
    %c1_256 = arith.constant 1 : index
    %c0_257 = arith.constant 0 : index
    %c0_258 = arith.constant 0 : index
    %188 = vector.load %arg4[%c1_256, %c0_257, %c0_258] : memref<12x16x64xf32, #tpu.memory_space<vmem>>, vector<1x16x64xf32>
    %189 = vector.shape_cast %188 : vector<1x16x64xf32> to vector<16x64xf32>
    %cst_259 = arith.constant dense<0.000000e+00> : vector<2x64xf32>
    %190 = tpu.matmul %187, %189, %cst_259 {dimension_numbers = #tpu.dot_dimension_numbers<[1], [0], [0], [1], [0, 0, 1, 1], [], []>} : vector<2x16xf32>, vector<16x64xf32>, vector<2x64xf32> -> vector<2x64xf32>
    %191 = arith.addf %184, %190 : vector<2x64xf32>
    %c2_260 = arith.constant 2 : index
    %c0_261 = arith.constant 0 : index
    %192 = vector.load %arg10[%c2_260, %c0_261] : memref<64x16xf32, #tpu.memory_space<vmem>>, vector<1x16xf32>
    %c34 = arith.constant 34 : index
    %c0_262 = arith.constant 0 : index
    %193 = vector.load %arg10[%c34, %c0_262] : memref<64x16xf32, #tpu.memory_space<vmem>>, vector<1x16xf32>
    %194 = tpu.concatenate %192, %193 in 0 : vector<1x16xf32>, vector<1x16xf32> -> vector<2x16xf32>
    %c2_263 = arith.constant 2 : index
    %c0_264 = arith.constant 0 : index
    %c0_265 = arith.constant 0 : index
    %195 = vector.load %arg4[%c2_263, %c0_264, %c0_265] : memref<12x16x64xf32, #tpu.memory_space<vmem>>, vector<1x16x64xf32>
    %196 = vector.shape_cast %195 : vector<1x16x64xf32> to vector<16x64xf32>
    %cst_266 = arith.constant dense<0.000000e+00> : vector<2x64xf32>
    %197 = tpu.matmul %194, %196, %cst_266 {dimension_numbers = #tpu.dot_dimension_numbers<[1], [0], [0], [1], [0, 0, 1, 1], [], []>} : vector<2x16xf32>, vector<16x64xf32>, vector<2x64xf32> -> vector<2x64xf32>
    %198 = arith.addf %191, %197 : vector<2x64xf32>
    %c8_267 = arith.constant 8 : index
    %c0_268 = arith.constant 0 : index
    %199 = vector.load %arg10[%c8_267, %c0_268] : memref<64x16xf32, #tpu.memory_space<vmem>>, vector<1x16xf32>
    %c40_269 = arith.constant 40 : index
    %c0_270 = arith.constant 0 : index
    %200 = vector.load %arg10[%c40_269, %c0_270] : memref<64x16xf32, #tpu.memory_space<vmem>>, vector<1x16xf32>
    %201 = tpu.concatenate %199, %200 in 0 : vector<1x16xf32>, vector<1x16xf32> -> vector<2x16xf32>
    %c3 = arith.constant 3 : index
    %c0_271 = arith.constant 0 : index
    %c0_272 = arith.constant 0 : index
    %202 = vector.load %arg4[%c3, %c0_271, %c0_272] : memref<12x16x64xf32, #tpu.memory_space<vmem>>, vector<1x16x64xf32>
    %203 = vector.shape_cast %202 : vector<1x16x64xf32> to vector<16x64xf32>
    %cst_273 = arith.constant dense<0.000000e+00> : vector<2x64xf32>
    %204 = tpu.matmul %201, %203, %cst_273 {dimension_numbers = #tpu.dot_dimension_numbers<[1], [0], [0], [1], [0, 0, 1, 1], [], []>} : vector<2x16xf32>, vector<16x64xf32>, vector<2x64xf32> -> vector<2x64xf32>
    %205 = arith.addf %198, %204 : vector<2x64xf32>
    %c9_274 = arith.constant 9 : index
    %c0_275 = arith.constant 0 : index
    %206 = vector.load %arg10[%c9_274, %c0_275] : memref<64x16xf32, #tpu.memory_space<vmem>>, vector<1x16xf32>
    %c41 = arith.constant 41 : index
    %c0_276 = arith.constant 0 : index
    %207 = vector.load %arg10[%c41, %c0_276] : memref<64x16xf32, #tpu.memory_space<vmem>>, vector<1x16xf32>
    %208 = tpu.concatenate %206, %207 in 0 : vector<1x16xf32>, vector<1x16xf32> -> vector<2x16xf32>
    %c4 = arith.constant 4 : index
    %c0_277 = arith.constant 0 : index
    %c0_278 = arith.constant 0 : index
    %209 = vector.load %arg4[%c4, %c0_277, %c0_278] : memref<12x16x64xf32, #tpu.memory_space<vmem>>, vector<1x16x64xf32>
    %210 = vector.shape_cast %209 : vector<1x16x64xf32> to vector<16x64xf32>
    %cst_279 = arith.constant dense<0.000000e+00> : vector<2x64xf32>
    %211 = tpu.matmul %208, %210, %cst_279 {dimension_numbers = #tpu.dot_dimension_numbers<[1], [0], [0], [1], [0, 0, 1, 1], [], []>} : vector<2x16xf32>, vector<16x64xf32>, vector<2x64xf32> -> vector<2x64xf32>
    %212 = arith.addf %205, %211 : vector<2x64xf32>
    %c10_280 = arith.constant 10 : index
    %c0_281 = arith.constant 0 : index
    %213 = vector.load %arg10[%c10_280, %c0_281] : memref<64x16xf32, #tpu.memory_space<vmem>>, vector<1x16xf32>
    %c42 = arith.constant 42 : index
    %c0_282 = arith.constant 0 : index
    %214 = vector.load %arg10[%c42, %c0_282] : memref<64x16xf32, #tpu.memory_space<vmem>>, vector<1x16xf32>
    %215 = tpu.concatenate %213, %214 in 0 : vector<1x16xf32>, vector<1x16xf32> -> vector<2x16xf32>
    %c5 = arith.constant 5 : index
    %c0_283 = arith.constant 0 : index
    %c0_284 = arith.constant 0 : index
    %216 = vector.load %arg4[%c5, %c0_283, %c0_284] : memref<12x16x64xf32, #tpu.memory_space<vmem>>, vector<1x16x64xf32>
    %217 = vector.shape_cast %216 : vector<1x16x64xf32> to vector<16x64xf32>
    %cst_285 = arith.constant dense<0.000000e+00> : vector<2x64xf32>
    %218 = tpu.matmul %215, %217, %cst_285 {dimension_numbers = #tpu.dot_dimension_numbers<[1], [0], [0], [1], [0, 0, 1, 1], [], []>} : vector<2x16xf32>, vector<16x64xf32>, vector<2x64xf32> -> vector<2x64xf32>
    %219 = arith.addf %212, %218 : vector<2x64xf32>
    %c16_286 = arith.constant 16 : index
    %c0_287 = arith.constant 0 : index
    %220 = vector.load %arg10[%c16_286, %c0_287] : memref<64x16xf32, #tpu.memory_space<vmem>>, vector<1x16xf32>
    %c48_288 = arith.constant 48 : index
    %c0_289 = arith.constant 0 : index
    %221 = vector.load %arg10[%c48_288, %c0_289] : memref<64x16xf32, #tpu.memory_space<vmem>>, vector<1x16xf32>
    %222 = tpu.concatenate %220, %221 in 0 : vector<1x16xf32>, vector<1x16xf32> -> vector<2x16xf32>
    %c6 = arith.constant 6 : index
    %c0_290 = arith.constant 0 : index
    %c0_291 = arith.constant 0 : index
    %223 = vector.load %arg4[%c6, %c0_290, %c0_291] : memref<12x16x64xf32, #tpu.memory_space<vmem>>, vector<1x16x64xf32>
    %224 = vector.shape_cast %223 : vector<1x16x64xf32> to vector<16x64xf32>
    %cst_292 = arith.constant dense<0.000000e+00> : vector<2x64xf32>
    %225 = tpu.matmul %222, %224, %cst_292 {dimension_numbers = #tpu.dot_dimension_numbers<[1], [0], [0], [1], [0, 0, 1, 1], [], []>} : vector<2x16xf32>, vector<16x64xf32>, vector<2x64xf32> -> vector<2x64xf32>
    %226 = arith.addf %219, %225 : vector<2x64xf32>
    %c17_293 = arith.constant 17 : index
    %c0_294 = arith.constant 0 : index
    %227 = vector.load %arg10[%c17_293, %c0_294] : memref<64x16xf32, #tpu.memory_space<vmem>>, vector<1x16xf32>
    %c49_295 = arith.constant 49 : index
    %c0_296 = arith.constant 0 : index
    %228 = vector.load %arg10[%c49_295, %c0_296] : memref<64x16xf32, #tpu.memory_space<vmem>>, vector<1x16xf32>
    %229 = tpu.concatenate %227, %228 in 0 : vector<1x16xf32>, vector<1x16xf32> -> vector<2x16xf32>
    %c7 = arith.constant 7 : index
    %c0_297 = arith.constant 0 : index
    %c0_298 = arith.constant 0 : index
    %230 = vector.load %arg4[%c7, %c0_297, %c0_298] : memref<12x16x64xf32, #tpu.memory_space<vmem>>, vector<1x16x64xf32>
    %231 = vector.shape_cast %230 : vector<1x16x64xf32> to vector<16x64xf32>
    %cst_299 = arith.constant dense<0.000000e+00> : vector<2x64xf32>
    %232 = tpu.matmul %229, %231, %cst_299 {dimension_numbers = #tpu.dot_dimension_numbers<[1], [0], [0], [1], [0, 0, 1, 1], [], []>} : vector<2x16xf32>, vector<16x64xf32>, vector<2x64xf32> -> vector<2x64xf32>
    %233 = arith.addf %226, %232 : vector<2x64xf32>
    %c18_300 = arith.constant 18 : index
    %c0_301 = arith.constant 0 : index
    %234 = vector.load %arg10[%c18_300, %c0_301] : memref<64x16xf32, #tpu.memory_space<vmem>>, vector<1x16xf32>
    %c50_302 = arith.constant 50 : index
    %c0_303 = arith.constant 0 : index
    %235 = vector.load %arg10[%c50_302, %c0_303] : memref<64x16xf32, #tpu.memory_space<vmem>>, vector<1x16xf32>
    %236 = tpu.concatenate %234, %235 in 0 : vector<1x16xf32>, vector<1x16xf32> -> vector<2x16xf32>
    %c8_304 = arith.constant 8 : index
    %c0_305 = arith.constant 0 : index
    %c0_306 = arith.constant 0 : index
    %237 = vector.load %arg4[%c8_304, %c0_305, %c0_306] : memref<12x16x64xf32, #tpu.memory_space<vmem>>, vector<1x16x64xf32>
    %238 = vector.shape_cast %237 : vector<1x16x64xf32> to vector<16x64xf32>
    %cst_307 = arith.constant dense<0.000000e+00> : vector<2x64xf32>
    %239 = tpu.matmul %236, %238, %cst_307 {dimension_numbers = #tpu.dot_dimension_numbers<[1], [0], [0], [1], [0, 0, 1, 1], [], []>} : vector<2x16xf32>, vector<16x64xf32>, vector<2x64xf32> -> vector<2x64xf32>
    %240 = arith.addf %233, %239 : vector<2x64xf32>
    %c24_308 = arith.constant 24 : index
    %c0_309 = arith.constant 0 : index
    %241 = vector.load %arg10[%c24_308, %c0_309] : memref<64x16xf32, #tpu.memory_space<vmem>>, vector<1x16xf32>
    %c56_310 = arith.constant 56 : index
    %c0_311 = arith.constant 0 : index
    %242 = vector.load %arg10[%c56_310, %c0_311] : memref<64x16xf32, #tpu.memory_space<vmem>>, vector<1x16xf32>
    %243 = tpu.concatenate %241, %242 in 0 : vector<1x16xf32>, vector<1x16xf32> -> vector<2x16xf32>
    %c9_312 = arith.constant 9 : index
    %c0_313 = arith.constant 0 : index
    %c0_314 = arith.constant 0 : index
    %244 = vector.load %arg4[%c9_312, %c0_313, %c0_314] : memref<12x16x64xf32, #tpu.memory_space<vmem>>, vector<1x16x64xf32>
    %245 = vector.shape_cast %244 : vector<1x16x64xf32> to vector<16x64xf32>
    %cst_315 = arith.constant dense<0.000000e+00> : vector<2x64xf32>
    %246 = tpu.matmul %243, %245, %cst_315 {dimension_numbers = #tpu.dot_dimension_numbers<[1], [0], [0], [1], [0, 0, 1, 1], [], []>} : vector<2x16xf32>, vector<16x64xf32>, vector<2x64xf32> -> vector<2x64xf32>
    %247 = arith.addf %240, %246 : vector<2x64xf32>
    %c25 = arith.constant 25 : index
    %c0_316 = arith.constant 0 : index
    %248 = vector.load %arg10[%c25, %c0_316] : memref<64x16xf32, #tpu.memory_space<vmem>>, vector<1x16xf32>
    %c57_317 = arith.constant 57 : index
    %c0_318 = arith.constant 0 : index
    %249 = vector.load %arg10[%c57_317, %c0_318] : memref<64x16xf32, #tpu.memory_space<vmem>>, vector<1x16xf32>
    %250 = tpu.concatenate %248, %249 in 0 : vector<1x16xf32>, vector<1x16xf32> -> vector<2x16xf32>
    %c10_319 = arith.constant 10 : index
    %c0_320 = arith.constant 0 : index
    %c0_321 = arith.constant 0 : index
    %251 = vector.load %arg4[%c10_319, %c0_320, %c0_321] : memref<12x16x64xf32, #tpu.memory_space<vmem>>, vector<1x16x64xf32>
    %252 = vector.shape_cast %251 : vector<1x16x64xf32> to vector<16x64xf32>
    %cst_322 = arith.constant dense<0.000000e+00> : vector<2x64xf32>
    %253 = tpu.matmul %250, %252, %cst_322 {dimension_numbers = #tpu.dot_dimension_numbers<[1], [0], [0], [1], [0, 0, 1, 1], [], []>} : vector<2x16xf32>, vector<16x64xf32>, vector<2x64xf32> -> vector<2x64xf32>
    %254 = arith.addf %247, %253 : vector<2x64xf32>
    %c26 = arith.constant 26 : index
    %c0_323 = arith.constant 0 : index
    %255 = vector.load %arg10[%c26, %c0_323] : memref<64x16xf32, #tpu.memory_space<vmem>>, vector<1x16xf32>
    %c58_324 = arith.constant 58 : index
    %c0_325 = arith.constant 0 : index
    %256 = vector.load %arg10[%c58_324, %c0_325] : memref<64x16xf32, #tpu.memory_space<vmem>>, vector<1x16xf32>
    %257 = tpu.concatenate %255, %256 in 0 : vector<1x16xf32>, vector<1x16xf32> -> vector<2x16xf32>
    %c11 = arith.constant 11 : index
    %c0_326 = arith.constant 0 : index
    %c0_327 = arith.constant 0 : index
    %258 = vector.load %arg4[%c11, %c0_326, %c0_327] : memref<12x16x64xf32, #tpu.memory_space<vmem>>, vector<1x16x64xf32>
    %259 = vector.shape_cast %258 : vector<1x16x64xf32> to vector<16x64xf32>
    %cst_328 = arith.constant dense<0.000000e+00> : vector<2x64xf32>
    %260 = tpu.matmul %257, %259, %cst_328 {dimension_numbers = #tpu.dot_dimension_numbers<[1], [0], [0], [1], [0, 0, 1, 1], [], []>} : vector<2x16xf32>, vector<16x64xf32>, vector<2x64xf32> -> vector<2x64xf32>
    %261 = arith.addf %254, %260 : vector<2x64xf32>
    %262 = vector.broadcast %11 : vector<1x64xf32> to vector<2x64xf32>
    %263 = arith.addf %261, %262 : vector<2x64xf32>
    %c0_329 = arith.constant 0 : index
    %c0_330 = arith.constant 0 : index
    %264 = vector.load %arg5[%c0_329, %c0_330] : memref<64x6xf32, #tpu.memory_space<vmem>>, vector<64x6xf32>
    %cst_331 = arith.constant dense<0.000000e+00> : vector<2x6xf32>
    %265 = tpu.matmul %263, %264, %cst_331 {dimension_numbers = #tpu.dot_dimension_numbers<[1], [0], [0], [1], [0, 0, 1, 1], [], []>} : vector<2x64xf32>, vector<64x6xf32>, vector<2x6xf32> -> vector<2x6xf32>
    %266 = vector.broadcast %12 : vector<1x6xf32> to vector<2x6xf32>
    %267 = arith.addf %265, %266 : vector<2x6xf32>
    %cst_332 = arith.constant dense<0xFF800000> : vector<2xf32>
    %268 = vector.multi_reduction <maximumf>, %267, %cst_332 [1] : vector<2x6xf32> to vector<2xf32>
    %269 = vector.shape_cast %268 : vector<2xf32> to vector<2x1xf32>
    %270 = vector.broadcast %269 : vector<2x1xf32> to vector<2x6xf32>
    %271 = arith.subf %267, %270 : vector<2x6xf32>
    %272 = math.exp %271 : vector<2x6xf32>
    %cst_333 = arith.constant dense<0.000000e+00> : vector<2xf32>
    %273 = vector.multi_reduction <add>, %272, %cst_333 [1] : vector<2x6xf32> to vector<2xf32>
    %274 = vector.shape_cast %273 : vector<2xf32> to vector<2x1xf32>
    %275 = vector.broadcast %274 : vector<2x1xf32> to vector<2x6xf32>
    %276 = arith.divf %272, %275 : vector<2x6xf32>
    %c0_334 = arith.constant 0 : index
    %c0_335 = arith.constant 0 : index
    %c0_336 = arith.constant 0 : index
    %277 = vector.load %arg6[%c0_334, %c0_335, %c0_336] : memref<1x2x6xf32, #tpu.memory_space<vmem>>, vector<1x2x6xf32>
    %278 = vector.shape_cast %277 : vector<1x2x6xf32> to vector<2x6xf32>
    %279 = vector.shape_cast %276 : vector<2x6xf32> to vector<1x2x6xf32>
    tpu.vector_store %arg6[%c0_334, %c0_335, %c0_336], %279 {strides = array<i32>} : memref<1x2x6xf32, #tpu.memory_space<vmem>>, vector<1x2x6xf32>,
    return
  }
  func.func @transform_0(%arg0: i32) -> (i32, i32, i32) {
    %c0_i32 = arith.constant 0 : i32
    %c0_i32_0 = arith.constant 0 : i32
    %c0_i32_1 = arith.constant 0 : i32
    return %arg0, %c0_i32, %c0_i32_0 : i32, i32, i32
  }
  func.func @transform_1(%arg0: i32) -> (i32, i32) {
    %c0_i32 = arith.constant 0 : i32
    %c0_i32_0 = arith.constant 0 : i32
    %c0_i32_1 = arith.constant 0 : i32
    return %c0_i32, %c0_i32_0 : i32, i32
  }
  func.func @transform_2(%arg0: i32) -> (i32, i32) {
    %c0_i32 = arith.constant 0 : i32
    %c0_i32_0 = arith.constant 0 : i32
    %c0_i32_1 = arith.constant 0 : i32
    return %c0_i32, %c0_i32_0 : i32, i32
  }
  func.func @transform_3(%arg0: i32) -> (i32, i32, i32) {
    %c0_i32 = arith.constant 0 : i32
    %c0_i32_0 = arith.constant 0 : i32
    %c0_i32_1 = arith.constant 0 : i32
    %c0_i32_2 = arith.constant 0 : i32
    return %c0_i32, %c0_i32_0, %c0_i32_1 : i32, i32, i32
  }
  func.func @transform_4(%arg0: i32) -> (i32, i32) {
    %c0_i32 = arith.constant 0 : i32
    %c0_i32_0 = arith.constant 0 : i32
    %c0_i32_1 = arith.constant 0 : i32
    return %c0_i32, %c0_i32_0 : i32, i32
  }
  func.func @transform_5(%arg0: i32) -> (i32, i32, i32) {
    %c0_i32 = arith.constant 0 : i32
    %c0_i32_0 = arith.constant 0 : i32
    %c0_i32_1 = arith.constant 0 : i32
    return %arg0, %c0_i32, %c0_i32_0 : i32, i32, i32
  }
}

</mosaic_0001>

<llo_original>
// kernel: actor_forward.1
$region0: #{actor_forward.1}
  #allocation0 [shape = 'u32[]', space=smem, size = 0x4, offset = 0x4, fixed_abs, tag = 'smem constant byte address 0x4 - core index']
  #allocation1 [shape = 'u32[72,128]{1,0:T(1,128)}', space=vmem, size = 0x9000, scoped, tag = 'internal scratch']
  #allocation2 [shape = 'f32[584,8]{1,0:T(8,128)}', space=vmem, size = 0x49000, scoped, tag = 'scratch operand']
  #allocation3 [shape = 'f32[136,8]{1,0:T(8,128)}', space=vmem, size = 0x11000, scoped, tag = 'scratch operand']
  #allocation4 [shape = 'f32[104,8]{1,0:T(8,128)}', space=vmem, size = 0xd000, scoped, tag = 'scratch operand']
  #allocation5 [shape = 'f32[64,16]{1,0:T(8,128)}', space=vmem, size = 0x8000, scoped, tag = 'scratch operand']
  #allocation6 [shape = 'f32[64,72]{1,0:T(8,128)}', space=vmem, size = 0x8000, scoped, tag = 'scratch operand']
  %s0 = inlined_call_operand.vmem [shape: bf16[2,576,9], index: 0, kind: input, shape index: {}]
  %s1 = inlined_call_operand.vmem [shape: bf16[72,40], index: 1, kind: input, shape index: {}]
  %s2 = inlined_call_operand.vmem [shape: f32[1,110], index: 2, kind: input, shape index: {}]
  %s3 = inlined_call_operand.vmem [shape: f32[12,16,64], index: 3, kind: input, shape index: {}]
  %s4 = inlined_call_operand.vmem [shape: f32[64,6], index: 4, kind: input, shape index: {}]
  %s5 = inlined_call_operand.hbm [shape: f32[2,2,6], index: 5, kind: output, shape index: {}]
  %s6 = sld [smem:[#allocation0]]
  $region53: #{actor_forward.1} parent=0
    _
  %s8 = ssub.s32 1, %s6
  %s9 = scalar_select 0, %s8, %s6
  $region1: #{actor_forward.1} parent=0
    #allocation7 [shape = 'u8[2048]{0}', space=vmem, size = 0x800, scoped, tag = 'output window, operand 0']
    #allocation8 [shape = 's32[2]{0}', space=sflag, size = 0x8, scoped, tag = 'scoped memory for actor_forward.1']
    %10 = vsyncpa [#allocation8], 0
    %s11 = scalar_lea.sflag [#allocation8], 1
    %12 = vsyncpa %s11, 0
    loop: start=0, step=1, limit=4
    $region2: #{actor_forward.1} parent=1 // loop_pre_header
      _
    $region3: #{actor_forward.1} parent=1 // loop_header
      %s14 = sphi 0, %s18
      %p15 = scmp.ge.s32.totalorder %s14, 4
      %s24 = sphi 0, %s26
      %s27 = sphi 0, %s24
      %s28 = sphi 0, %s27
      %s44 = sphi 0, %s28
      %s48 = sphi 0, %s48
      %s50 = sphi 0, %s48
      %s51 = sphi 0, %s50
      %s65 = sphi 0, %s51
      %s69 = sphi 0, %s69
      %s71 = sphi 0, %s69
      %s72 = sphi 0, %s71
      %s86 = sphi 0, %s72
      %s90 = sphi 0, %s90
      %s92 = sphi 0, %s90
      %s93 = sphi 0, %s92
      %s107 = sphi 0, %s93
      %s111 = sphi 0, %s111
      %s113 = sphi 0, %s111
      %s114 = sphi 0, %s113
      %s128 = sphi 0, %s114
      %s134 = sphi 0, %s136
      %s137 = sphi 0, %s134
      %s138 = sphi 0, %s137
      %s154 = sphi 0, %s138
    $region4: #{actor_forward.1} parent=1 // loop_header_branch
      %17 = sbr.rel (%p15) target = $region8
    $region5: #{actor_forward.1} parent=1 // loop_body
      %s19 = ssub.s32 %s14, 1
      %s20 = ssub.s32 %s14, 2
      %s21 = sadd.s32 %s14, 1
      %s22 = ssub.s32 %s14, %s21
      %p23 = scmp.eq.s32.totalorder %s22, 0
      %s25 = sadd.s32 %s24, 1
      %s26 = scalar_select %p23, %s24, %s25
      %p29 = pneg %p23
      %p30 = scmp.eq.s32.totalorder %s14, 1
      %p31 = por %p29, %p30
      %p32 = scmp.ne.s32.totalorder %s24, %s27
      %p33 = scmp.eq.s32.totalorder %s14, 0
      %p34 = por %p32, %p33
      %p35 = scmp.ne.s32.totalorder %s24, %s27
      %p36 = scmp.eq.s32.totalorder %s19, 1
      %p37 = por %p35, %p36
      %p38 = scmp.ne.s32.totalorder %s27, %s28
      %p39 = scmp.eq.s32.totalorder %s19, 0
      %p40 = por %p38, %p39
      %p41 = scmp.ne.s32.totalorder %s27, %s28
      %p42 = scmp.eq.s32.totalorder %s20, 1
      %p43 = por %p41, %p42
      %p45 = scmp.ne.s32.totalorder %s28, %s44
      %p46 = scmp.eq.s32.totalorder %s20, 0
      %p47 = por %p45, %p46
      %s49 = sadd.s32 %s48, 1
      %p52 = scmp.eq.s32.totalorder %s14, 1
      %p53 = scmp.ne.s32.totalorder %s48, %s50
      %p54 = scmp.eq.s32.totalorder %s14, 0
      %p55 = por %p53, %p54
      %p56 = scmp.ne.s32.totalorder %s48, %s50
      %p57 = scmp.eq.s32.totalorder %s19, 1
      %p58 = por %p56, %p57
      %p59 = scmp.ne.s32.totalorder %s50, %s51
      %p60 = scmp.eq.s32.totalorder %s19, 0
      %p61 = por %p59, %p60
      %p62 = scmp.ne.s32.totalorder %s50, %s51
      %p63 = scmp.eq.s32.totalorder %s20, 1
      %p64 = por %p62, %p63
      %p66 = scmp.ne.s32.totalorder %s51, %s65
      %p67 = scmp.eq.s32.totalorder %s20, 0
      %p68 = por %p66, %p67
      %s70 = sadd.s32 %s69, 1
      %p73 = scmp.eq.s32.totalorder %s14, 1
      %p74 = scmp.ne.s32.totalorder %s69, %s71
      %p75 = scmp.eq.s32.totalorder %s14, 0
      %p76 = por %p74, %p75
      %p77 = scmp.ne.s32.totalorder %s69, %s71
      %p78 = scmp.eq.s32.totalorder %s19, 1
      %p79 = por %p77, %p78
      %p80 = scmp.ne.s32.totalorder %s71, %s72
      %p81 = scmp.eq.s32.totalorder %s19, 0
      %p82 = por %p80, %p81
      %p83 = scmp.ne.s32.totalorder %s71, %s72
      %p84 = scmp.eq.s32.totalorder %s20, 1
      %p85 = por %p83, %p84
      %p87 = scmp.ne.s32.totalorder %s72, %s86
      %p88 = scmp.eq.s32.totalorder %s20, 0
      %p89 = por %p87, %p88
      %s91 = sadd.s32 %s90, 1
      %p94 = scmp.eq.s32.totalorder %s14, 1
      %p95 = scmp.ne.s32.totalorder %s90, %s92
      %p96 = scmp.eq.s32.totalorder %s14, 0
      %p97 = por %p95, %p96
      %p98 = scmp.ne.s32.totalorder %s90, %s92
      %p99 = scmp.eq.s32.totalorder %s19, 1
      %p100 = por %p98, %p99
      %p101 = scmp.ne.s32.totalorder %s92, %s93
      %p102 = scmp.eq.s32.totalorder %s19, 0
      %p103 = por %p101, %p102
      %p104 = scmp.ne.s32.totalorder %s92, %s93
      %p105 = scmp.eq.s32.totalorder %s20, 1
      %p106 = por %p104, %p105
      %p108 = scmp.ne.s32.totalorder %s93, %s107
      %p109 = scmp.eq.s32.totalorder %s20, 0
      %p110 = por %p108, %p109
      %s112 = sadd.s32 %s111, 1
      %p115 = scmp.eq.s32.totalorder %s14, 1
      %p116 = scmp.ne.s32.totalorder %s111, %s113
      %p117 = scmp.eq.s32.totalorder %s14, 0
      %p118 = por %p116, %p117
      %p119 = scmp.ne.s32.totalorder %s111, %s113
      %p120 = scmp.eq.s32.totalorder %s19, 1
      %p121 = por %p119, %p120
      %p122 = scmp.ne.s32.totalorder %s113, %s114
      %p123 = scmp.eq.s32.totalorder %s19, 0
      %p124 = por %p122, %p123
      %p125 = scmp.ne.s32.totalorder %s113, %s114
      %p126 = scmp.eq.s32.totalorder %s20, 1
      %p127 = por %p125, %p126
      %p129 = scmp.ne.s32.totalorder %s114, %s128
      %p130 = scmp.eq.s32.totalorder %s20, 0
      %p131 = por %p129, %p130
      %s132 = ssub.s32 %s14, %s21
      %p133 = scmp.eq.s32.totalorder %s132, 0
      %s135 = sadd.s32 %s134, 1
      %s136 = scalar_select %p133, %s134, %s135
      %p139 = pneg %p133
      %p140 = scmp.eq.s32.totalorder %s14, 1
      %p141 = por %p139, %p140
      %p142 = scmp.ne.s32.totalorder %s134, %s137
      %p143 = scmp.eq.s32.totalorder %s14, 0
      %p144 = por %p142, %p143
      %p145 = scmp.ne.s32.totalorder %s134, %s137
      %p146 = scmp.eq.s32.totalorder %s19, 1
      %p147 = por %p145, %p146
      %p148 = scmp.ne.s32.totalorder %s137, %s138
      %p149 = scmp.eq.s32.totalorder %s19, 0
      %p150 = por %p148, %p149
      %p151 = scmp.ne.s32.totalorder %s137, %s138
      %p152 = scmp.eq.s32.totalorder %s20, 1
      %p153 = por %p151, %p152
      %p155 = scmp.ne.s32.totalorder %s138, %s154
      %p156 = scmp.eq.s32.totalorder %s20, 0
      %p157 = por %p155, %p156
      %p158 = scmp.le.s32.totalorder 1, %s14
      %p159 = scmp.lt.s32.totalorder %s14, 3
      %p160 = pnand %p158, %p159
      %p161 = pneg %p160
      // Predicated region
      $region9: #{actor_forward.1} parent=5 // pred_check
        _
      $region10: #{actor_forward.1} parent=5 // pred_check_branch
        %163 = sbr.rel (%p160) target = $region12
      $region11: #{actor_forward.1} parent=5 // pred_region
        %s164 = ssub.s32 %s14, 1
        // Predicated region
        $region13: #{actor_forward.1} parent=11 // pred_check
          %p165 = pneg %p61
        $region14: #{actor_forward.1} parent=11 // pred_check_branch
          %167 = sbr.rel (%p165) target = $region16
        $region15: #{actor_forward.1} parent=11 // pred_region
          _
        $region16: #{actor_forward.1} parent=11 // pred_fallthru
          _
        // Predicated region
        $region17: #{actor_forward.1} parent=11 // pred_check
          %p168 = pneg %p82
        $region18: #{actor_forward.1} parent=11 // pred_check_branch
          %170 = sbr.rel (%p168) target = $region20
        $region19: #{actor_forward.1} parent=11 // pred_region
          _
        $region20: #{actor_forward.1} parent=11 // pred_fallthru
          _
        // Predicated region
        $region21: #{actor_forward.1} parent=11 // pred_check
          %p171 = pneg %p103
        $region22: #{actor_forward.1} parent=11 // pred_check_branch
          %173 = sbr.rel (%p171) target = $region24
        $region23: #{actor_forward.1} parent=11 // pred_region
          _
        $region24: #{actor_forward.1} parent=11 // pred_fallthru
          _
        // Predicated region
        $region25: #{actor_forward.1} parent=11 // pred_check
          %p174 = pneg %p124
        $region26: #{actor_forward.1} parent=11 // pred_check_branch
          %176 = sbr.rel (%p174) target = $region28
        $region27: #{actor_forward.1} parent=11 // pred_region
          _
        $region28: #{actor_forward.1} parent=11 // pred_fallthru
          _
      $region12: #{actor_forward.1} parent=5 // pred_fallthru
        _
      %p177 = scmp.lt.s32.totalorder %s14, 2
      // Predicated region
      $region29: #{actor_forward.1} parent=5 // pred_check
        %p178 = pneg %p177
      $region30: #{actor_forward.1} parent=5 // pred_check_branch
        %180 = sbr.rel (%p178) target = $region32
      $region31: #{actor_forward.1} parent=5 // pred_region
        // Predicated region
        $region33: #{actor_forward.1} parent=31 // pred_check
          %p181 = pneg %p34
        $region34: #{actor_forward.1} parent=31 // pred_check_branch
          %183 = sbr.rel (%p181) target = $region36
        $region35: #{actor_forward.1} parent=31 // pred_region
          %p184 = scmp.lt.s32.totalorder %s14, 1
          %s185 = scalar_select %p184, %s14, 1
          %s186 = smul.addr %s185, 72
          %s187 = smul.addr %s186, 4
          %s188 = scalar_lea.vmem %s0, %s187
        $region36: #{actor_forward.1} parent=31 // pred_fallthru
          _
      $region32: #{actor_forward.1} parent=5 // pred_fallthru
        _
      %p189 = scmp.le.s32.totalorder 1, %s14
      %p190 = scmp.lt.s32.totalorder %s14, 3
      %p191 = pnand %p189, %p190
      %p192 = pneg %p191
      // Predicated region
      $region37: #{actor_forward.1} parent=5 // pred_check
        _
      $region38: #{actor_forward.1} parent=5 // pred_check_branch
        %194 = sbr.rel (%p191) target = $region40
      $region39: #{actor_forward.1} parent=5 // pred_region
        %s195 = ssub.s32 %s14, 1
        %p196 = scmp.lt.s32.totalorder %s19, 1
        %s197 = scalar_select %p196, %s19, 1
        %s198 = smul.addr %s197, 72
        %s199 = smul.addr %s198, 4
        %s200 = scalar_lea.vmem %s0, %s199
        %p201 = pneg %p40
        %p202 = pneg %p37
        %p203 = pneg %p61
        %p204 = pneg %p58
        %p205 = pneg %p82
        %p206 = pneg %p79
        %p207 = pneg %p103
        %p208 = pneg %p100
        %p209 = pneg %p124
        %p210 = pneg %p121
        %p211 = pneg %p150
        %p212 = pneg %p147
        %s213 = sand.u32 %s137, 1
        %s214 = scalar_lea.sflag [#allocation8], %s213
        %s215 = sand.u32 %s137, 1
        %s216 = smul.addr %s215, 2
        %s217 = scalar_lea.vmem [#allocation7], %s216
        %p218 = scmp.lt.s32.totalorder %s19, 1
        %s219 = scalar_select %p218, %s19, 1
        %s220 = smul.addr %s219, 72
        %s221 = smul.addr %s220, 4
        %s222 = scalar_lea.vmem %s0, %s221
        %v224 = vld [vmem:[%s1] sm:$0xf]
        %v225 = vld [vmem:[%s1 + $0x4] sm:$0xf]
        %v226 = vld [vmem:[%s1 + $0x8] sm:$0xf]
        %v227 = vld [vmem:[%s1 + $0xc] sm:$0xf]
        %v228 = vld [vmem:[%s1 + $0x10] sm:$0xf]
        %v229 = vld [vmem:[%s1 + $0x14] sm:$0xf]
        %v230 = vld [vmem:[%s1 + $0x18] sm:$0xf]
        %v231 = vld [vmem:[%s1 + $0x1c] sm:$0xf]
        %v232 = vld [vmem:[%s1 + $0x20] sm:$0xf]
        %v233 = vunpack.c.l.bf16 %v224
        %v234 = vunpack.c.l.bf16 %v225
        %v235 = vunpack.c.l.bf16 %v226
        %v236 = vunpack.c.l.bf16 %v227
        %v237 = vunpack.c.l.bf16 %v228
        %v238 = vunpack.c.l.bf16 %v229
        %v239 = vunpack.c.l.bf16 %v230
        %v240 = vunpack.c.l.bf16 %v231
        %v241 = vunpack.c.l.bf16 %v232
        %v242 = vld [vmem:[%s1 + $0x4] sm:$0x1]
        %v243 = vld [vmem:[%s2] sm:$0x1]
        %vm244 = vcmask 64512
        %245 = vst.msk [vmem:[#allocation2 + $0x240] sm:$0xff] %vm244, 0.0
        %246 = vst.msk [vmem:[#allocation3 + $0x80] sm:$0xff] %vm244, 0.0
        %247 = vst.msk [vmem:[#allocation4 + $0x60] sm:$0xff] %vm244, 0.0
        %v248 = vld [vmem:[%s222] sm:$0xf]
        %v249 = vld [vmem:[%s222 + $0x4] sm:$0xf]
        %v250 = vld [vmem:[%s222 + $0x8] sm:$0xf]
        %v251 = vld [vmem:[%s222 + $0xc] sm:$0xf]
        %v252 = vld [vmem:[%s222 + $0x10] sm:$0xf]
        %v253 = vld [vmem:[%s222 + $0x14] sm:$0xf]
        %v254 = vld [vmem:[%s222 + $0x18] sm:$0xf]
        %v255 = vld [vmem:[%s222 + $0x1c] sm:$0xf]
        %v256 = vld [vmem:[%s222 + $0x20] sm:$0xf]
        %v257 = vld [vmem:[%s222 + $0x24] sm:$0xf]
        %v258 = vld [vmem:[%s222 + $0x28] sm:$0xf]
        %v259 = vld [vmem:[%s222 + $0x2c] sm:$0xf]
        %v260 = vld [vmem:[%s222 + $0x30] sm:$0xf]
        %v261 = vld [vmem:[%s222 + $0x34] sm:$0xf]
        %v262 = vld [vmem:[%s222 + $0x38] sm:$0xf]
        %v263 = vld [vmem:[%s222 + $0x3c] sm:$0xf]
        %v264 = vld [vmem:[%s222 + $0x40] sm:$0xf]
        %v265 = vld [vmem:[%s222 + $0x44] sm:$0xf]
        %v266 = vld [vmem:[%s222 + $0x48] sm:$0xf]
        %v267 = vld [vmem:[%s222 + $0x4c] sm:$0xf]
        %v268 = vld [vmem:[%s222 + $0x50] sm:$0xf]
        %v269 = vld [vmem:[%s222 + $0x54] sm:$0xf]
        %v270 = vld [vmem:[%s222 + $0x58] sm:$0xf]
        %v271 = vld [vmem:[%s222 + $0x5c] sm:$0xf]
        %v272 = vld [vmem:[%s222 + $0x60] sm:$0xf]
        %v273 = vld [vmem:[%s222 + $0x64] sm:$0xf]
        %v274 = vld [vmem:[%s222 + $0x68] sm:$0xf]
        %v275 = vld [vmem:[%s222 + $0x6c] sm:$0xf]
        %v276 = vld [vmem:[%s222 + $0x70] sm:$0xf]
        %v277 = vld [vmem:[%s222 + $0x74] sm:$0xf]
        %v278 = vld [vmem:[%s222 + $0x78] sm:$0xf]
        %v279 = vld [vmem:[%s222 + $0x7c] sm:$0xf]
        %v280 = vld [vmem:[%s222 + $0x80] sm:$0xf]
        %v281 = vld [vmem:[%s222 + $0x84] sm:$0xf]
        %v282 = vld [vmem:[%s222 + $0x88] sm:$0xf]
        %v283 = vld [vmem:[%s222 + $0x8c] sm:$0xf]
        %v284 = vld [vmem:[%s222 + $0x90] sm:$0xf]
        %v285 = vld [vmem:[%s222 + $0x94] sm:$0xf]
        %v286 = vld [vmem:[%s222 + $0x98] sm:$0xf]
        %v287 = vld [vmem:[%s222 + $0x9c] sm:$0xf]
        %v288 = vld [vmem:[%s222 + $0xa0] sm:$0xf]
        %v289 = vld [vmem:[%s222 + $0xa4] sm:$0xf]
        %v290 = vld [vmem:[%s222 + $0xa8] sm:$0xf]
        %v291 = vld [vmem:[%s222 + $0xac] sm:$0xf]
        %v292 = vld [vmem:[%s222 + $0xb0] sm:$0xf]
        %v293 = vld [vmem:[%s222 + $0xb4] sm:$0xf]
        %v294 = vld [vmem:[%s222 + $0xb8] sm:$0xf]
        %v295 = vld [vmem:[%s222 + $0xbc] sm:$0xf]
        %v296 = vld [vmem:[%s222 + $0xc0] sm:$0xf]
        %v297 = vld [vmem:[%s222 + $0xc4] sm:$0xf]
        %v298 = vld [vmem:[%s222 + $0xc8] sm:$0xf]
        %v299 = vld [vmem:[%s222 + $0xcc] sm:$0xf]
        %v300 = vld [vmem:[%s222 + $0xd0] sm:$0xf]
        %v301 = vld [vmem:[%s222 + $0xd4] sm:$0xf]
        %v302 = vld [vmem:[%s222 + $0xd8] sm:$0xf]
        %v303 = vld [vmem:[%s222 + $0xdc] sm:$0xf]
        %v304 = vld [vmem:[%s222 + $0xe0] sm:$0xf]
        %v305 = vld [vmem:[%s222 + $0xe4] sm:$0xf]
        %v306 = vld [vmem:[%s222 + $0xe8] sm:$0xf]
        %v307 = vld [vmem:[%s222 + $0xec] sm:$0xf]
        %v308 = vld [vmem:[%s222 + $0xf0] sm:$0xf]
        %v309 = vld [vmem:[%s222 + $0xf4] sm:$0xf]
        %v310 = vld [vmem:[%s222 + $0xf8] sm:$0xf]
        %v311 = vld [vmem:[%s222 + $0xfc] sm:$0xf]
        %v312 = vld [vmem:[%s222 + $0x100] sm:$0xf]
        %v313 = vld [vmem:[%s222 + $0x104] sm:$0xf]
        %v314 = vld [vmem:[%s222 + $0x108] sm:$0xf]
        %v315 = vld [vmem:[%s222 + $0x10c] sm:$0xf]
        %v316 = vld [vmem:[%s222 + $0x110] sm:$0xf]
        %v317 = vld [vmem:[%s222 + $0x114] sm:$0xf]
        %v318 = vld [vmem:[%s222 + $0x118] sm:$0xf]
        %v319 = vld [vmem:[%s222 + $0x11c] sm:$0xf]
        %v321 = vperm.slane %v243, 0
        %v395 = vunpack.c.l.b16 %v248
        %v396 = vunpack.c.l.b16 %v249
        %v397 = vunpack.c.l.b16 %v250
        %v398 = vunpack.c.l.b16 %v251
        %v399 = vunpack.c.l.b16 %v252
        %v400 = vunpack.c.l.b16 %v253
        %v401 = vunpack.c.l.b16 %v254
        %v402 = vunpack.c.l.b16 %v255
        %v403 = vunpack.c.l.b16 %v256
        %v404 = vunpack.c.l.b16 %v257
        %v405 = vunpack.c.l.b16 %v258
        %v406 = vunpack.c.l.b16 %v259
        %v407 = vunpack.c.l.b16 %v260
        %v408 = vunpack.c.l.b16 %v261
        %v409 = vunpack.c.l.b16 %v262
        %v410 = vunpack.c.l.b16 %v263
        %v411 = vunpack.c.l.b16 %v264
        %v412 = vunpack.c.l.b16 %v265
        %v413 = vunpack.c.l.b16 %v266
        %v414 = vunpack.c.l.b16 %v267
        %v415 = vunpack.c.l.b16 %v268
        %v416 = vunpack.c.l.b16 %v269
        %v417 = vunpack.c.l.b16 %v270
        %v418 = vunpack.c.l.b16 %v271
        %v419 = vunpack.c.l.b16 %v272
        %v420 = vunpack.c.l.b16 %v273
        %v421 = vunpack.c.l.b16 %v274
        %v422 = vunpack.c.l.b16 %v275
        %v423 = vunpack.c.l.b16 %v276
        %v424 = vunpack.c.l.b16 %v277
        %v425 = vunpack.c.l.b16 %v278
        %v426 = vunpack.c.l.b16 %v279
        %v427 = vunpack.c.l.b16 %v280
        %v428 = vunpack.c.l.b16 %v281
        %v429 = vunpack.c.l.b16 %v282
        %v430 = vunpack.c.l.b16 %v283
        %v431 = vunpack.c.l.b16 %v284
        %v432 = vunpack.c.l.b16 %v285
        %v433 = vunpack.c.l.b16 %v286
        %v434 = vunpack.c.l.b16 %v287
        %v435 = vunpack.c.l.b16 %v288
        %v436 = vunpack.c.l.b16 %v289
        %v437 = vunpack.c.l.b16 %v290
        %v438 = vunpack.c.l.b16 %v291
        %v439 = vunpack.c.l.b16 %v292
        %v440 = vunpack.c.l.b16 %v293
        %v441 = vunpack.c.l.b16 %v294
        %v442 = vunpack.c.l.b16 %v295
        %v443 = vunpack.c.l.b16 %v296
        %v444 = vunpack.c.l.b16 %v297
        %v445 = vunpack.c.l.b16 %v298
        %v446 = vunpack.c.l.b16 %v299
        %v447 = vunpack.c.l.b16 %v300
        %v448 = vunpack.c.l.b16 %v301
        %v449 = vunpack.c.l.b16 %v302
        %v450 = vunpack.c.l.b16 %v303
        %v451 = vunpack.c.l.b16 %v304
        %v452 = vunpack.c.l.b16 %v305
        %v453 = vunpack.c.l.b16 %v306
        %v454 = vunpack.c.l.b16 %v307
        %v455 = vunpack.c.l.b16 %v308
        %v456 = vunpack.c.l.b16 %v309
        %v457 = vunpack.c.l.b16 %v310
        %v458 = vunpack.c.l.b16 %v311
        %v459 = vunpack.c.l.b16 %v312
        %v460 = vunpack.c.l.b16 %v313
        %v461 = vunpack.c.l.b16 %v314
        %v462 = vunpack.c.l.b16 %v315
        %v463 = vunpack.c.l.b16 %v316
        %v464 = vunpack.c.l.b16 %v317
        %v465 = vunpack.c.l.b16 %v318
        %v466 = vunpack.c.l.b16 %v319
        %v467 = vpack.c.b16 %v396, %v395
        %v468 = vpack.c.b16 %v398, %v397
        %v469 = vpack.c.b16 %v400, %v399
        %v470 = vpack.c.b16 %v402, %v401
        %v471 = vpack.c.b16 %v404, %v403
        %v472 = vpack.c.b16 %v406, %v405
        %v473 = vpack.c.b16 %v408, %v407
        %v474 = vpack.c.b16 %v410, %v409
        %v475 = vpack.c.b16 %v412, %v411
        %v476 = vpack.c.b16 %v414, %v413
        %v477 = vpack.c.b16 %v416, %v415
        %v478 = vpack.c.b16 %v418, %v417
        %v479 = vpack.c.b16 %v420, %v419
        %v480 = vpack.c.b16 %v422, %v421
        %v481 = vpack.c.b16 %v424, %v423
        %v482 = vpack.c.b16 %v426, %v425
        %v483 = vpack.c.b16 %v428, %v427
        %v484 = vpack.c.b16 %v430, %v429
        %v485 = vpack.c.b16 %v432, %v431
        %v486 = vpack.c.b16 %v434, %v433
        %v487 = vpack.c.b16 %v436, %v435
        %v488 = vpack.c.b16 %v438, %v437
        %v489 = vpack.c.b16 %v440, %v439
        %v490 = vpack.c.b16 %v442, %v441
        %v491 = vpack.c.b16 %v444, %v443
        %v492 = vpack.c.b16 %v446, %v445
        %v493 = vpack.c.b16 %v448, %v447
        %v494 = vpack.c.b16 %v450, %v449
        %v495 = vpack.c.b16 %v452, %v451
        %v496 = vpack.c.b16 %v454, %v453
        %v497 = vpack.c.b16 %v456, %v455
        %v498 = vpack.c.b16 %v458, %v457
        %v499 = vpack.c.b16 %v460, %v459
        %v500 = vpack.c.b16 %v462, %v461
        %v501 = vpack.c.b16 %v464, %v463
        %v502 = vpack.c.b16 %v466, %v465
        %v505 = vunpack.c.l.b16 %v224
        %v506 = vunpack.c.l.b16 %v242
        %v507 = vpack.c.b16 %v506, %v505
        %508 = vrot.lane.b32.xlu0 %v507, 96
        %v509 = vpop.permute.xlu0 %508
        %vm510 = vcmask 72704
        %v512 = vsel %vm510, %v467, 0
        %v515 = vsel %vm510, %v468, 0
        %v518 = vsel %vm510, %v469, 0
        %v521 = vsel %vm510, %v470, 0
        %v524 = vsel %vm510, %v471, 0
        %v527 = vsel %vm510, %v472, 0
        %v530 = vsel %vm510, %v473, 0
        %v533 = vsel %vm510, %v474, 0
        %v536 = vsel %vm510, %v475, 0
        %v539 = vsel %vm510, %v476, 0
        %v542 = vsel %vm510, %v477, 0
        %v545 = vsel %vm510, %v478, 0
        %v548 = vsel %vm510, %v479, 0
        %v551 = vsel %vm510, %v480, 0
        %v554 = vsel %vm510, %v481, 0
        %v557 = vsel %vm510, %v482, 0
        %v560 = vsel %vm510, %v483, 0
        %v563 = vsel %vm510, %v484, 0
        %v566 = vsel %vm510, %v485, 0
        %v569 = vsel %vm510, %v486, 0
        %v572 = vsel %vm510, %v487, 0
        %v575 = vsel %vm510, %v488, 0
        %v578 = vsel %vm510, %v489, 0
        %v581 = vsel %vm510, %v490, 0
        %v584 = vsel %vm510, %v491, 0
        %v587 = vsel %vm510, %v492, 0
        %v590 = vsel %vm510, %v493, 0
        %v593 = vsel %vm510, %v494, 0
        %v596 = vsel %vm510, %v495, 0
        %v599 = vsel %vm510, %v496, 0
        %v602 = vsel %vm510, %v497, 0
        %v605 = vsel %vm510, %v498, 0
        %v608 = vsel %vm510, %v499, 0
        %v611 = vsel %vm510, %v500, 0
        %v614 = vsel %vm510, %v501, 0
        %v617 = vsel %vm510, %v502, 0
        %vm619 = vcmask 1043456
        %vm620 = vcmask 1044480
        %v621 = vsel %vm619, 4294967295, 65535
        %v622 = vsel %vm620, %v621, 0
        %v624 = vand.u32 %v509, %v622
        %626 = vmatpush.bf16.msra.mxu0 0
        %627 = vmatpush.bf16.msra.mxu0 0
        %628 = vmatpush.bf16.msra.mxu0 0
        %629 = vmatpush.bf16.msra.mxu0 0
        %630 = vmatpush.bf16.msra.mxu0 0
        %631 = vmatpush.bf16.msra.mxu0 0
        %632 = vmatpush.bf16.msra.mxu0 0
        %633 = vmatpush.bf16.msra.mxu0 %v624
        %634 = vmatmul.bf16.gmra.mxu0 %v512
        %v635 = vpop.f32.mrf.mxu0
        %v636 = vadd.f32 %v321, %v635
        %v637 = vpop.f32.mrf.mxu0
        %v638 = vadd.f32 %v321, %v637
        %639 = vmatmul.bf16.gmra.mxu0 %v515
        %v640 = vpop.f32.mrf.mxu0
        %v641 = vadd.f32 %v321, %v640
        %v642 = vpop.f32.mrf.mxu0
        %v643 = vadd.f32 %v321, %v642
        %644 = vmatmul.bf16.gmra.mxu0 %v518
        %v645 = vpop.f32.mrf.mxu0
        %v646 = vadd.f32 %v321, %v645
        %v647 = vpop.f32.mrf.mxu0
        %v648 = vadd.f32 %v321, %v647
        %649 = vmatmul.bf16.gmra.mxu0 %v521
        %v650 = vpop.f32.mrf.mxu0
        %v651 = vadd.f32 %v321, %v650
        %v652 = vpop.f32.mrf.mxu0
        %v653 = vadd.f32 %v321, %v652
        %654 = vmatmul.bf16.gmra.mxu0 %v524
        %v655 = vpop.f32.mrf.mxu0
        %v656 = vadd.f32 %v321, %v655
        %v657 = vpop.f32.mrf.mxu0
        %v658 = vadd.f32 %v321, %v657
        %659 = vmatmul.bf16.gmra.mxu0 %v527
        %v660 = vpop.f32.mrf.mxu0
        %v661 = vadd.f32 %v321, %v660
        %v662 = vpop.f32.mrf.mxu0
        %v663 = vadd.f32 %v321, %v662
        %664 = vmatmul.bf16.gmra.mxu0 %v530
        %v665 = vpop.f32.mrf.mxu0
        %v666 = vadd.f32 %v321, %v665
        %v667 = vpop.f32.mrf.mxu0
        %v668 = vadd.f32 %v321, %v667
        %669 = vmatmul.bf16.gmra.mxu0 %v533
        %v670 = vpop.f32.mrf.mxu0
        %v671 = vadd.f32 %v321, %v670
        %v672 = vpop.f32.mrf.mxu0
        %v673 = vadd.f32 %v321, %v672
        %674 = vmatmul.bf16.gmra.mxu0 %v536
        %v675 = vpop.f32.mrf.mxu0
        %v676 = vadd.f32 %v321, %v675
        %v677 = vpop.f32.mrf.mxu0
        %v678 = vadd.f32 %v321, %v677
        %679 = vmatmul.bf16.gmra.mxu0 %v539
        %v680 = vpop.f32.mrf.mxu0
        %v681 = vadd.f32 %v321, %v680
        %v682 = vpop.f32.mrf.mxu0
        %v683 = vadd.f32 %v321, %v682
        %684 = vmatmul.bf16.gmra.mxu0 %v542
        %v685 = vpop.f32.mrf.mxu0
        %v686 = vadd.f32 %v321, %v685
        %v687 = vpop.f32.mrf.mxu0
        %v688 = vadd.f32 %v321, %v687
        %689 = vmatmul.bf16.gmra.mxu0 %v545
        %v690 = vpop.f32.mrf.mxu0
        %v691 = vadd.f32 %v321, %v690
        %v692 = vpop.f32.mrf.mxu0
        %v693 = vadd.f32 %v321, %v692
        %694 = vmatmul.bf16.gmra.mxu0 %v548
        %v695 = vpop.f32.mrf.mxu0
        %v696 = vadd.f32 %v321, %v695
        %v697 = vpop.f32.mrf.mxu0
        %v698 = vadd.f32 %v321, %v697
        %699 = vmatmul.bf16.gmra.mxu0 %v551
        %v700 = vpop.f32.mrf.mxu0
        %v701 = vadd.f32 %v321, %v700
        %v702 = vpop.f32.mrf.mxu0
        %v703 = vadd.f32 %v321, %v702
        %704 = vmatmul.bf16.gmra.mxu0 %v554
        %v705 = vpop.f32.mrf.mxu0
        %v706 = vadd.f32 %v321, %v705
        %v707 = vpop.f32.mrf.mxu0
        %v708 = vadd.f32 %v321, %v707
        %709 = vmatmul.bf16.gmra.mxu0 %v557
        %v710 = vpop.f32.mrf.mxu0
        %v711 = vadd.f32 %v321, %v710
        %v712 = vpop.f32.mrf.mxu0
        %v713 = vadd.f32 %v321, %v712
        %714 = vmatmul.bf16.gmra.mxu0 %v560
        %v715 = vpop.f32.mrf.mxu0
        %v716 = vadd.f32 %v321, %v715
        %v717 = vpop.f32.mrf.mxu0
        %v718 = vadd.f32 %v321, %v717
        %719 = vmatmul.bf16.gmra.mxu0 %v563
        %v720 = vpop.f32.mrf.mxu0
        %v721 = vadd.f32 %v321, %v720
        %v722 = vpop.f32.mrf.mxu0
        %v723 = vadd.f32 %v321, %v722
        %724 = vmatmul.bf16.gmra.mxu0 %v566
        %v725 = vpop.f32.mrf.mxu0
        %v726 = vadd.f32 %v321, %v725
        %v727 = vpop.f32.mrf.mxu0
        %v728 = vadd.f32 %v321, %v727
        %729 = vmatmul.bf16.gmra.mxu0 %v569
        %v730 = vpop.f32.mrf.mxu0
        %v731 = vadd.f32 %v321, %v730
        %v732 = vpop.f32.mrf.mxu0
        %v733 = vadd.f32 %v321, %v732
        %734 = vmatmul.bf16.gmra.mxu0 %v572
        %v735 = vpop.f32.mrf.mxu0
        %v736 = vadd.f32 %v321, %v735
        %v737 = vpop.f32.mrf.mxu0
        %v738 = vadd.f32 %v321, %v737
        %739 = vmatmul.bf16.gmra.mxu0 %v575
        %v740 = vpop.f32.mrf.mxu0
        %v741 = vadd.f32 %v321, %v740
        %v742 = vpop.f32.mrf.mxu0
        %v743 = vadd.f32 %v321, %v742
        %744 = vmatmul.bf16.gmra.mxu0 %v578
        %v745 = vpop.f32.mrf.mxu0
        %v746 = vadd.f32 %v321, %v745
        %v747 = vpop.f32.mrf.mxu0
        %v748 = vadd.f32 %v321, %v747
        %749 = vmatmul.bf16.gmra.mxu0 %v581
        %v750 = vpop.f32.mrf.mxu0
        %v751 = vadd.f32 %v321, %v750
        %v752 = vpop.f32.mrf.mxu0
        %v753 = vadd.f32 %v321, %v752
        %754 = vmatmul.bf16.gmra.mxu0 %v584
        %v755 = vpop.f32.mrf.mxu0
        %v756 = vadd.f32 %v321, %v755
        %v757 = vpop.f32.mrf.mxu0
        %v758 = vadd.f32 %v321, %v757
        %759 = vmatmul.bf16.gmra.mxu0 %v587
        %v760 = vpop.f32.mrf.mxu0
        %v761 = vadd.f32 %v321, %v760
        %v762 = vpop.f32.mrf.mxu0
        %v763 = vadd.f32 %v321, %v762
        %764 = vmatmul.bf16.gmra.mxu0 %v590
        %v765 = vpop.f32.mrf.mxu0
        %v766 = vadd.f32 %v321, %v765
        %v767 = vpop.f32.mrf.mxu0
        %v768 = vadd.f32 %v321, %v767
        %769 = vmatmul.bf16.gmra.mxu0 %v593
        %v770 = vpop.f32.mrf.mxu0
        %v771 = vadd.f32 %v321, %v770
        %v772 = vpop.f32.mrf.mxu0
        %v773 = vadd.f32 %v321, %v772
        %774 = vmatmul.bf16.gmra.mxu0 %v596
        %v775 = vpop.f32.mrf.mxu0
        %v776 = vadd.f32 %v321, %v775
        %v777 = vpop.f32.mrf.mxu0
        %v778 = vadd.f32 %v321, %v777
        %779 = vmatmul.bf16.gmra.mxu0 %v599
        %v780 = vpop.f32.mrf.mxu0
        %v781 = vadd.f32 %v321, %v780
        %v782 = vpop.f32.mrf.mxu0
        %v783 = vadd.f32 %v321, %v782
        %784 = vmatmul.bf16.gmra.mxu0 %v602
        %v785 = vpop.f32.mrf.mxu0
        %v786 = vadd.f32 %v321, %v785
        %v787 = vpop.f32.mrf.mxu0
        %v788 = vadd.f32 %v321, %v787
        %789 = vmatmul.bf16.gmra.mxu0 %v605
        %v790 = vpop.f32.mrf.mxu0
        %v791 = vadd.f32 %v321, %v790
        %v792 = vpop.f32.mrf.mxu0
        %v793 = vadd.f32 %v321, %v792
        %794 = vmatmul.bf16.gmra.mxu0 %v608
        %v795 = vpop.f32.mrf.mxu0
        %v796 = vadd.f32 %v321, %v795
        %v797 = vpop.f32.mrf.mxu0
        %v798 = vadd.f32 %v321, %v797
        %799 = vmatmul.bf16.gmra.mxu0 %v611
        %v800 = vpop.f32.mrf.mxu0
        %v801 = vadd.f32 %v321, %v800
        %v802 = vpop.f32.mrf.mxu0
        %v803 = vadd.f32 %v321, %v802
        %804 = vmatmul.bf16.gmra.mxu0 %v614
        %v805 = vpop.f32.mrf.mxu0
        %v806 = vadd.f32 %v321, %v805
        %v807 = vpop.f32.mrf.mxu0
        %v808 = vadd.f32 %v321, %v807
        %809 = vmatmul.bf16.gmra.mxu0 %v617
        %v810 = vpop.f32.mrf.mxu0
        %v811 = vadd.f32 %v321, %v810
        %v812 = vpop.f32.mrf.mxu0
        %v813 = vadd.f32 %v321, %v812
        %814 = vdwg.mxu0
        %v815 = vmax.f32 %v636, 0.0
        %v816 = vmax.f32 %v638, 0.0
        %v817 = vmax.f32 %v641, 0.0
        %v818 = vmax.f32 %v643, 0.0
        %v819 = vmax.f32 %v646, 0.0
        %v820 = vmax.f32 %v648, 0.0
        %v821 = vmax.f32 %v651, 0.0
        %v822 = vmax.f32 %v653, 0.0
        %v823 = vmax.f32 %v656, 0.0
        %v824 = vmax.f32 %v658, 0.0
        %v825 = vmax.f32 %v661, 0.0
        %v826 = vmax.f32 %v663, 0.0
        %v827 = vmax.f32 %v666, 0.0
        %v828 = vmax.f32 %v668, 0.0
        %v829 = vmax.f32 %v671, 0.0
        %v830 = vmax.f32 %v673, 0.0
        %v831 = vmax.f32 %v676, 0.0
        %v832 = vmax.f32 %v678, 0.0
        %v833 = vmax.f32 %v681, 0.0
        %v834 = vmax.f32 %v683, 0.0
        %v835 = vmax.f32 %v686, 0.0
        %v836 = vmax.f32 %v688, 0.0
        %v837 = vmax.f32 %v691, 0.0
        %v838 = vmax.f32 %v693, 0.0
        %v839 = vmax.f32 %v696, 0.0
        %v840 = vmax.f32 %v698, 0.0
        %v841 = vmax.f32 %v701, 0.0
        %v842 = vmax.f32 %v703, 0.0
        %v843 = vmax.f32 %v706, 0.0
        %v844 = vmax.f32 %v708, 0.0
        %v845 = vmax.f32 %v711, 0.0
        %v846 = vmax.f32 %v713, 0.0
        %v847 = vmax.f32 %v716, 0.0
        %v848 = vmax.f32 %v718, 0.0
        %v849 = vmax.f32 %v721, 0.0
        %v850 = vmax.f32 %v723, 0.0
        %v851 = vmax.f32 %v726, 0.0
        %v852 = vmax.f32 %v728, 0.0
        %v853 = vmax.f32 %v731, 0.0
        %v854 = vmax.f32 %v733, 0.0
        %v855 = vmax.f32 %v736, 0.0
        %v856 = vmax.f32 %v738, 0.0
        %v857 = vmax.f32 %v741, 0.0
        %v858 = vmax.f32 %v743, 0.0
        %v859 = vmax.f32 %v746, 0.0
        %v860 = vmax.f32 %v748, 0.0
        %v861 = vmax.f32 %v751, 0.0
        %v862 = vmax.f32 %v753, 0.0
        %v863 = vmax.f32 %v756, 0.0
        %v864 = vmax.f32 %v758, 0.0
        %v865 = vmax.f32 %v761, 0.0
        %v866 = vmax.f32 %v763, 0.0
        %v867 = vmax.f32 %v766, 0.0
        %v868 = vmax.f32 %v768, 0.0
        %v869 = vmax.f32 %v771, 0.0
        %v870 = vmax.f32 %v773, 0.0
        %v871 = vmax.f32 %v776, 0.0
        %v872 = vmax.f32 %v778, 0.0
        %v873 = vmax.f32 %v781, 0.0
        %v874 = vmax.f32 %v783, 0.0
        %v875 = vmax.f32 %v786, 0.0
        %v876 = vmax.f32 %v788, 0.0
        %v877 = vmax.f32 %v791, 0.0
        %v878 = vmax.f32 %v793, 0.0
        %v879 = vmax.f32 %v796, 0.0
        %v880 = vmax.f32 %v798, 0.0
        %v881 = vmax.f32 %v801, 0.0
        %v882 = vmax.f32 %v803, 0.0
        %v883 = vmax.f32 %v806, 0.0
        %v884 = vmax.f32 %v808, 0.0
        %v885 = vmax.f32 %v811, 0.0
        %v886 = vmax.f32 %v813, 0.0
        %887 = vst.msk [vmem:[#allocation2] sm:$0xff] %vm244, %v815
        %888 = vst.msk [vmem:[#allocation2 + $0x8] sm:$0xff] %vm244, %v816
        %889 = vst.msk [vmem:[#allocation2 + $0x10] sm:$0xff] %vm244, %v817
        %890 = vst.msk [vmem:[#allocation2 + $0x18] sm:$0xff] %vm244, %v818
        %891 = vst.msk [vmem:[#allocation2 + $0x20] sm:$0xff] %vm244, %v819
        %892 = vst.msk [vmem:[#allocation2 + $0x28] sm:$0xff] %vm244, %v820
        %893 = vst.msk [vmem:[#allocation2 + $0x30] sm:$0xff] %vm244, %v821
        %894 = vst.msk [vmem:[#allocation2 + $0x38] sm:$0xff] %vm244, %v822
        %895 = vst.msk [vmem:[#allocation2 + $0x40] sm:$0xff] %vm244, %v823
        %896 = vst.msk [vmem:[#allocation2 + $0x48] sm:$0xff] %vm244, %v824
        %897 = vst.msk [vmem:[#allocation2 + $0x50] sm:$0xff] %vm244, %v825
        %898 = vst.msk [vmem:[#allocation2 + $0x58] sm:$0xff] %vm244, %v826
        %899 = vst.msk [vmem:[#allocation2 + $0x60] sm:$0xff] %vm244, %v827
        %900 = vst.msk [vmem:[#allocation2 + $0x68] sm:$0xff] %vm244, %v828
        %901 = vst.msk [vmem:[#allocation2 + $0x70] sm:$0xff] %vm244, %v829
        %902 = vst.msk [vmem:[#allocation2 + $0x78] sm:$0xff] %vm244, %v830
        %903 = vst.msk [vmem:[#allocation2 + $0x80] sm:$0xff] %vm244, %v831
        %904 = vst.msk [vmem:[#allocation2 + $0x88] sm:$0xff] %vm244, %v832
        %905 = vst.msk [vmem:[#allocation2 + $0x90] sm:$0xff] %vm244, %v833
        %906 = vst.msk [vmem:[#allocation2 + $0x98] sm:$0xff] %vm244, %v834
        %907 = vst.msk [vmem:[#allocation2 + $0xa0] sm:$0xff] %vm244, %v835
        %908 = vst.msk [vmem:[#allocation2 + $0xa8] sm:$0xff] %vm244, %v836
        %909 = vst.msk [vmem:[#allocation2 + $0xb0] sm:$0xff] %vm244, %v837
        %910 = vst.msk [vmem:[#allocation2 + $0xb8] sm:$0xff] %vm244, %v838
        %911 = vst.msk [vmem:[#allocation2 + $0xc0] sm:$0xff] %vm244, %v839
        %912 = vst.msk [vmem:[#allocation2 + $0xc8] sm:$0xff] %vm244, %v840
        %913 = vst.msk [vmem:[#allocation2 + $0xd0] sm:$0xff] %vm244, %v841
        %914 = vst.msk [vmem:[#allocation2 + $0xd8] sm:$0xff] %vm244, %v842
        %915 = vst.msk [vmem:[#allocation2 + $0xe0] sm:$0xff] %vm244, %v843
        %916 = vst.msk [vmem:[#allocation2 + $0xe8] sm:$0xff] %vm244, %v844
        %917 = vst.msk [vmem:[#allocation2 + $0xf0] sm:$0xff] %vm244, %v845
        %918 = vst.msk [vmem:[#allocation2 + $0xf8] sm:$0xff] %vm244, %v846
        %919 = vst.msk [vmem:[#allocation2 + $0x100] sm:$0xff] %vm244, %v847
        %920 = vst.msk [vmem:[#allocation2 + $0x108] sm:$0xff] %vm244, %v848
        %921 = vst.msk [vmem:[#allocation2 + $0x110] sm:$0xff] %vm244, %v849
        %922 = vst.msk [vmem:[#allocation2 + $0x118] sm:$0xff] %vm244, %v850
        %923 = vst.msk [vmem:[#allocation2 + $0x120] sm:$0xff] %vm244, %v851
        %924 = vst.msk [vmem:[#allocation2 + $0x128] sm:$0xff] %vm244, %v852
        %925 = vst.msk [vmem:[#allocation2 + $0x130] sm:$0xff] %vm244, %v853
        %926 = vst.msk [vmem:[#allocation2 + $0x138] sm:$0xff] %vm244, %v854
        %927 = vst.msk [vmem:[#allocation2 + $0x140] sm:$0xff] %vm244, %v855
        %928 = vst.msk [vmem:[#allocation2 + $0x148] sm:$0xff] %vm244, %v856
        %929 = vst.msk [vmem:[#allocation2 + $0x150] sm:$0xff] %vm244, %v857
        %930 = vst.msk [vmem:[#allocation2 + $0x158] sm:$0xff] %vm244, %v858
        %931 = vst.msk [vmem:[#allocation2 + $0x160] sm:$0xff] %vm244, %v859
        %932 = vst.msk [vmem:[#allocation2 + $0x168] sm:$0xff] %vm244, %v860
        %933 = vst.msk [vmem:[#allocation2 + $0x170] sm:$0xff] %vm244, %v861
        %934 = vst.msk [vmem:[#allocation2 + $0x178] sm:$0xff] %vm244, %v862
        %935 = vst.msk [vmem:[#allocation2 + $0x180] sm:$0xff] %vm244, %v863
        %936 = vst.msk [vmem:[#allocation2 + $0x188] sm:$0xff] %vm244, %v864
        %937 = vst.msk [vmem:[#allocation2 + $0x190] sm:$0xff] %vm244, %v865
        %938 = vst.msk [vmem:[#allocation2 + $0x198] sm:$0xff] %vm244, %v866
        %939 = vst.msk [vmem:[#allocation2 + $0x1a0] sm:$0xff] %vm244, %v867
        %940 = vst.msk [vmem:[#allocation2 + $0x1a8] sm:$0xff] %vm244, %v868
        %941 = vst.msk [vmem:[#allocation2 + $0x1b0] sm:$0xff] %vm244, %v869
        %942 = vst.msk [vmem:[#allocation2 + $0x1b8] sm:$0xff] %vm244, %v870
        %943 = vst.msk [vmem:[#allocation2 + $0x1c0] sm:$0xff] %vm244, %v871
        %944 = vst.msk [vmem:[#allocation2 + $0x1c8] sm:$0xff] %vm244, %v872
        %945 = vst.msk [vmem:[#allocation2 + $0x1d0] sm:$0xff] %vm244, %v873
        %946 = vst.msk [vmem:[#allocation2 + $0x1d8] sm:$0xff] %vm244, %v874
        %947 = vst.msk [vmem:[#allocation2 + $0x1e0] sm:$0xff] %vm244, %v875
        %948 = vst.msk [vmem:[#allocation2 + $0x1e8] sm:$0xff] %vm244, %v876
        %949 = vst.msk [vmem:[#allocation2 + $0x1f0] sm:$0xff] %vm244, %v877
        %950 = vst.msk [vmem:[#allocation2 + $0x1f8] sm:$0xff] %vm244, %v878
        %951 = vst.msk [vmem:[#allocation2 + $0x200] sm:$0xff] %vm244, %v879
        %952 = vst.msk [vmem:[#allocation2 + $0x208] sm:$0xff] %vm244, %v880
        %953 = vst.msk [vmem:[#allocation2 + $0x210] sm:$0xff] %vm244, %v881
        %954 = vst.msk [vmem:[#allocation2 + $0x218] sm:$0xff] %vm244, %v882
        %955 = vst.msk [vmem:[#allocation2 + $0x220] sm:$0xff] %vm244, %v883
        %956 = vst.msk [vmem:[#allocation2 + $0x228] sm:$0xff] %vm244, %v884
        %957 = vst.msk [vmem:[#allocation2 + $0x230] sm:$0xff] %vm244, %v885
        %958 = vst.msk [vmem:[#allocation2 + $0x238] sm:$0xff] %vm244, %v886
        %v959 = vld [vmem:[#allocation2] sm:$0xff]
        %v960 = vld [vmem:[#allocation2 + $0x8] sm:$0xff]
        %v961 = vld [vmem:[#allocation2 + $0x10] sm:$0xff]
        %v962 = vld [vmem:[#allocation2 + $0x18] sm:$0xff]
        %v963 = vld [vmem:[#allocation2 + $0x20] sm:$0xff]
        %v964 = vld [vmem:[#allocation2 + $0x28] sm:$0xff]
        %v965 = vld [vmem:[#allocation2 + $0x30] sm:$0xff]
        %v966 = vld [vmem:[#allocation2 + $0x38] sm:$0xff]
        %967 = vst.msk [vmem:[#allocation6] sm:$0xff] %vm244, %v959
        %968 = vst.msk [vmem:[#allocation6 + $0x8] sm:$0xff] %vm244, %v960
        %969 = vst.msk [vmem:[#allocation6 + $0x10] sm:$0xff] %vm244, %v961
        %970 = vst.msk [vmem:[#allocation6 + $0x18] sm:$0xff] %vm244, %v962
        %971 = vst.msk [vmem:[#allocation6 + $0x20] sm:$0xff] %vm244, %v963
        %972 = vst.msk [vmem:[#allocation6 + $0x28] sm:$0xff] %vm244, %v964
        %973 = vst.msk [vmem:[#allocation6 + $0x30] sm:$0xff] %vm244, %v965
        %974 = vst.msk [vmem:[#allocation6 + $0x38] sm:$0xff] %vm244, %v966
        %v975 = vld [vmem:[#allocation2 + $0x48] sm:$0xff]
        %v976 = vld [vmem:[#allocation2 + $0x50] sm:$0xff]
        %v977 = vld [vmem:[#allocation2 + $0x58] sm:$0xff]
        %v978 = vld [vmem:[#allocation2 + $0x60] sm:$0xff]
        %v979 = vld [vmem:[#allocation2 + $0x68] sm:$0xff]
        %v980 = vld [vmem:[#allocation2 + $0x70] sm:$0xff]
        %v981 = vld [vmem:[#allocation2 + $0x78] sm:$0xff]
        %v982 = vld [vmem:[#allocation2 + $0x80] sm:$0xff]
        %991 = vrot.lane.b32.xlu0 %v975, 8
        %v992 = vpop.permute.xlu0 %991
        %993 = vrot.lane.b32.xlu0 %v976, 8
        %v994 = vpop.permute.xlu0 %993
        %995 = vrot.lane.b32.xlu0 %v977, 8
        %v996 = vpop.permute.xlu0 %995
        %997 = vrot.lane.b32.xlu0 %v978, 8
        %v998 = vpop.permute.xlu0 %997
        %999 = vrot.lane.b32.xlu0 %v979, 8
        %v1000 = vpop.permute.xlu0 %999
        %1001 = vrot.lane.b32.xlu0 %v980, 8
        %v1002 = vpop.permute.xlu0 %1001
        %1003 = vrot.lane.b32.xlu0 %v981, 8
        %v1004 = vpop.permute.xlu0 %1003
        %1005 = vrot.lane.b32.xlu0 %v982, 8
        %v1006 = vpop.permute.xlu0 %1005
        %vm1015 = vcmask 130112
        %1016 = vst.msk [vmem:[#allocation6] sm:$0xff] %vm1015, %v992
        %1017 = vst.msk [vmem:[#allocation6 + $0x8] sm:$0xff] %vm1015, %v994
        %1018 = vst.msk [vmem:[#allocation6 + $0x10] sm:$0xff] %vm1015, %v996
        %1019 = vst.msk [vmem:[#allocation6 + $0x18] sm:$0xff] %vm1015, %v998
        %1020 = vst.msk [vmem:[#allocation6 + $0x20] sm:$0xff] %vm1015, %v1000
        %1021 = vst.msk [vmem:[#allocation6 + $0x28] sm:$0xff] %vm1015, %v1002
        %1022 = vst.msk [vmem:[#allocation6 + $0x30] sm:$0xff] %vm1015, %v1004
        %1023 = vst.msk [vmem:[#allocation6 + $0x38] sm:$0xff] %vm1015, %v1006
        %v1024 = vld [vmem:[#allocation2 + $0x1] sm:$0xff]
        %v1025 = vld [vmem:[#allocation2 + $0x9] sm:$0xff]
        %v1026 = vld [vmem:[#allocation2 + $0x11] sm:$0xff]
        %v1027 = vld [vmem:[#allocation2 + $0x19] sm:$0xff]
        %v1028 = vld [vmem:[#allocation2 + $0x21] sm:$0xff]
        %v1029 = vld [vmem:[#allocation2 + $0x29] sm:$0xff]
        %v1030 = vld [vmem:[#allocation2 + $0x31] sm:$0xff]
        %v1031 = vld [vmem:[#allocation2 + $0x39] sm:$0xff]
        %1040 = vrot.lane.b32.xlu0 %v1024, 16
        %v1041 = vpop.permute.xlu0 %1040
        %1042 = vrot.lane.b32.xlu0 %v1025, 16
        %v1043 = vpop.permute.xlu0 %1042
        %1044 = vrot.lane.b32.xlu0 %v1026, 16
        %v1045 = vpop.permute.xlu0 %1044
        %1046 = vrot.lane.b32.xlu0 %v1027, 16
        %v1047 = vpop.permute.xlu0 %1046
        %1048 = vrot.lane.b32.xlu0 %v1028, 16
        %v1049 = vpop.permute.xlu0 %1048
        %1050 = vrot.lane.b32.xlu0 %v1029, 16
        %v1051 = vpop.permute.xlu0 %1050
        %1052 = vrot.lane.b32.xlu0 %v1030, 16
        %v1053 = vpop.permute.xlu0 %1052
        %1054 = vrot.lane.b32.xlu0 %v1031, 16
        %v1055 = vpop.permute.xlu0 %1054
        %vm1064 = vcmask 195712
        %1065 = vst.msk [vmem:[#allocation6] sm:$0xff] %vm1064, %v1041
        %1066 = vst.msk [vmem:[#allocation6 + $0x8] sm:$0xff] %vm1064, %v1043
        %1067 = vst.msk [vmem:[#allocation6 + $0x10] sm:$0xff] %vm1064, %v1045
        %1068 = vst.msk [vmem:[#allocation6 + $0x18] sm:$0xff] %vm1064, %v1047
        %1069 = vst.msk [vmem:[#allocation6 + $0x20] sm:$0xff] %vm1064, %v1049
        %1070 = vst.msk [vmem:[#allocation6 + $0x28] sm:$0xff] %vm1064, %v1051
        %1071 = vst.msk [vmem:[#allocation6 + $0x30] sm:$0xff] %vm1064, %v1053
        %1072 = vst.msk [vmem:[#allocation6 + $0x38] sm:$0xff] %vm1064, %v1055
        %v1073 = vld [vmem:[#allocation2 + $0x90] sm:$0xff]
        %v1074 = vld [vmem:[#allocation2 + $0x98] sm:$0xff]
        %v1075 = vld [vmem:[#allocation2 + $0xa0] sm:$0xff]
        %v1076 = vld [vmem:[#allocation2 + $0xa8] sm:$0xff]
        %v1077 = vld [vmem:[#allocation2 + $0xb0] sm:$0xff]
        %v1078 = vld [vmem:[#allocation2 + $0xb8] sm:$0xff]
        %v1079 = vld [vmem:[#allocation2 + $0xc0] sm:$0xff]
        %v1080 = vld [vmem:[#allocation2 + $0xc8] sm:$0xff]
        %1089 = vrot.lane.b32.xlu0 %v1073, 24
        %v1090 = vpop.permute.xlu0 %1089
        %1091 = vrot.lane.b32.xlu0 %v1074, 24
        %v1092 = vpop.permute.xlu0 %1091
        %1093 = vrot.lane.b32.xlu0 %v1075, 24
        %v1094 = vpop.permute.xlu0 %1093
        %1095 = vrot.lane.b32.xlu0 %v1076, 24
        %v1096 = vpop.permute.xlu0 %1095
        %1097 = vrot.lane.b32.xlu0 %v1077, 24
        %v1098 = vpop.permute.xlu0 %1097
        %1099 = vrot.lane.b32.xlu0 %v1078, 24
        %v1100 = vpop.permute.xlu0 %1099
        %1101 = vrot.lane.b32.xlu0 %v1079, 24
        %v1102 = vpop.permute.xlu0 %1101
        %1103 = vrot.lane.b32.xlu0 %v1080, 24
        %v1104 = vpop.permute.xlu0 %1103
        %vm1113 = vcmask 261312
        %1114 = vst.msk [vmem:[#allocation6] sm:$0xff] %vm1113, %v1090
        %1115 = vst.msk [vmem:[#allocation6 + $0x8] sm:$0xff] %vm1113, %v1092
        %1116 = vst.msk [vmem:[#allocation6 + $0x10] sm:$0xff] %vm1113, %v1094
        %1117 = vst.msk [vmem:[#allocation6 + $0x18] sm:$0xff] %vm1113, %v1096
        %1118 = vst.msk [vmem:[#allocation6 + $0x20] sm:$0xff] %vm1113, %v1098
        %1119 = vst.msk [vmem:[#allocation6 + $0x28] sm:$0xff] %vm1113, %v1100
        %1120 = vst.msk [vmem:[#allocation6 + $0x30] sm:$0xff] %vm1113, %v1102
        %1121 = vst.msk [vmem:[#allocation6 + $0x38] sm:$0xff] %vm1113, %v1104
        %v1122 = vld [vmem:[#allocation2 + $0xd8] sm:$0xff]
        %v1123 = vld [vmem:[#allocation2 + $0xe0] sm:$0xff]
        %v1124 = vld [vmem:[#allocation2 + $0xe8] sm:$0xff]
        %v1125 = vld [vmem:[#allocation2 + $0xf0] sm:$0xff]
        %v1126 = vld [vmem:[#allocation2 + $0xf8] sm:$0xff]
        %v1127 = vld [vmem:[#allocation2 + $0x100] sm:$0xff]
        %v1128 = vld [vmem:[#allocation2 + $0x108] sm:$0xff]
        %v1129 = vld [vmem:[#allocation2 + $0x110] sm:$0xff]
        %1138 = vrot.lane.b32.xlu0 %v1122, 32
        %v1139 = vpop.permute.xlu0 %1138
        %1140 = vrot.lane.b32.xlu0 %v1123, 32
        %v1141 = vpop.permute.xlu0 %1140
        %1142 = vrot.lane.b32.xlu0 %v1124, 32
        %v1143 = vpop.permute.xlu0 %1142
        %1144 = vrot.lane.b32.xlu0 %v1125, 32
        %v1145 = vpop.permute.xlu0 %1144
        %1146 = vrot.lane.b32.xlu0 %v1126, 32
        %v1147 = vpop.permute.xlu0 %1146
        %1148 = vrot.lane.b32.xlu0 %v1127, 32
        %v1149 = vpop.permute.xlu0 %1148
        %1150 = vrot.lane.b32.xlu0 %v1128, 32
        %v1151 = vpop.permute.xlu0 %1150
        %1152 = vrot.lane.b32.xlu0 %v1129, 32
        %v1153 = vpop.permute.xlu0 %1152
        %vm1162 = vcmask 326912
        %1163 = vst.msk [vmem:[#allocation6] sm:$0xff] %vm1162, %v1139
        %1164 = vst.msk [vmem:[#allocation6 + $0x8] sm:$0xff] %vm1162, %v1141
        %1165 = vst.msk [vmem:[#allocation6 + $0x10] sm:$0xff] %vm1162, %v1143
        %1166 = vst.msk [vmem:[#allocation6 + $0x18] sm:$0xff] %vm1162, %v1145
        %1167 = vst.msk [vmem:[#allocation6 + $0x20] sm:$0xff] %vm1162, %v1147
        %1168 = vst.msk [vmem:[#allocation6 + $0x28] sm:$0xff] %vm1162, %v1149
        %1169 = vst.msk [vmem:[#allocation6 + $0x30] sm:$0xff] %vm1162, %v1151
        %1170 = vst.msk [vmem:[#allocation6 + $0x38] sm:$0xff] %vm1162, %v1153
        %v1171 = vld [vmem:[#allocation2 + $0x91] sm:$0xff]
        %v1172 = vld [vmem:[#allocation2 + $0x99] sm:$0xff]
        %v1173 = vld [vmem:[#allocation2 + $0xa1] sm:$0xff]
        %v1174 = vld [vmem:[#allocation2 + $0xa9] sm:$0xff]
        %v1175 = vld [vmem:[#allocation2 + $0xb1] sm:$0xff]
        %v1176 = vld [vmem:[#allocation2 + $0xb9] sm:$0xff]
        %v1177 = vld [vmem:[#allocation2 + $0xc1] sm:$0xff]
        %v1178 = vld [vmem:[#allocation2 + $0xc9] sm:$0xff]
        %1187 = vrot.lane.b32.xlu0 %v1171, 40
        %v1188 = vpop.permute.xlu0 %1187
        %1189 = vrot.lane.b32.xlu0 %v1172, 40
        %v1190 = vpop.permute.xlu0 %1189
        %1191 = vrot.lane.b32.xlu0 %v1173, 40
        %v1192 = vpop.permute.xlu0 %1191
        %1193 = vrot.lane.b32.xlu0 %v1174, 40
        %v1194 = vpop.permute.xlu0 %1193
        %1195 = vrot.lane.b32.xlu0 %v1175, 40
        %v1196 = vpop.permute.xlu0 %1195
        %1197 = vrot.lane.b32.xlu0 %v1176, 40
        %v1198 = vpop.permute.xlu0 %1197
        %1199 = vrot.lane.b32.xlu0 %v1177, 40
        %v1200 = vpop.permute.xlu0 %1199
        %1201 = vrot.lane.b32.xlu0 %v1178, 40
        %v1202 = vpop.permute.xlu0 %1201
        %vm1211 = vcmask 392512
        %1212 = vst.msk [vmem:[#allocation6] sm:$0xff] %vm1211, %v1188
        %1213 = vst.msk [vmem:[#allocation6 + $0x8] sm:$0xff] %vm1211, %v1190
        %1214 = vst.msk [vmem:[#allocation6 + $0x10] sm:$0xff] %vm1211, %v1192
        %1215 = vst.msk [vmem:[#allocation6 + $0x18] sm:$0xff] %vm1211, %v1194
        %1216 = vst.msk [vmem:[#allocation6 + $0x20] sm:$0xff] %vm1211, %v1196
        %1217 = vst.msk [vmem:[#allocation6 + $0x28] sm:$0xff] %vm1211, %v1198
        %1218 = vst.msk [vmem:[#allocation6 + $0x30] sm:$0xff] %vm1211, %v1200
        %1219 = vst.msk [vmem:[#allocation6 + $0x38] sm:$0xff] %vm1211, %v1202
        %v1220 = vld [vmem:[#allocation2 + $0x8] sm:$0xff]
        %v1221 = vld [vmem:[#allocation2 + $0x10] sm:$0xff]
        %v1222 = vld [vmem:[#allocation2 + $0x18] sm:$0xff]
        %v1223 = vld [vmem:[#allocation2 + $0x20] sm:$0xff]
        %v1224 = vld [vmem:[#allocation2 + $0x28] sm:$0xff]
        %v1225 = vld [vmem:[#allocation2 + $0x30] sm:$0xff]
        %v1226 = vld [vmem:[#allocation2 + $0x38] sm:$0xff]
        %v1227 = vld [vmem:[#allocation2 + $0x40] sm:$0xff]
        %1236 = vrot.lane.b32.xlu0 %v1220, 48
        %v1237 = vpop.permute.xlu0 %1236
        %1238 = vrot.lane.b32.xlu0 %v1221, 48
        %v1239 = vpop.permute.xlu0 %1238
        %1240 = vrot.lane.b32.xlu0 %v1222, 48
        %v1241 = vpop.permute.xlu0 %1240
        %1242 = vrot.lane.b32.xlu0 %v1223, 48
        %v1243 = vpop.permute.xlu0 %1242
        %1244 = vrot.lane.b32.xlu0 %v1224, 48
        %v1245 = vpop.permute.xlu0 %1244
        %1246 = vrot.lane.b32.xlu0 %v1225, 48
        %v1247 = vpop.permute.xlu0 %1246
        %1248 = vrot.lane.b32.xlu0 %v1226, 48
        %v1249 = vpop.permute.xlu0 %1248
        %1250 = vrot.lane.b32.xlu0 %v1227, 48
        %v1251 = vpop.permute.xlu0 %1250
        %vm1260 = vcmask 458112
        %1261 = vst.msk [vmem:[#allocation6] sm:$0xff] %vm1260, %v1237
        %1262 = vst.msk [vmem:[#allocation6 + $0x8] sm:$0xff] %vm1260, %v1239
        %1263 = vst.msk [vmem:[#allocation6 + $0x10] sm:$0xff] %vm1260, %v1241
        %1264 = vst.msk [vmem:[#allocation6 + $0x18] sm:$0xff] %vm1260, %v1243
        %1265 = vst.msk [vmem:[#allocation6 + $0x20] sm:$0xff] %vm1260, %v1245
        %1266 = vst.msk [vmem:[#allocation6 + $0x28] sm:$0xff] %vm1260, %v1247
        %1267 = vst.msk [vmem:[#allocation6 + $0x30] sm:$0xff] %vm1260, %v1249
        %1268 = vst.msk [vmem:[#allocation6 + $0x38] sm:$0xff] %vm1260, %v1251
        %v1269 = vld [vmem:[#allocation2 + $0x50] sm:$0xff]
        %v1270 = vld [vmem:[#allocation2 + $0x58] sm:$0xff]
        %v1271 = vld [vmem:[#allocation2 + $0x60] sm:$0xff]
        %v1272 = vld [vmem:[#allocation2 + $0x68] sm:$0xff]
        %v1273 = vld [vmem:[#allocation2 + $0x70] sm:$0xff]
        %v1274 = vld [vmem:[#allocation2 + $0x78] sm:$0xff]
        %v1275 = vld [vmem:[#allocation2 + $0x80] sm:$0xff]
        %v1276 = vld [vmem:[#allocation2 + $0x88] sm:$0xff]
        %1285 = vrot.lane.b32.xlu0 %v1269, 56
        %v1286 = vpop.permute.xlu0 %1285
        %1287 = vrot.lane.b32.xlu0 %v1270, 56
        %v1288 = vpop.permute.xlu0 %1287
        %1289 = vrot.lane.b32.xlu0 %v1271, 56
        %v1290 = vpop.permute.xlu0 %1289
        %1291 = vrot.lane.b32.xlu0 %v1272, 56
        %v1292 = vpop.permute.xlu0 %1291
        %1293 = vrot.lane.b32.xlu0 %v1273, 56
        %v1294 = vpop.permute.xlu0 %1293
        %1295 = vrot.lane.b32.xlu0 %v1274, 56
        %v1296 = vpop.permute.xlu0 %1295
        %1297 = vrot.lane.b32.xlu0 %v1275, 56
        %v1298 = vpop.permute.xlu0 %1297
        %1299 = vrot.lane.b32.xlu0 %v1276, 56
        %v1300 = vpop.permute.xlu0 %1299
        %vm1309 = vcmask 523712
        %1310 = vst.msk [vmem:[#allocation6] sm:$0xff] %vm1309, %v1286
        %1311 = vst.msk [vmem:[#allocation6 + $0x8] sm:$0xff] %vm1309, %v1288
        %1312 = vst.msk [vmem:[#allocation6 + $0x10] sm:$0xff] %vm1309, %v1290
        %1313 = vst.msk [vmem:[#allocation6 + $0x18] sm:$0xff] %vm1309, %v1292
        %1314 = vst.msk [vmem:[#allocation6 + $0x20] sm:$0xff] %vm1309, %v1294
        %1315 = vst.msk [vmem:[#allocation6 + $0x28] sm:$0xff] %vm1309, %v1296
        %1316 = vst.msk [vmem:[#allocation6 + $0x30] sm:$0xff] %vm1309, %v1298
        %1317 = vst.msk [vmem:[#allocation6 + $0x38] sm:$0xff] %vm1309, %v1300
        %v1318 = vld [vmem:[#allocation2 + $0x9] sm:$0xff]
        %v1319 = vld [vmem:[#allocation2 + $0x11] sm:$0xff]
        %v1320 = vld [vmem:[#allocation2 + $0x19] sm:$0xff]
        %v1321 = vld [vmem:[#allocation2 + $0x21] sm:$0xff]
        %v1322 = vld [vmem:[#allocation2 + $0x29] sm:$0xff]
        %v1323 = vld [vmem:[#allocation2 + $0x31] sm:$0xff]
        %v1324 = vld [vmem:[#allocation2 + $0x39] sm:$0xff]
        %v1325 = vld [vmem:[#allocation2 + $0x41] sm:$0xff]
        %1334 = vrot.lane.b32.xlu0 %v1318, 64
        %v1335 = vpop.permute.xlu0 %1334
        %1336 = vrot.lane.b32.xlu0 %v1319, 64
        %v1337 = vpop.permute.xlu0 %1336
        %1338 = vrot.lane.b32.xlu0 %v1320, 64
        %v1339 = vpop.permute.xlu0 %1338
        %1340 = vrot.lane.b32.xlu0 %v1321, 64
        %v1341 = vpop.permute.xlu0 %1340
        %1342 = vrot.lane.b32.xlu0 %v1322, 64
        %v1343 = vpop.permute.xlu0 %1342
        %1344 = vrot.lane.b32.xlu0 %v1323, 64
        %v1345 = vpop.permute.xlu0 %1344
        %1346 = vrot.lane.b32.xlu0 %v1324, 64
        %v1347 = vpop.permute.xlu0 %1346
        %1348 = vrot.lane.b32.xlu0 %v1325, 64
        %v1349 = vpop.permute.xlu0 %1348
        %vm1358 = vcmask 589312
        %1359 = vst.msk [vmem:[#allocation6] sm:$0xff] %vm1358, %v1335
        %1360 = vst.msk [vmem:[#allocation6 + $0x8] sm:$0xff] %vm1358, %v1337
        %1361 = vst.msk [vmem:[#allocation6 + $0x10] sm:$0xff] %vm1358, %v1339
        %1362 = vst.msk [vmem:[#allocation6 + $0x18] sm:$0xff] %vm1358, %v1341
        %1363 = vst.msk [vmem:[#allocation6 + $0x20] sm:$0xff] %vm1358, %v1343
        %1364 = vst.msk [vmem:[#allocation6 + $0x28] sm:$0xff] %vm1358, %v1345
        %1365 = vst.msk [vmem:[#allocation6 + $0x30] sm:$0xff] %vm1358, %v1347
        %1366 = vst.msk [vmem:[#allocation6 + $0x38] sm:$0xff] %vm1358, %v1349
        %v1367 = vld [vmem:[#allocation6] sm:$0xff]
        %v1368 = vld [vmem:[#allocation6 + $0x8] sm:$0xff]
        %v1369 = vld [vmem:[#allocation6 + $0x10] sm:$0xff]
        %v1370 = vld [vmem:[#allocation6 + $0x18] sm:$0xff]
        %v1371 = vld [vmem:[#allocation6 + $0x20] sm:$0xff]
        %v1372 = vld [vmem:[#allocation6 + $0x28] sm:$0xff]
        %v1373 = vld [vmem:[#allocation6 + $0x30] sm:$0xff]
        %v1374 = vld [vmem:[#allocation6 + $0x38] sm:$0xff]
        %1375 = vrot.lane.b32.xlu0 %v321, 120
        %v1376 = vpop.permute.xlu0 %1375
        %vm1378 = vcmask 588800
        %v1380 = vsel %vm1378, %v1367, 0
        %v1383 = vsel %vm1378, %v1368, 0
        %v1386 = vsel %vm1378, %v1369, 0
        %v1389 = vsel %vm1378, %v1370, 0
        %v1392 = vsel %vm1378, %v1371, 0
        %v1395 = vsel %vm1378, %v1372, 0
        %v1398 = vsel %vm1378, %v1373, 0
        %v1401 = vsel %vm1378, %v1374, 0
        %1403 = vmatpush.msra.mxu0 0.0
        %1404 = vmatpush.msra.mxu0 0.0
        %1405 = vmatpush.msra.mxu0 0.0
        %1406 = vmatpush.msra.mxu0 0.0
        %1407 = vmatpush.msra.mxu0 0.0
        %1408 = vmatpush.msra.mxu0 0.0
        %1409 = vmatpush.msra.mxu0 0.0
        %1410 = vmatpush.msra.mxu0 %v241
        %1411 = vmatpush.msra.mxu0 %v240
        %1412 = vmatpush.msra.mxu0 %v239
        %1413 = vmatpush.msra.mxu0 %v238
        %1414 = vmatpush.msra.mxu0 %v237
        %1415 = vmatpush.msra.mxu0 %v236
        %1416 = vmatpush.msra.mxu0 %v235
        %1417 = vmatpush.msra.mxu0 %v234
        %1418 = vmatpush.msra.mxu0 %v233
        %1419 = vmatmul.f32.gmra.mxu0 %v1380
        %v1420 = vpop.f32.mrf.mxu0
        %v1421 = vadd.f32 %v1376, %v1420
        %1422 = vmatmul.f32.gmra.mxu0 %v1383
        %v1423 = vpop.f32.mrf.mxu0
        %v1424 = vadd.f32 %v1376, %v1423
        %1425 = vmatmul.f32.gmra.mxu0 %v1386
        %v1426 = vpop.f32.mrf.mxu0
        %v1427 = vadd.f32 %v1376, %v1426
        %1428 = vmatmul.f32.gmra.mxu0 %v1389
        %v1429 = vpop.f32.mrf.mxu0
        %v1430 = vadd.f32 %v1376, %v1429
        %1431 = vmatmul.f32.gmra.mxu0 %v1392
        %v1432 = vpop.f32.mrf.mxu0
        %v1433 = vadd.f32 %v1376, %v1432
        %1434 = vmatmul.f32.gmra.mxu0 %v1395
        %v1435 = vpop.f32.mrf.mxu0
        %v1436 = vadd.f32 %v1376, %v1435
        %1437 = vmatmul.f32.gmra.mxu0 %v1398
        %v1438 = vpop.f32.mrf.mxu0
        %v1439 = vadd.f32 %v1376, %v1438
        %1440 = vmatmul.f32.gmra.mxu0 %v1401
        %v1441 = vpop.f32.mrf.mxu0
        %v1442 = vadd.f32 %v1376, %v1441
        %1443 = vdwg.mxu0
        %v1444 = vmax.f32 %v1421, 0.0
        %v1445 = vmax.f32 %v1424, 0.0
        %v1446 = vmax.f32 %v1427, 0.0
        %v1447 = vmax.f32 %v1430, 0.0
        %v1448 = vmax.f32 %v1433, 0.0
        %v1449 = vmax.f32 %v1436, 0.0
        %v1450 = vmax.f32 %v1439, 0.0
        %v1451 = vmax.f32 %v1442, 0.0
        %1452 = vst.msk [vmem:[#allocation3] sm:$0xff] %vm244, %v1444
        %1453 = vst.msk [vmem:[#allocation3 + $0x8] sm:$0xff] %vm244, %v1445
        %1454 = vst.msk [vmem:[#allocation3 + $0x10] sm:$0xff] %vm244, %v1446
        %1455 = vst.msk [vmem:[#allocation3 + $0x18] sm:$0xff] %vm244, %v1447
        %1456 = vst.msk [vmem:[#allocation3 + $0x20] sm:$0xff] %vm244, %v1448
        %1457 = vst.msk [vmem:[#allocation3 + $0x28] sm:$0xff] %vm244, %v1449
        %1458 = vst.msk [vmem:[#allocation3 + $0x30] sm:$0xff] %vm244, %v1450
        %1459 = vst.msk [vmem:[#allocation3 + $0x38] sm:$0xff] %vm244, %v1451
        %v1460 = vld [vmem:[#allocation2 + $0x120] sm:$0xff]
        %v1461 = vld [vmem:[#allocation2 + $0x128] sm:$0xff]
        %v1462 = vld [vmem:[#allocation2 + $0x130] sm:$0xff]
        %v1463 = vld [vmem:[#allocation2 + $0x138] sm:$0xff]
        %v1464 = vld [vmem:[#allocation2 + $0x140] sm:$0xff]
        %v1465 = vld [vmem:[#allocation2 + $0x148] sm:$0xff]
        %v1466 = vld [vmem:[#allocation2 + $0x150] sm:$0xff]
        %v1467 = vld [vmem:[#allocation2 + $0x158] sm:$0xff]
        %1468 = vst.msk [vmem:[#allocation6] sm:$0xff] %vm244, %v1460
        %1469 = vst.msk [vmem:[#allocation6 + $0x8] sm:$0xff] %vm244, %v1461
        %1470 = vst.msk [vmem:[#allocation6 + $0x10] sm:$0xff] %vm244, %v1462
        %1471 = vst.msk [vmem:[#allocation6 + $0x18] sm:$0xff] %vm244, %v1463
        %1472 = vst.msk [vmem:[#allocation6 + $0x20] sm:$0xff] %vm244, %v1464
        %1473 = vst.msk [vmem:[#allocation6 + $0x28] sm:$0xff] %vm244, %v1465
        %1474 = vst.msk [vmem:[#allocation6 + $0x30] sm:$0xff] %vm244, %v1466
        %1475 = vst.msk [vmem:[#allocation6 + $0x38] sm:$0xff] %vm244, %v1467
        %v1476 = vld [vmem:[#allocation2 + $0x168] sm:$0xff]
        %v1477 = vld [vmem:[#allocation2 + $0x170] sm:$0xff]
        %v1478 = vld [vmem:[#allocation2 + $0x178] sm:$0xff]
        %v1479 = vld [vmem:[#allocation2 + $0x180] sm:$0xff]
        %v1480 = vld [vmem:[#allocation2 + $0x188] sm:$0xff]
        %v1481 = vld [vmem:[#allocation2 + $0x190] sm:$0xff]
        %v1482 = vld [vmem:[#allocation2 + $0x198] sm:$0xff]
        %v1483 = vld [vmem:[#allocation2 + $0x1a0] sm:$0xff]
        %1492 = vrot.lane.b32.xlu0 %v1476, 8
        %v1493 = vpop.permute.xlu0 %1492
        %1494 = vrot.lane.b32.xlu0 %v1477, 8
        %v1495 = vpop.permute.xlu0 %1494
        %1496 = vrot.lane.b32.xlu0 %v1478, 8
        %v1497 = vpop.permute.xlu0 %1496
        %1498 = vrot.lane.b32.xlu0 %v1479, 8
        %v1499 = vpop.permute.xlu0 %1498
        %1500 = vrot.lane.b32.xlu0 %v1480, 8
        %v1501 = vpop.permute.xlu0 %1500
        %1502 = vrot.lane.b32.xlu0 %v1481, 8
        %v1503 = vpop.permute.xlu0 %1502
        %1504 = vrot.lane.b32.xlu0 %v1482, 8
        %v1505 = vpop.permute.xlu0 %1504
        %1506 = vrot.lane.b32.xlu0 %v1483, 8
        %v1507 = vpop.permute.xlu0 %1506
        %1516 = vst.msk [vmem:[#allocation6] sm:$0xff] %vm1015, %v1493
        %1517 = vst.msk [vmem:[#allocation6 + $0x8] sm:$0xff] %vm1015, %v1495
        %1518 = vst.msk [vmem:[#allocation6 + $0x10] sm:$0xff] %vm1015, %v1497
        %1519 = vst.msk [vmem:[#allocation6 + $0x18] sm:$0xff] %vm1015, %v1499
        %1520 = vst.msk [vmem:[#allocation6 + $0x20] sm:$0xff] %vm1015, %v1501
        %1521 = vst.msk [vmem:[#allocation6 + $0x28] sm:$0xff] %vm1015, %v1503
        %1522 = vst.msk [vmem:[#allocation6 + $0x30] sm:$0xff] %vm1015, %v1505
        %1523 = vst.msk [vmem:[#allocation6 + $0x38] sm:$0xff] %vm1015, %v1507
        %v1524 = vld [vmem:[#allocation2 + $0x121] sm:$0xff]
        %v1525 = vld [vmem:[#allocation2 + $0x129] sm:$0xff]
        %v1526 = vld [vmem:[#allocation2 + $0x131] sm:$0xff]
        %v1527 = vld [vmem:[#allocation2 + $0x139] sm:$0xff]
        %v1528 = vld [vmem:[#allocation2 + $0x141] sm:$0xff]
        %v1529 = vld [vmem:[#allocation2 + $0x149] sm:$0xff]
        %v1530 = vld [vmem:[#allocation2 + $0x151] sm:$0xff]
        %v1531 = vld [vmem:[#allocation2 + $0x159] sm:$0xff]
        %1540 = vrot.lane.b32.xlu0 %v1524, 16
        %v1541 = vpop.permute.xlu0 %1540
        %1542 = vrot.lane.b32.xlu0 %v1525, 16
        %v1543 = vpop.permute.xlu0 %1542
        %1544 = vrot.lane.b32.xlu0 %v1526, 16
        %v1545 = vpop.permute.xlu0 %1544
        %1546 = vrot.lane.b32.xlu0 %v1527, 16
        %v1547 = vpop.permute.xlu0 %1546
        %1548 = vrot.lane.b32.xlu0 %v1528, 16
        %v1549 = vpop.permute.xlu0 %1548
        %1550 = vrot.lane.b32.xlu0 %v1529, 16
        %v1551 = vpop.permute.xlu0 %1550
        %1552 = vrot.lane.b32.xlu0 %v1530, 16
        %v1553 = vpop.permute.xlu0 %1552
        %1554 = vrot.lane.b32.xlu0 %v1531, 16
        %v1555 = vpop.permute.xlu0 %1554
        %1564 = vst.msk [vmem:[#allocation6] sm:$0xff] %vm1064, %v1541
        %1565 = vst.msk [vmem:[#allocation6 + $0x8] sm:$0xff] %vm1064, %v1543
        %1566 = vst.msk [vmem:[#allocation6 + $0x10] sm:$0xff] %vm1064, %v1545
        %1567 = vst.msk [vmem:[#allocation6 + $0x18] sm:$0xff] %vm1064, %v1547
        %1568 = vst.msk [vmem:[#allocation6 + $0x20] sm:$0xff] %vm1064, %v1549
        %1569 = vst.msk [vmem:[#allocation6 + $0x28] sm:$0xff] %vm1064, %v1551
        %1570 = vst.msk [vmem:[#allocation6 + $0x30] sm:$0xff] %vm1064, %v1553
        %1571 = vst.msk [vmem:[#allocation6 + $0x38] sm:$0xff] %vm1064, %v1555
        %v1572 = vld [vmem:[#allocation2 + $0x1b0] sm:$0xff]
        %v1573 = vld [vmem:[#allocation2 + $0x1b8] sm:$0xff]
        %v1574 = vld [vmem:[#allocation2 + $0x1c0] sm:$0xff]
        %v1575 = vld [vmem:[#allocation2 + $0x1c8] sm:$0xff]
        %v1576 = vld [vmem:[#allocation2 + $0x1d0] sm:$0xff]
        %v1577 = vld [vmem:[#allocation2 + $0x1d8] sm:$0xff]
        %v1578 = vld [vmem:[#allocation2 + $0x1e0] sm:$0xff]
        %v1579 = vld [vmem:[#allocation2 + $0x1e8] sm:$0xff]
        %1588 = vrot.lane.b32.xlu0 %v1572, 24
        %v1589 = vpop.permute.xlu0 %1588
        %1590 = vrot.lane.b32.xlu0 %v1573, 24
        %v1591 = vpop.permute.xlu0 %1590
        %1592 = vrot.lane.b32.xlu0 %v1574, 24
        %v1593 = vpop.permute.xlu0 %1592
        %1594 = vrot.lane.b32.xlu0 %v1575, 24
        %v1595 = vpop.permute.xlu0 %1594
        %1596 = vrot.lane.b32.xlu0 %v1576, 24
        %v1597 = vpop.permute.xlu0 %1596
        %1598 = vrot.lane.b32.xlu0 %v1577, 24
        %v1599 = vpop.permute.xlu0 %1598
        %1600 = vrot.lane.b32.xlu0 %v1578, 24
        %v1601 = vpop.permute.xlu0 %1600
        %1602 = vrot.lane.b32.xlu0 %v1579, 24
        %v1603 = vpop.permute.xlu0 %1602
        %1612 = vst.msk [vmem:[#allocation6] sm:$0xff] %vm1113, %v1589
        %1613 = vst.msk [vmem:[#allocation6 + $0x8] sm:$0xff] %vm1113, %v1591
        %1614 = vst.msk [vmem:[#allocation6 + $0x10] sm:$0xff] %vm1113, %v1593
        %1615 = vst.msk [vmem:[#allocation6 + $0x18] sm:$0xff] %vm1113, %v1595
        %1616 = vst.msk [vmem:[#allocation6 + $0x20] sm:$0xff] %vm1113, %v1597
        %1617 = vst.msk [vmem:[#allocation6 + $0x28] sm:$0xff] %vm1113, %v1599
        %1618 = vst.msk [vmem:[#allocation6 + $0x30] sm:$0xff] %vm1113, %v1601
        %1619 = vst.msk [vmem:[#allocation6 + $0x38] sm:$0xff] %vm1113, %v1603
        %v1620 = vld [vmem:[#allocation2 + $0x1f8] sm:$0xff]
        %v1621 = vld [vmem:[#allocation2 + $0x200] sm:$0xff]
        %v1622 = vld [vmem:[#allocation2 + $0x208] sm:$0xff]
        %v1623 = vld [vmem:[#allocation2 + $0x210] sm:$0xff]
        %v1624 = vld [vmem:[#allocation2 + $0x218] sm:$0xff]
        %v1625 = vld [vmem:[#allocation2 + $0x220] sm:$0xff]
        %v1626 = vld [vmem:[#allocation2 + $0x228] sm:$0xff]
        %v1627 = vld [vmem:[#allocation2 + $0x230] sm:$0xff]
        %1636 = vrot.lane.b32.xlu0 %v1620, 32
        %v1637 = vpop.permute.xlu0 %1636
        %1638 = vrot.lane.b32.xlu0 %v1621, 32
        %v1639 = vpop.permute.xlu0 %1638
        %1640 = vrot.lane.b32.xlu0 %v1622, 32
        %v1641 = vpop.permute.xlu0 %1640
        %1642 = vrot.lane.b32.xlu0 %v1623, 32
        %v1643 = vpop.permute.xlu0 %1642
        %1644 = vrot.lane.b32.xlu0 %v1624, 32
        %v1645 = vpop.permute.xlu0 %1644
        %1646 = vrot.lane.b32.xlu0 %v1625, 32
        %v1647 = vpop.permute.xlu0 %1646
        %1648 = vrot.lane.b32.xlu0 %v1626, 32
        %v1649 = vpop.permute.xlu0 %1648
        %1650 = vrot.lane.b32.xlu0 %v1627, 32
        %v1651 = vpop.permute.xlu0 %1650
        %1660 = vst.msk [vmem:[#allocation6] sm:$0xff] %vm1162, %v1637
        %1661 = vst.msk [vmem:[#allocation6 + $0x8] sm:$0xff] %vm1162, %v1639
        %1662 = vst.msk [vmem:[#allocation6 + $0x10] sm:$0xff] %vm1162, %v1641
        %1663 = vst.msk [vmem:[#allocation6 + $0x18] sm:$0xff] %vm1162, %v1643
        %1664 = vst.msk [vmem:[#allocation6 + $0x20] sm:$0xff] %vm1162, %v1645
        %1665 = vst.msk [vmem:[#allocation6 + $0x28] sm:$0xff] %vm1162, %v1647
        %1666 = vst.msk [vmem:[#allocation6 + $0x30] sm:$0xff] %vm1162, %v1649
        %1667 = vst.msk [vmem:[#allocation6 + $0x38] sm:$0xff] %vm1162, %v1651
        %v1668 = vld [vmem:[#allocation2 + $0x1b1] sm:$0xff]
        %v1669 = vld [vmem:[#allocation2 + $0x1b9] sm:$0xff]
        %v1670 = vld [vmem:[#allocation2 + $0x1c1] sm:$0xff]
        %v1671 = vld [vmem:[#allocation2 + $0x1c9] sm:$0xff]
        %v1672 = vld [vmem:[#allocation2 + $0x1d1] sm:$0xff]
        %v1673 = vld [vmem:[#allocation2 + $0x1d9] sm:$0xff]
        %v1674 = vld [vmem:[#allocation2 + $0x1e1] sm:$0xff]
        %v1675 = vld [vmem:[#allocation2 + $0x1e9] sm:$0xff]
        %1684 = vrot.lane.b32.xlu0 %v1668, 40
        %v1685 = vpop.permute.xlu0 %1684
        %1686 = vrot.lane.b32.xlu0 %v1669, 40
        %v1687 = vpop.permute.xlu0 %1686
        %1688 = vrot.lane.b32.xlu0 %v1670, 40
        %v1689 = vpop.permute.xlu0 %1688
        %1690 = vrot.lane.b32.xlu0 %v1671, 40
        %v1691 = vpop.permute.xlu0 %1690
        %1692 = vrot.lane.b32.xlu0 %v1672, 40
        %v1693 = vpop.permute.xlu0 %1692
        %1694 = vrot.lane.b32.xlu0 %v1673, 40
        %v1695 = vpop.permute.xlu0 %1694
        %1696 = vrot.lane.b32.xlu0 %v1674, 40
        %v1697 = vpop.permute.xlu0 %1696
        %1698 = vrot.lane.b32.xlu0 %v1675, 40
        %v1699 = vpop.permute.xlu0 %1698
        %1708 = vst.msk [vmem:[#allocation6] sm:$0xff] %vm1211, %v1685
        %1709 = vst.msk [vmem:[#allocation6 + $0x8] sm:$0xff] %vm1211, %v1687
        %1710 = vst.msk [vmem:[#allocation6 + $0x10] sm:$0xff] %vm1211, %v1689
        %1711 = vst.msk [vmem:[#allocation6 + $0x18] sm:$0xff] %vm1211, %v1691
        %1712 = vst.msk [vmem:[#allocation6 + $0x20] sm:$0xff] %vm1211, %v1693
        %1713 = vst.msk [vmem:[#allocation6 + $0x28] sm:$0xff] %vm1211, %v1695
        %1714 = vst.msk [vmem:[#allocation6 + $0x30] sm:$0xff] %vm1211, %v1697
        %1715 = vst.msk [vmem:[#allocation6 + $0x38] sm:$0xff] %vm1211, %v1699
        %v1716 = vld [vmem:[#allocation2 + $0x128] sm:$0xff]
        %v1717 = vld [vmem:[#allocation2 + $0x130] sm:$0xff]
        %v1718 = vld [vmem:[#allocation2 + $0x138] sm:$0xff]
        %v1719 = vld [vmem:[#allocation2 + $0x140] sm:$0xff]
        %v1720 = vld [vmem:[#allocation2 + $0x148] sm:$0xff]
        %v1721 = vld [vmem:[#allocation2 + $0x150] sm:$0xff]
        %v1722 = vld [vmem:[#allocation2 + $0x158] sm:$0xff]
        %v1723 = vld [vmem:[#allocation2 + $0x160] sm:$0xff]
        %1732 = vrot.lane.b32.xlu0 %v1716, 48
        %v1733 = vpop.permute.xlu0 %1732
        %1734 = vrot.lane.b32.xlu0 %v1717, 48
        %v1735 = vpop.permute.xlu0 %1734
        %1736 = vrot.lane.b32.xlu0 %v1718, 48
        %v1737 = vpop.permute.xlu0 %1736
        %1738 = vrot.lane.b32.xlu0 %v1719, 48
        %v1739 = vpop.permute.xlu0 %1738
        %1740 = vrot.lane.b32.xlu0 %v1720, 48
        %v1741 = vpop.permute.xlu0 %1740
        %1742 = vrot.lane.b32.xlu0 %v1721, 48
        %v1743 = vpop.permute.xlu0 %1742
        %1744 = vrot.lane.b32.xlu0 %v1722, 48
        %v1745 = vpop.permute.xlu0 %1744
        %1746 = vrot.lane.b32.xlu0 %v1723, 48
        %v1747 = vpop.permute.xlu0 %1746
        %1756 = vst.msk [vmem:[#allocation6] sm:$0xff] %vm1260, %v1733
        %1757 = vst.msk [vmem:[#allocation6 + $0x8] sm:$0xff] %vm1260, %v1735
        %1758 = vst.msk [vmem:[#allocation6 + $0x10] sm:$0xff] %vm1260, %v1737
        %1759 = vst.msk [vmem:[#allocation6 + $0x18] sm:$0xff] %vm1260, %v1739
        %1760 = vst.msk [vmem:[#allocation6 + $0x20] sm:$0xff] %vm1260, %v1741
        %1761 = vst.msk [vmem:[#allocation6 + $0x28] sm:$0xff] %vm1260, %v1743
        %1762 = vst.msk [vmem:[#allocation6 + $0x30] sm:$0xff] %vm1260, %v1745
        %1763 = vst.msk [vmem:[#allocation6 + $0x38] sm:$0xff] %vm1260, %v1747
        %v1764 = vld [vmem:[#allocation2 + $0x170] sm:$0xff]
        %v1765 = vld [vmem:[#allocation2 + $0x178] sm:$0xff]
        %v1766 = vld [vmem:[#allocation2 + $0x180] sm:$0xff]
        %v1767 = vld [vmem:[#allocation2 + $0x188] sm:$0xff]
        %v1768 = vld [vmem:[#allocation2 + $0x190] sm:$0xff]
        %v1769 = vld [vmem:[#allocation2 + $0x198] sm:$0xff]
        %v1770 = vld [vmem:[#allocation2 + $0x1a0] sm:$0xff]
        %v1771 = vld [vmem:[#allocation2 + $0x1a8] sm:$0xff]
        %1780 = vrot.lane.b32.xlu0 %v1764, 56
        %v1781 = vpop.permute.xlu0 %1780
        %1782 = vrot.lane.b32.xlu0 %v1765, 56
        %v1783 = vpop.permute.xlu0 %1782
        %1784 = vrot.lane.b32.xlu0 %v1766, 56
        %v1785 = vpop.permute.xlu0 %1784
        %1786 = vrot.lane.b32.xlu0 %v1767, 56
        %v1787 = vpop.permute.xlu0 %1786
        %1788 = vrot.lane.b32.xlu0 %v1768, 56
        %v1789 = vpop.permute.xlu0 %1788
        %1790 = vrot.lane.b32.xlu0 %v1769, 56
        %v1791 = vpop.permute.xlu0 %1790
        %1792 = vrot.lane.b32.xlu0 %v1770, 56
        %v1793 = vpop.permute.xlu0 %1792
        %1794 = vrot.lane.b32.xlu0 %v1771, 56
        %v1795 = vpop.permute.xlu0 %1794
        %1804 = vst.msk [vmem:[#allocation6] sm:$0xff] %vm1309, %v1781
        %1805 = vst.msk [vmem:[#allocation6 + $0x8] sm:$0xff] %vm1309, %v1783
        %1806 = vst.msk [vmem:[#allocation6 + $0x10] sm:$0xff] %vm1309, %v1785
        %1807 = vst.msk [vmem:[#allocation6 + $0x18] sm:$0xff] %vm1309, %v1787
        %1808 = vst.msk [vmem:[#allocation6 + $0x20] sm:$0xff] %vm1309, %v1789
        %1809 = vst.msk [vmem:[#allocation6 + $0x28] sm:$0xff] %vm1309, %v1791
        %1810 = vst.msk [vmem:[#allocation6 + $0x30] sm:$0xff] %vm1309, %v1793
        %1811 = vst.msk [vmem:[#allocation6 + $0x38] sm:$0xff] %vm1309, %v1795
        %v1812 = vld [vmem:[#allocation2 + $0x129] sm:$0xff]
        %v1813 = vld [vmem:[#allocation2 + $0x131] sm:$0xff]
        %v1814 = vld [vmem:[#allocation2 + $0x139] sm:$0xff]
        %v1815 = vld [vmem:[#allocation2 + $0x141] sm:$0xff]
        %v1816 = vld [vmem:[#allocation2 + $0x149] sm:$0xff]
        %v1817 = vld [vmem:[#allocation2 + $0x151] sm:$0xff]
        %v1818 = vld [vmem:[#allocation2 + $0x159] sm:$0xff]
        %v1819 = vld [vmem:[#allocation2 + $0x161] sm:$0xff]
        %1828 = vrot.lane.b32.xlu0 %v1812, 64
        %v1829 = vpop.permute.xlu0 %1828
        %1830 = vrot.lane.b32.xlu0 %v1813, 64
        %v1831 = vpop.permute.xlu0 %1830
        %1832 = vrot.lane.b32.xlu0 %v1814, 64
        %v1833 = vpop.permute.xlu0 %1832
        %1834 = vrot.lane.b32.xlu0 %v1815, 64
        %v1835 = vpop.permute.xlu0 %1834
        %1836 = vrot.lane.b32.xlu0 %v1816, 64
        %v1837 = vpop.permute.xlu0 %1836
        %1838 = vrot.lane.b32.xlu0 %v1817, 64
        %v1839 = vpop.permute.xlu0 %1838
        %1840 = vrot.lane.b32.xlu0 %v1818, 64
        %v1841 = vpop.permute.xlu0 %1840
        %1842 = vrot.lane.b32.xlu0 %v1819, 64
        %v1843 = vpop.permute.xlu0 %1842
        %1852 = vst.msk [vmem:[#allocation6] sm:$0xff] %vm1358, %v1829
        %1853 = vst.msk [vmem:[#allocation6 + $0x8] sm:$0xff] %vm1358, %v1831
        %1854 = vst.msk [vmem:[#allocation6 + $0x10] sm:$0xff] %vm1358, %v1833
        %1855 = vst.msk [vmem:[#allocation6 + $0x18] sm:$0xff] %vm1358, %v1835
        %1856 = vst.msk [vmem:[#allocation6 + $0x20] sm:$0xff] %vm1358, %v1837
        %1857 = vst.msk [vmem:[#allocation6 + $0x28] sm:$0xff] %vm1358, %v1839
        %1858 = vst.msk [vmem:[#allocation6 + $0x30] sm:$0xff] %vm1358, %v1841
        %1859 = vst.msk [vmem:[#allocation6 + $0x38] sm:$0xff] %vm1358, %v1843
        %v1860 = vld [vmem:[#allocation6] sm:$0xff]
        %v1861 = vld [vmem:[#allocation6 + $0x8] sm:$0xff]
        %v1862 = vld [vmem:[#allocation6 + $0x10] sm:$0xff]
        %v1863 = vld [vmem:[#allocation6 + $0x18] sm:$0xff]
        %v1864 = vld [vmem:[#allocation6 + $0x20] sm:$0xff]
        %v1865 = vld [vmem:[#allocation6 + $0x28] sm:$0xff]
        %v1866 = vld [vmem:[#allocation6 + $0x30] sm:$0xff]
        %v1867 = vld [vmem:[#allocation6 + $0x38] sm:$0xff]
        %v1869 = vsel %vm1378, %v1860, 0
        %v1872 = vsel %vm1378, %v1861, 0
        %v1875 = vsel %vm1378, %v1862, 0
        %v1878 = vsel %vm1378, %v1863, 0
        %v1881 = vsel %vm1378, %v1864, 0
        %v1884 = vsel %vm1378, %v1865, 0
        %v1887 = vsel %vm1378, %v1866, 0
        %v1890 = vsel %vm1378, %v1867, 0
        %1892 = vmatpush.msra.mxu0 0.0
        %1893 = vmatpush.msra.mxu0 0.0
        %1894 = vmatpush.msra.mxu0 0.0
        %1895 = vmatpush.msra.mxu0 0.0
        %1896 = vmatpush.msra.mxu0 0.0
        %1897 = vmatpush.msra.mxu0 0.0
        %1898 = vmatpush.msra.mxu0 0.0
        %1899 = vmatpush.msra.mxu0 %v241
        %1900 = vmatpush.msra.mxu0 %v240
        %1901 = vmatpush.msra.mxu0 %v239
        %1902 = vmatpush.msra.mxu0 %v238
        %1903 = vmatpush.msra.mxu0 %v237
        %1904 = vmatpush.msra.mxu0 %v236
        %1905 = vmatpush.msra.mxu0 %v235
        %1906 = vmatpush.msra.mxu0 %v234
        %1907 = vmatpush.msra.mxu0 %v233
        %1908 = vmatmul.f32.gmra.mxu0 %v1869
        %v1909 = vpop.f32.mrf.mxu0
        %v1910 = vadd.f32 %v1376, %v1909
        %1911 = vmatmul.f32.gmra.mxu0 %v1872
        %v1912 = vpop.f32.mrf.mxu0
        %v1913 = vadd.f32 %v1376, %v1912
        %1914 = vmatmul.f32.gmra.mxu0 %v1875
        %v1915 = vpop.f32.mrf.mxu0
        %v1916 = vadd.f32 %v1376, %v1915
        %1917 = vmatmul.f32.gmra.mxu0 %v1878
        %v1918 = vpop.f32.mrf.mxu0
        %v1919 = vadd.f32 %v1376, %v1918
        %1920 = vmatmul.f32.gmra.mxu0 %v1881
        %v1921 = vpop.f32.mrf.mxu0
        %v1922 = vadd.f32 %v1376, %v1921
        %1923 = vmatmul.f32.gmra.mxu0 %v1884
        %v1924 = vpop.f32.mrf.mxu0
        %v1925 = vadd.f32 %v1376, %v1924
        %1926 = vmatmul.f32.gmra.mxu0 %v1887
        %v1927 = vpop.f32.mrf.mxu0
        %v1928 = vadd.f32 %v1376, %v1927
        %1929 = vmatmul.f32.gmra.mxu0 %v1890
        %v1930 = vpop.f32.mrf.mxu0
        %v1931 = vadd.f32 %v1376, %v1930
        %1932 = vdwg.mxu0
        %v1933 = vmax.f32 %v1910, 0.0
        %v1934 = vmax.f32 %v1913, 0.0
        %v1935 = vmax.f32 %v1916, 0.0
        %v1936 = vmax.f32 %v1919, 0.0
        %v1937 = vmax.f32 %v1922, 0.0
        %v1938 = vmax.f32 %v1925, 0.0
        %v1939 = vmax.f32 %v1928, 0.0
        %v1940 = vmax.f32 %v1931, 0.0
        %1941 = vst.msk [vmem:[#allocation3 + $0x40] sm:$0xff] %vm244, %v1933
        %1942 = vst.msk [vmem:[#allocation3 + $0x48] sm:$0xff] %vm244, %v1934
        %1943 = vst.msk [vmem:[#allocation3 + $0x50] sm:$0xff] %vm244, %v1935
        %1944 = vst.msk [vmem:[#allocation3 + $0x58] sm:$0xff] %vm244, %v1936
        %1945 = vst.msk [vmem:[#allocation3 + $0x60] sm:$0xff] %vm244, %v1937
        %1946 = vst.msk [vmem:[#allocation3 + $0x68] sm:$0xff] %vm244, %v1938
        %1947 = vst.msk [vmem:[#allocation3 + $0x70] sm:$0xff] %vm244, %v1939
        %1948 = vst.msk [vmem:[#allocation3 + $0x78] sm:$0xff] %vm244, %v1940
        %v1949 = vld [vmem:[#allocation3] sm:$0xff]
        %v1950 = vld [vmem:[#allocation3 + $0x8] sm:$0xff]
        %v1951 = vld [vmem:[#allocation3 + $0x10] sm:$0xff]
        %v1952 = vld [vmem:[#allocation3 + $0x18] sm:$0xff]
        %v1953 = vld [vmem:[#allocation3 + $0x20] sm:$0xff]
        %v1954 = vld [vmem:[#allocation3 + $0x28] sm:$0xff]
        %1955 = vst.msk [vmem:[#allocation6] sm:$0xff] %vm244, %v1949
        %1956 = vst.msk [vmem:[#allocation6 + $0x8] sm:$0xff] %vm244, %v1950
        %1957 = vst.msk [vmem:[#allocation6 + $0x10] sm:$0xff] %vm244, %v1951
        %1958 = vst.msk [vmem:[#allocation6 + $0x18] sm:$0xff] %vm244, %v1952
        %1959 = vst.msk [vmem:[#allocation6 + $0x20] sm:$0xff] %vm244, %v1953
        %1960 = vst.msk [vmem:[#allocation6 + $0x28] sm:$0xff] %vm244, %v1954
        %v1961 = vld [vmem:[#allocation3 + $0x1] sm:$0xff]
        %v1962 = vld [vmem:[#allocation3 + $0x9] sm:$0xff]
        %v1963 = vld [vmem:[#allocation3 + $0x11] sm:$0xff]
        %v1964 = vld [vmem:[#allocation3 + $0x19] sm:$0xff]
        %v1965 = vld [vmem:[#allocation3 + $0x21] sm:$0xff]
        %v1966 = vld [vmem:[#allocation3 + $0x29] sm:$0xff]
        %1973 = vrot.lane.b32.xlu0 %v1961, 8
        %v1974 = vpop.permute.xlu0 %1973
        %1975 = vrot.lane.b32.xlu0 %v1962, 8
        %v1976 = vpop.permute.xlu0 %1975
        %1977 = vrot.lane.b32.xlu0 %v1963, 8
        %v1978 = vpop.permute.xlu0 %1977
        %1979 = vrot.lane.b32.xlu0 %v1964, 8
        %v1980 = vpop.permute.xlu0 %1979
        %1981 = vrot.lane.b32.xlu0 %v1965, 8
        %v1982 = vpop.permute.xlu0 %1981
        %1983 = vrot.lane.b32.xlu0 %v1966, 8
        %v1984 = vpop.permute.xlu0 %1983
        %1991 = vst.msk [vmem:[#allocation6] sm:$0xff] %vm1015, %v1974
        %1992 = vst.msk [vmem:[#allocation6 + $0x8] sm:$0xff] %vm1015, %v1976
        %1993 = vst.msk [vmem:[#allocation6 + $0x10] sm:$0xff] %vm1015, %v1978
        %1994 = vst.msk [vmem:[#allocation6 + $0x18] sm:$0xff] %vm1015, %v1980
        %1995 = vst.msk [vmem:[#allocation6 + $0x20] sm:$0xff] %vm1015, %v1982
        %1996 = vst.msk [vmem:[#allocation6 + $0x28] sm:$0xff] %vm1015, %v1984
        %v1997 = vld [vmem:[#allocation3 + $0x2] sm:$0xff]
        %v1998 = vld [vmem:[#allocation3 + $0xa] sm:$0xff]
        %v1999 = vld [vmem:[#allocation3 + $0x12] sm:$0xff]
        %v2000 = vld [vmem:[#allocation3 + $0x1a] sm:$0xff]
        %v2001 = vld [vmem:[#allocation3 + $0x22] sm:$0xff]
        %v2002 = vld [vmem:[#allocation3 + $0x2a] sm:$0xff]
        %2009 = vrot.lane.b32.xlu0 %v1997, 16
        %v2010 = vpop.permute.xlu0 %2009
        %2011 = vrot.lane.b32.xlu0 %v1998, 16
        %v2012 = vpop.permute.xlu0 %2011
        %2013 = vrot.lane.b32.xlu0 %v1999, 16
        %v2014 = vpop.permute.xlu0 %2013
        %2015 = vrot.lane.b32.xlu0 %v2000, 16
        %v2016 = vpop.permute.xlu0 %2015
        %2017 = vrot.lane.b32.xlu0 %v2001, 16
        %v2018 = vpop.permute.xlu0 %2017
        %2019 = vrot.lane.b32.xlu0 %v2002, 16
        %v2020 = vpop.permute.xlu0 %2019
        %2027 = vst.msk [vmem:[#allocation6] sm:$0xff] %vm1064, %v2010
        %2028 = vst.msk [vmem:[#allocation6 + $0x8] sm:$0xff] %vm1064, %v2012
        %2029 = vst.msk [vmem:[#allocation6 + $0x10] sm:$0xff] %vm1064, %v2014
        %2030 = vst.msk [vmem:[#allocation6 + $0x18] sm:$0xff] %vm1064, %v2016
        %2031 = vst.msk [vmem:[#allocation6 + $0x20] sm:$0xff] %vm1064, %v2018
        %2032 = vst.msk [vmem:[#allocation6 + $0x28] sm:$0xff] %vm1064, %v2020
        %v2033 = vld [vmem:[#allocation3 + $0x8] sm:$0xff]
        %v2034 = vld [vmem:[#allocation3 + $0x10] sm:$0xff]
        %v2035 = vld [vmem:[#allocation3 + $0x18] sm:$0xff]
        %v2036 = vld [vmem:[#allocation3 + $0x20] sm:$0xff]
        %v2037 = vld [vmem:[#allocation3 + $0x28] sm:$0xff]
        %v2038 = vld [vmem:[#allocation3 + $0x30] sm:$0xff]
        %2045 = vrot.lane.b32.xlu0 %v2033, 24
        %v2046 = vpop.permute.xlu0 %2045
        %2047 = vrot.lane.b32.xlu0 %v2034, 24
        %v2048 = vpop.permute.xlu0 %2047
        %2049 = vrot.lane.b32.xlu0 %v2035, 24
        %v2050 = vpop.permute.xlu0 %2049
        %2051 = vrot.lane.b32.xlu0 %v2036, 24
        %v2052 = vpop.permute.xlu0 %2051
        %2053 = vrot.lane.b32.xlu0 %v2037, 24
        %v2054 = vpop.permute.xlu0 %2053
        %2055 = vrot.lane.b32.xlu0 %v2038, 24
        %v2056 = vpop.permute.xlu0 %2055
        %2063 = vst.msk [vmem:[#allocation6] sm:$0xff] %vm1113, %v2046
        %2064 = vst.msk [vmem:[#allocation6 + $0x8] sm:$0xff] %vm1113, %v2048
        %2065 = vst.msk [vmem:[#allocation6 + $0x10] sm:$0xff] %vm1113, %v2050
        %2066 = vst.msk [vmem:[#allocation6 + $0x18] sm:$0xff] %vm1113, %v2052
        %2067 = vst.msk [vmem:[#allocation6 + $0x20] sm:$0xff] %vm1113, %v2054
        %2068 = vst.msk [vmem:[#allocation6 + $0x28] sm:$0xff] %vm1113, %v2056
        %v2069 = vld [vmem:[#allocation3 + $0x9] sm:$0xff]
        %v2070 = vld [vmem:[#allocation3 + $0x11] sm:$0xff]
        %v2071 = vld [vmem:[#allocation3 + $0x19] sm:$0xff]
        %v2072 = vld [vmem:[#allocation3 + $0x21] sm:$0xff]
        %v2073 = vld [vmem:[#allocation3 + $0x29] sm:$0xff]
        %v2074 = vld [vmem:[#allocation3 + $0x31] sm:$0xff]
        %2081 = vrot.lane.b32.xlu0 %v2069, 32
        %v2082 = vpop.permute.xlu0 %2081
        %2083 = vrot.lane.b32.xlu0 %v2070, 32
        %v2084 = vpop.permute.xlu0 %2083
        %2085 = vrot.lane.b32.xlu0 %v2071, 32
        %v2086 = vpop.permute.xlu0 %2085
        %2087 = vrot.lane.b32.xlu0 %v2072, 32
        %v2088 = vpop.permute.xlu0 %2087
        %2089 = vrot.lane.b32.xlu0 %v2073, 32
        %v2090 = vpop.permute.xlu0 %2089
        %2091 = vrot.lane.b32.xlu0 %v2074, 32
        %v2092 = vpop.permute.xlu0 %2091
        %2099 = vst.msk [vmem:[#allocation6] sm:$0xff] %vm1162, %v2082
        %2100 = vst.msk [vmem:[#allocation6 + $0x8] sm:$0xff] %vm1162, %v2084
        %2101 = vst.msk [vmem:[#allocation6 + $0x10] sm:$0xff] %vm1162, %v2086
        %2102 = vst.msk [vmem:[#allocation6 + $0x18] sm:$0xff] %vm1162, %v2088
        %2103 = vst.msk [vmem:[#allocation6 + $0x20] sm:$0xff] %vm1162, %v2090
        %2104 = vst.msk [vmem:[#allocation6 + $0x28] sm:$0xff] %vm1162, %v2092
        %v2105 = vld [vmem:[#allocation3 + $0xa] sm:$0xff]
        %v2106 = vld [vmem:[#allocation3 + $0x12] sm:$0xff]
        %v2107 = vld [vmem:[#allocation3 + $0x1a] sm:$0xff]
        %v2108 = vld [vmem:[#allocation3 + $0x22] sm:$0xff]
        %v2109 = vld [vmem:[#allocation3 + $0x2a] sm:$0xff]
        %v2110 = vld [vmem:[#allocation3 + $0x32] sm:$0xff]
        %2117 = vrot.lane.b32.xlu0 %v2105, 40
        %v2118 = vpop.permute.xlu0 %2117
        %2119 = vrot.lane.b32.xlu0 %v2106, 40
        %v2120 = vpop.permute.xlu0 %2119
        %2121 = vrot.lane.b32.xlu0 %v2107, 40
        %v2122 = vpop.permute.xlu0 %2121
        %2123 = vrot.lane.b32.xlu0 %v2108, 40
        %v2124 = vpop.permute.xlu0 %2123
        %2125 = vrot.lane.b32.xlu0 %v2109, 40
        %v2126 = vpop.permute.xlu0 %2125
        %2127 = vrot.lane.b32.xlu0 %v2110, 40
        %v2128 = vpop.permute.xlu0 %2127
        %2135 = vst.msk [vmem:[#allocation6] sm:$0xff] %vm1211, %v2118
        %2136 = vst.msk [vmem:[#allocation6 + $0x8] sm:$0xff] %vm1211, %v2120
        %2137 = vst.msk [vmem:[#allocation6 + $0x10] sm:$0xff] %vm1211, %v2122
        %2138 = vst.msk [vmem:[#allocation6 + $0x18] sm:$0xff] %vm1211, %v2124
        %2139 = vst.msk [vmem:[#allocation6 + $0x20] sm:$0xff] %vm1211, %v2126
        %2140 = vst.msk [vmem:[#allocation6 + $0x28] sm:$0xff] %vm1211, %v2128
        %v2141 = vld [vmem:[#allocation3 + $0x10] sm:$0xff]
        %v2142 = vld [vmem:[#allocation3 + $0x18] sm:$0xff]
        %v2143 = vld [vmem:[#allocation3 + $0x20] sm:$0xff]
        %v2144 = vld [vmem:[#allocation3 + $0x28] sm:$0xff]
        %v2145 = vld [vmem:[#allocation3 + $0x30] sm:$0xff]
        %v2146 = vld [vmem:[#allocation3 + $0x38] sm:$0xff]
        %2153 = vrot.lane.b32.xlu0 %v2141, 48
        %v2154 = vpop.permute.xlu0 %2153
        %2155 = vrot.lane.b32.xlu0 %v2142, 48
        %v2156 = vpop.permute.xlu0 %2155
        %2157 = vrot.lane.b32.xlu0 %v2143, 48
        %v2158 = vpop.permute.xlu0 %2157
        %2159 = vrot.lane.b32.xlu0 %v2144, 48
        %v2160 = vpop.permute.xlu0 %2159
        %2161 = vrot.lane.b32.xlu0 %v2145, 48
        %v2162 = vpop.permute.xlu0 %2161
        %2163 = vrot.lane.b32.xlu0 %v2146, 48
        %v2164 = vpop.permute.xlu0 %2163
        %2171 = vst.msk [vmem:[#allocation6] sm:$0xff] %vm1260, %v2154
        %2172 = vst.msk [vmem:[#allocation6 + $0x8] sm:$0xff] %vm1260, %v2156
        %2173 = vst.msk [vmem:[#allocation6 + $0x10] sm:$0xff] %vm1260, %v2158
        %2174 = vst.msk [vmem:[#allocation6 + $0x18] sm:$0xff] %vm1260, %v2160
        %2175 = vst.msk [vmem:[#allocation6 + $0x20] sm:$0xff] %vm1260, %v2162
        %2176 = vst.msk [vmem:[#allocation6 + $0x28] sm:$0xff] %vm1260, %v2164
        %v2177 = vld [vmem:[#allocation3 + $0x11] sm:$0xff]
        %v2178 = vld [vmem:[#allocation3 + $0x19] sm:$0xff]
        %v2179 = vld [vmem:[#allocation3 + $0x21] sm:$0xff]
        %v2180 = vld [vmem:[#allocation3 + $0x29] sm:$0xff]
        %v2181 = vld [vmem:[#allocation3 + $0x31] sm:$0xff]
        %v2182 = vld [vmem:[#allocation3 + $0x39] sm:$0xff]
        %2189 = vrot.lane.b32.xlu0 %v2177, 56
        %v2190 = vpop.permute.xlu0 %2189
        %2191 = vrot.lane.b32.xlu0 %v2178, 56
        %v2192 = vpop.permute.xlu0 %2191
        %2193 = vrot.lane.b32.xlu0 %v2179, 56
        %v2194 = vpop.permute.xlu0 %2193
        %2195 = vrot.lane.b32.xlu0 %v2180, 56
        %v2196 = vpop.permute.xlu0 %2195
        %2197 = vrot.lane.b32.xlu0 %v2181, 56
        %v2198 = vpop.permute.xlu0 %2197
        %2199 = vrot.lane.b32.xlu0 %v2182, 56
        %v2200 = vpop.permute.xlu0 %2199
        %2207 = vst.msk [vmem:[#allocation6] sm:$0xff] %vm1309, %v2190
        %2208 = vst.msk [vmem:[#allocation6 + $0x8] sm:$0xff] %vm1309, %v2192
        %2209 = vst.msk [vmem:[#allocation6 + $0x10] sm:$0xff] %vm1309, %v2194
        %2210 = vst.msk [vmem:[#allocation6 + $0x18] sm:$0xff] %vm1309, %v2196
        %2211 = vst.msk [vmem:[#allocation6 + $0x20] sm:$0xff] %vm1309, %v2198
        %2212 = vst.msk [vmem:[#allocation6 + $0x28] sm:$0xff] %vm1309, %v2200
        %v2213 = vld [vmem:[#allocation3 + $0x12] sm:$0xff]
        %v2214 = vld [vmem:[#allocation3 + $0x1a] sm:$0xff]
        %v2215 = vld [vmem:[#allocation3 + $0x22] sm:$0xff]
        %v2216 = vld [vmem:[#allocation3 + $0x2a] sm:$0xff]
        %v2217 = vld [vmem:[#allocation3 + $0x32] sm:$0xff]
        %v2218 = vld [vmem:[#allocation3 + $0x3a] sm:$0xff]
        %2225 = vrot.lane.b32.xlu0 %v2213, 64
        %v2226 = vpop.permute.xlu0 %2225
        %2227 = vrot.lane.b32.xlu0 %v2214, 64
        %v2228 = vpop.permute.xlu0 %2227
        %2229 = vrot.lane.b32.xlu0 %v2215, 64
        %v2230 = vpop.permute.xlu0 %2229
        %2231 = vrot.lane.b32.xlu0 %v2216, 64
        %v2232 = vpop.permute.xlu0 %2231
        %2233 = vrot.lane.b32.xlu0 %v2217, 64
        %v2234 = vpop.permute.xlu0 %2233
        %2235 = vrot.lane.b32.xlu0 %v2218, 64
        %v2236 = vpop.permute.xlu0 %2235
        %2243 = vst.msk [vmem:[#allocation6] sm:$0xff] %vm1358, %v2226
        %2244 = vst.msk [vmem:[#allocation6 + $0x8] sm:$0xff] %vm1358, %v2228
        %2245 = vst.msk [vmem:[#allocation6 + $0x10] sm:$0xff] %vm1358, %v2230
        %2246 = vst.msk [vmem:[#allocation6 + $0x18] sm:$0xff] %vm1358, %v2232
        %2247 = vst.msk [vmem:[#allocation6 + $0x20] sm:$0xff] %vm1358, %v2234
        %2248 = vst.msk [vmem:[#allocation6 + $0x28] sm:$0xff] %vm1358, %v2236
        %v2249 = vld [vmem:[#allocation6] sm:$0xff]
        %v2250 = vld [vmem:[#allocation6 + $0x8] sm:$0xff]
        %v2251 = vld [vmem:[#allocation6 + $0x10] sm:$0xff]
        %v2252 = vld [vmem:[#allocation6 + $0x18] sm:$0xff]
        %v2253 = vld [vmem:[#allocation6 + $0x20] sm:$0xff]
        %v2254 = vld [vmem:[#allocation6 + $0x28] sm:$0xff]
        %2264 = vrot.lane.b32.xlu0 %v233, 120
        %v2265 = vpop.permute.xlu0 %2264
        %2266 = vrot.lane.b32.xlu0 %v234, 120
        %v2267 = vpop.permute.xlu0 %2266
        %2268 = vrot.lane.b32.xlu0 %v235, 120
        %v2269 = vpop.permute.xlu0 %2268
        %2270 = vrot.lane.b32.xlu0 %v236, 120
        %v2271 = vpop.permute.xlu0 %2270
        %2272 = vrot.lane.b32.xlu0 %v237, 120
        %v2273 = vpop.permute.xlu0 %2272
        %2274 = vrot.lane.b32.xlu0 %v238, 120
        %v2275 = vpop.permute.xlu0 %2274
        %2276 = vrot.lane.b32.xlu0 %v239, 120
        %v2277 = vpop.permute.xlu0 %2276
        %2278 = vrot.lane.b32.xlu0 %v240, 120
        %v2279 = vpop.permute.xlu0 %2278
        %2280 = vrot.lane.b32.xlu0 %v241, 120
        %v2281 = vpop.permute.xlu0 %2280
        %2291 = vrot.lane.b32.xlu0 %v321, 112
        %v2292 = vpop.permute.xlu0 %2291
        %v2295 = vsel %vm1378, %v2249, 0
        %v2298 = vsel %vm1378, %v2250, 0
        %v2301 = vsel %vm1378, %v2251, 0
        %v2304 = vsel %vm1378, %v2252, 0
        %v2307 = vsel %vm1378, %v2253, 0
        %v2310 = vsel %vm1378, %v2254, 0
        %2312 = vmatpush.msra.mxu0 0.0
        %2313 = vmatpush.msra.mxu0 0.0
        %2314 = vmatpush.msra.mxu0 0.0
        %2315 = vmatpush.msra.mxu0 0.0
        %2316 = vmatpush.msra.mxu0 0.0
        %2317 = vmatpush.msra.mxu0 0.0
        %2318 = vmatpush.msra.mxu0 0.0
        %2319 = vmatpush.msra.mxu0 %v2281
        %2320 = vmatpush.msra.mxu0 %v2279
        %2321 = vmatpush.msra.mxu0 %v2277
        %2322 = vmatpush.msra.mxu0 %v2275
        %2323 = vmatpush.msra.mxu0 %v2273
        %2324 = vmatpush.msra.mxu0 %v2271
        %2325 = vmatpush.msra.mxu0 %v2269
        %2326 = vmatpush.msra.mxu0 %v2267
        %2327 = vmatpush.msra.mxu0 %v2265
        %2328 = vmatmul.f32.gmra.mxu0 %v2295
        %v2329 = vpop.f32.mrf.mxu0
        %v2330 = vadd.f32 %v2292, %v2329
        %2331 = vmatmul.f32.gmra.mxu0 %v2298
        %v2332 = vpop.f32.mrf.mxu0
        %v2333 = vadd.f32 %v2292, %v2332
        %2334 = vmatmul.f32.gmra.mxu0 %v2301
        %v2335 = vpop.f32.mrf.mxu0
        %v2336 = vadd.f32 %v2292, %v2335
        %2337 = vmatmul.f32.gmra.mxu0 %v2304
        %v2338 = vpop.f32.mrf.mxu0
        %v2339 = vadd.f32 %v2292, %v2338
        %2340 = vmatmul.f32.gmra.mxu0 %v2307
        %v2341 = vpop.f32.mrf.mxu0
        %v2342 = vadd.f32 %v2292, %v2341
        %2343 = vmatmul.f32.gmra.mxu0 %v2310
        %v2344 = vpop.f32.mrf.mxu0
        %v2345 = vadd.f32 %v2292, %v2344
        %2346 = vdwg.mxu0
        %v2347 = vmax.f32 %v2330, 0.0
        %v2348 = vmax.f32 %v2333, 0.0
        %v2349 = vmax.f32 %v2336, 0.0
        %v2350 = vmax.f32 %v2339, 0.0
        %v2351 = vmax.f32 %v2342, 0.0
        %v2352 = vmax.f32 %v2345, 0.0
        %2353 = vst.msk [vmem:[#allocation4] sm:$0xff] %vm244, %v2347
        %2354 = vst.msk [vmem:[#allocation4 + $0x8] sm:$0xff] %vm244, %v2348
        %2355 = vst.msk [vmem:[#allocation4 + $0x10] sm:$0xff] %vm244, %v2349
        %2356 = vst.msk [vmem:[#allocation4 + $0x18] sm:$0xff] %vm244, %v2350
        %2357 = vst.msk [vmem:[#allocation4 + $0x20] sm:$0xff] %vm244, %v2351
        %2358 = vst.msk [vmem:[#allocation4 + $0x28] sm:$0xff] %vm244, %v2352
        %v2359 = vld [vmem:[#allocation3 + $0x40] sm:$0xff]
        %v2360 = vld [vmem:[#allocation3 + $0x48] sm:$0xff]
        %v2361 = vld [vmem:[#allocation3 + $0x50] sm:$0xff]
        %v2362 = vld [vmem:[#allocation3 + $0x58] sm:$0xff]
        %v2363 = vld [vmem:[#allocation3 + $0x60] sm:$0xff]
        %v2364 = vld [vmem:[#allocation3 + $0x68] sm:$0xff]
        %2365 = vst.msk [vmem:[#allocation6] sm:$0xff] %vm244, %v2359
        %2366 = vst.msk [vmem:[#allocation6 + $0x8] sm:$0xff] %vm244, %v2360
        %2367 = vst.msk [vmem:[#allocation6 + $0x10] sm:$0xff] %vm244, %v2361
        %2368 = vst.msk [vmem:[#allocation6 + $0x18] sm:$0xff] %vm244, %v2362
        %2369 = vst.msk [vmem:[#allocation6 + $0x20] sm:$0xff] %vm244, %v2363
        %2370 = vst.msk [vmem:[#allocation6 + $0x28] sm:$0xff] %vm244, %v2364
        %v2371 = vld [vmem:[#allocation3 + $0x41] sm:$0xff]
        %v2372 = vld [vmem:[#allocation3 + $0x49] sm:$0xff]
        %v2373 = vld [vmem:[#allocation3 + $0x51] sm:$0xff]
        %v2374 = vld [vmem:[#allocation3 + $0x59] sm:$0xff]
        %v2375 = vld [vmem:[#allocation3 + $0x61] sm:$0xff]
        %v2376 = vld [vmem:[#allocation3 + $0x69] sm:$0xff]
        %2383 = vrot.lane.b32.xlu0 %v2371, 8
        %v2384 = vpop.permute.xlu0 %2383
        %2385 = vrot.lane.b32.xlu0 %v2372, 8
        %v2386 = vpop.permute.xlu0 %2385
        %2387 = vrot.lane.b32.xlu0 %v2373, 8
        %v2388 = vpop.permute.xlu0 %2387
        %2389 = vrot.lane.b32.xlu0 %v2374, 8
        %v2390 = vpop.permute.xlu0 %2389
        %2391 = vrot.lane.b32.xlu0 %v2375, 8
        %v2392 = vpop.permute.xlu0 %2391
        %2393 = vrot.lane.b32.xlu0 %v2376, 8
        %v2394 = vpop.permute.xlu0 %2393
        %2401 = vst.msk [vmem:[#allocation6] sm:$0xff] %vm1015, %v2384
        %2402 = vst.msk [vmem:[#allocation6 + $0x8] sm:$0xff] %vm1015, %v2386
        %2403 = vst.msk [vmem:[#allocation6 + $0x10] sm:$0xff] %vm1015, %v2388
        %2404 = vst.msk [vmem:[#allocation6 + $0x18] sm:$0xff] %vm1015, %v2390
        %2405 = vst.msk [vmem:[#allocation6 + $0x20] sm:$0xff] %vm1015, %v2392
        %2406 = vst.msk [vmem:[#allocation6 + $0x28] sm:$0xff] %vm1015, %v2394
        %v2407 = vld [vmem:[#allocation3 + $0x42] sm:$0xff]
        %v2408 = vld [vmem:[#allocation3 + $0x4a] sm:$0xff]
        %v2409 = vld [vmem:[#allocation3 + $0x52] sm:$0xff]
        %v2410 = vld [vmem:[#allocation3 + $0x5a] sm:$0xff]
        %v2411 = vld [vmem:[#allocation3 + $0x62] sm:$0xff]
        %v2412 = vld [vmem:[#allocation3 + $0x6a] sm:$0xff]
        %2419 = vrot.lane.b32.xlu0 %v2407, 16
        %v2420 = vpop.permute.xlu0 %2419
        %2421 = vrot.lane.b32.xlu0 %v2408, 16
        %v2422 = vpop.permute.xlu0 %2421
        %2423 = vrot.lane.b32.xlu0 %v2409, 16
        %v2424 = vpop.permute.xlu0 %2423
        %2425 = vrot.lane.b32.xlu0 %v2410, 16
        %v2426 = vpop.permute.xlu0 %2425
        %2427 = vrot.lane.b32.xlu0 %v2411, 16
        %v2428 = vpop.permute.xlu0 %2427
        %2429 = vrot.lane.b32.xlu0 %v2412, 16
        %v2430 = vpop.permute.xlu0 %2429
        %2437 = vst.msk [vmem:[#allocation6] sm:$0xff] %vm1064, %v2420
        %2438 = vst.msk [vmem:[#allocation6 + $0x8] sm:$0xff] %vm1064, %v2422
        %2439 = vst.msk [vmem:[#allocation6 + $0x10] sm:$0xff] %vm1064, %v2424
        %2440 = vst.msk [vmem:[#allocation6 + $0x18] sm:$0xff] %vm1064, %v2426
        %2441 = vst.msk [vmem:[#allocation6 + $0x20] sm:$0xff] %vm1064, %v2428
        %2442 = vst.msk [vmem:[#allocation6 + $0x28] sm:$0xff] %vm1064, %v2430
        %v2443 = vld [vmem:[#allocation3 + $0x48] sm:$0xff]
        %v2444 = vld [vmem:[#allocation3 + $0x50] sm:$0xff]
        %v2445 = vld [vmem:[#allocation3 + $0x58] sm:$0xff]
        %v2446 = vld [vmem:[#allocation3 + $0x60] sm:$0xff]
        %v2447 = vld [vmem:[#allocation3 + $0x68] sm:$0xff]
        %v2448 = vld [vmem:[#allocation3 + $0x70] sm:$0xff]
        %2455 = vrot.lane.b32.xlu0 %v2443, 24
        %v2456 = vpop.permute.xlu0 %2455
        %2457 = vrot.lane.b32.xlu0 %v2444, 24
        %v2458 = vpop.permute.xlu0 %2457
        %2459 = vrot.lane.b32.xlu0 %v2445, 24
        %v2460 = vpop.permute.xlu0 %2459
        %2461 = vrot.lane.b32.xlu0 %v2446, 24
        %v2462 = vpop.permute.xlu0 %2461
        %2463 = vrot.lane.b32.xlu0 %v2447, 24
        %v2464 = vpop.permute.xlu0 %2463
        %2465 = vrot.lane.b32.xlu0 %v2448, 24
        %v2466 = vpop.permute.xlu0 %2465
        %2473 = vst.msk [vmem:[#allocation6] sm:$0xff] %vm1113, %v2456
        %2474 = vst.msk [vmem:[#allocation6 + $0x8] sm:$0xff] %vm1113, %v2458
        %2475 = vst.msk [vmem:[#allocation6 + $0x10] sm:$0xff] %vm1113, %v2460
        %2476 = vst.msk [vmem:[#allocation6 + $0x18] sm:$0xff] %vm1113, %v2462
        %2477 = vst.msk [vmem:[#allocation6 + $0x20] sm:$0xff] %vm1113, %v2464
        %2478 = vst.msk [vmem:[#allocation6 + $0x28] sm:$0xff] %vm1113, %v2466
        %v2479 = vld [vmem:[#allocation3 + $0x49] sm:$0xff]
        %v2480 = vld [vmem:[#allocation3 + $0x51] sm:$0xff]
        %v2481 = vld [vmem:[#allocation3 + $0x59] sm:$0xff]
        %v2482 = vld [vmem:[#allocation3 + $0x61] sm:$0xff]
        %v2483 = vld [vmem:[#allocation3 + $0x69] sm:$0xff]
        %v2484 = vld [vmem:[#allocation3 + $0x71] sm:$0xff]
        %2491 = vrot.lane.b32.xlu0 %v2479, 32
        %v2492 = vpop.permute.xlu0 %2491
        %2493 = vrot.lane.b32.xlu0 %v2480, 32
        %v2494 = vpop.permute.xlu0 %2493
        %2495 = vrot.lane.b32.xlu0 %v2481, 32
        %v2496 = vpop.permute.xlu0 %2495
        %2497 = vrot.lane.b32.xlu0 %v2482, 32
        %v2498 = vpop.permute.xlu0 %2497
        %2499 = vrot.lane.b32.xlu0 %v2483, 32
        %v2500 = vpop.permute.xlu0 %2499
        %2501 = vrot.lane.b32.xlu0 %v2484, 32
        %v2502 = vpop.permute.xlu0 %2501
        %2509 = vst.msk [vmem:[#allocation6] sm:$0xff] %vm1162, %v2492
        %2510 = vst.msk [vmem:[#allocation6 + $0x8] sm:$0xff] %vm1162, %v2494
        %2511 = vst.msk [vmem:[#allocation6 + $0x10] sm:$0xff] %vm1162, %v2496
        %2512 = vst.msk [vmem:[#allocation6 + $0x18] sm:$0xff] %vm1162, %v2498
        %2513 = vst.msk [vmem:[#allocation6 + $0x20] sm:$0xff] %vm1162, %v2500
        %2514 = vst.msk [vmem:[#allocation6 + $0x28] sm:$0xff] %vm1162, %v2502
        %v2515 = vld [vmem:[#allocation3 + $0x4a] sm:$0xff]
        %v2516 = vld [vmem:[#allocation3 + $0x52] sm:$0xff]
        %v2517 = vld [vmem:[#allocation3 + $0x5a] sm:$0xff]
        %v2518 = vld [vmem:[#allocation3 + $0x62] sm:$0xff]
        %v2519 = vld [vmem:[#allocation3 + $0x6a] sm:$0xff]
        %v2520 = vld [vmem:[#allocation3 + $0x72] sm:$0xff]
        %2527 = vrot.lane.b32.xlu0 %v2515, 40
        %v2528 = vpop.permute.xlu0 %2527
        %2529 = vrot.lane.b32.xlu0 %v2516, 40
        %v2530 = vpop.permute.xlu0 %2529
        %2531 = vrot.lane.b32.xlu0 %v2517, 40
        %v2532 = vpop.permute.xlu0 %2531
        %2533 = vrot.lane.b32.xlu0 %v2518, 40
        %v2534 = vpop.permute.xlu0 %2533
        %2535 = vrot.lane.b32.xlu0 %v2519, 40
        %v2536 = vpop.permute.xlu0 %2535
        %2537 = vrot.lane.b32.xlu0 %v2520, 40
        %v2538 = vpop.permute.xlu0 %2537
        %2545 = vst.msk [vmem:[#allocation6] sm:$0xff] %vm1211, %v2528
        %2546 = vst.msk [vmem:[#allocation6 + $0x8] sm:$0xff] %vm1211, %v2530
        %2547 = vst.msk [vmem:[#allocation6 + $0x10] sm:$0xff] %vm1211, %v2532
        %2548 = vst.msk [vmem:[#allocation6 + $0x18] sm:$0xff] %vm1211, %v2534
        %2549 = vst.msk [vmem:[#allocation6 + $0x20] sm:$0xff] %vm1211, %v2536
        %2550 = vst.msk [vmem:[#allocation6 + $0x28] sm:$0xff] %vm1211, %v2538
        %v2551 = vld [vmem:[#allocation3 + $0x50] sm:$0xff]
        %v2552 = vld [vmem:[#allocation3 + $0x58] sm:$0xff]
        %v2553 = vld [vmem:[#allocation3 + $0x60] sm:$0xff]
        %v2554 = vld [vmem:[#allocation3 + $0x68] sm:$0xff]
        %v2555 = vld [vmem:[#allocation3 + $0x70] sm:$0xff]
        %v2556 = vld [vmem:[#allocation3 + $0x78] sm:$0xff]
        %2563 = vrot.lane.b32.xlu0 %v2551, 48
        %v2564 = vpop.permute.xlu0 %2563
        %2565 = vrot.lane.b32.xlu0 %v2552, 48
        %v2566 = vpop.permute.xlu0 %2565
        %2567 = vrot.lane.b32.xlu0 %v2553, 48
        %v2568 = vpop.permute.xlu0 %2567
        %2569 = vrot.lane.b32.xlu0 %v2554, 48
        %v2570 = vpop.permute.xlu0 %2569
        %2571 = vrot.lane.b32.xlu0 %v2555, 48
        %v2572 = vpop.permute.xlu0 %2571
        %2573 = vrot.lane.b32.xlu0 %v2556, 48
        %v2574 = vpop.permute.xlu0 %2573
        %2581 = vst.msk [vmem:[#allocation6] sm:$0xff] %vm1260, %v2564
        %2582 = vst.msk [vmem:[#allocation6 + $0x8] sm:$0xff] %vm1260, %v2566
        %2583 = vst.msk [vmem:[#allocation6 + $0x10] sm:$0xff] %vm1260, %v2568
        %2584 = vst.msk [vmem:[#allocation6 + $0x18] sm:$0xff] %vm1260, %v2570
        %2585 = vst.msk [vmem:[#allocation6 + $0x20] sm:$0xff] %vm1260, %v2572
        %2586 = vst.msk [vmem:[#allocation6 + $0x28] sm:$0xff] %vm1260, %v2574
        %v2587 = vld [vmem:[#allocation3 + $0x51] sm:$0xff]
        %v2588 = vld [vmem:[#allocation3 + $0x59] sm:$0xff]
        %v2589 = vld [vmem:[#allocation3 + $0x61] sm:$0xff]
        %v2590 = vld [vmem:[#allocation3 + $0x69] sm:$0xff]
        %v2591 = vld [vmem:[#allocation3 + $0x71] sm:$0xff]
        %v2592 = vld [vmem:[#allocation3 + $0x79] sm:$0xff]
        %2599 = vrot.lane.b32.xlu0 %v2587, 56
        %v2600 = vpop.permute.xlu0 %2599
        %2601 = vrot.lane.b32.xlu0 %v2588, 56
        %v2602 = vpop.permute.xlu0 %2601
        %2603 = vrot.lane.b32.xlu0 %v2589, 56
        %v2604 = vpop.permute.xlu0 %2603
        %2605 = vrot.lane.b32.xlu0 %v2590, 56
        %v2606 = vpop.permute.xlu0 %2605
        %2607 = vrot.lane.b32.xlu0 %v2591, 56
        %v2608 = vpop.permute.xlu0 %2607
        %2609 = vrot.lane.b32.xlu0 %v2592, 56
        %v2610 = vpop.permute.xlu0 %2609
        %2617 = vst.msk [vmem:[#allocation6] sm:$0xff] %vm1309, %v2600
        %2618 = vst.msk [vmem:[#allocation6 + $0x8] sm:$0xff] %vm1309, %v2602
        %2619 = vst.msk [vmem:[#allocation6 + $0x10] sm:$0xff] %vm1309, %v2604
        %2620 = vst.msk [vmem:[#allocation6 + $0x18] sm:$0xff] %vm1309, %v2606
        %2621 = vst.msk [vmem:[#allocation6 + $0x20] sm:$0xff] %vm1309, %v2608
        %2622 = vst.msk [vmem:[#allocation6 + $0x28] sm:$0xff] %vm1309, %v2610
        %v2623 = vld [vmem:[#allocation3 + $0x52] sm:$0xff]
        %v2624 = vld [vmem:[#allocation3 + $0x5a] sm:$0xff]
        %v2625 = vld [vmem:[#allocation3 + $0x62] sm:$0xff]
        %v2626 = vld [vmem:[#allocation3 + $0x6a] sm:$0xff]
        %v2627 = vld [vmem:[#allocation3 + $0x72] sm:$0xff]
        %v2628 = vld [vmem:[#allocation3 + $0x7a] sm:$0xff]
        %2635 = vrot.lane.b32.xlu0 %v2623, 64
        %v2636 = vpop.permute.xlu0 %2635
        %2637 = vrot.lane.b32.xlu0 %v2624, 64
        %v2638 = vpop.permute.xlu0 %2637
        %2639 = vrot.lane.b32.xlu0 %v2625, 64
        %v2640 = vpop.permute.xlu0 %2639
        %2641 = vrot.lane.b32.xlu0 %v2626, 64
        %v2642 = vpop.permute.xlu0 %2641
        %2643 = vrot.lane.b32.xlu0 %v2627, 64
        %v2644 = vpop.permute.xlu0 %2643
        %2645 = vrot.lane.b32.xlu0 %v2628, 64
        %v2646 = vpop.permute.xlu0 %2645
        %2653 = vst.msk [vmem:[#allocation6] sm:$0xff] %vm1358, %v2636
        %2654 = vst.msk [vmem:[#allocation6 + $0x8] sm:$0xff] %vm1358, %v2638
        %2655 = vst.msk [vmem:[#allocation6 + $0x10] sm:$0xff] %vm1358, %v2640
        %2656 = vst.msk [vmem:[#allocation6 + $0x18] sm:$0xff] %vm1358, %v2642
        %2657 = vst.msk [vmem:[#allocation6 + $0x20] sm:$0xff] %vm1358, %v2644
        %2658 = vst.msk [vmem:[#allocation6 + $0x28] sm:$0xff] %vm1358, %v2646
        %v2659 = vld [vmem:[#allocation6] sm:$0xff]
        %v2660 = vld [vmem:[#allocation6 + $0x8] sm:$0xff]
        %v2661 = vld [vmem:[#allocation6 + $0x10] sm:$0xff]
        %v2662 = vld [vmem:[#allocation6 + $0x18] sm:$0xff]
        %v2663 = vld [vmem:[#allocation6 + $0x20] sm:$0xff]
        %v2664 = vld [vmem:[#allocation6 + $0x28] sm:$0xff]
        %v2666 = vsel %vm1378, %v2659, 0
        %v2669 = vsel %vm1378, %v2660, 0
        %v2672 = vsel %vm1378, %v2661, 0
        %v2675 = vsel %vm1378, %v2662, 0
        %v2678 = vsel %vm1378, %v2663, 0
        %v2681 = vsel %vm1378, %v2664, 0
        %2683 = vmatpush.msra.mxu0 0.0
        %2684 = vmatpush.msra.mxu0 0.0
        %2685 = vmatpush.msra.mxu0 0.0
        %2686 = vmatpush.msra.mxu0 0.0
        %2687 = vmatpush.msra.mxu0 0.0
        %2688 = vmatpush.msra.mxu0 0.0
        %2689 = vmatpush.msra.mxu0 0.0
        %2690 = vmatpush.msra.mxu0 %v2281
        %2691 = vmatpush.msra.mxu0 %v2279
        %2692 = vmatpush.msra.mxu0 %v2277
        %2693 = vmatpush.msra.mxu0 %v2275
        %2694 = vmatpush.msra.mxu0 %v2273
        %2695 = vmatpush.msra.mxu0 %v2271
        %2696 = vmatpush.msra.mxu0 %v2269
        %2697 = vmatpush.msra.mxu0 %v2267
        %2698 = vmatpush.msra.mxu0 %v2265
        %2699 = vmatmul.f32.gmra.mxu0 %v2666
        %v2700 = vpop.f32.mrf.mxu0
        %v2701 = vadd.f32 %v2292, %v2700
        %2702 = vmatmul.f32.gmra.mxu0 %v2669
        %v2703 = vpop.f32.mrf.mxu0
        %v2704 = vadd.f32 %v2292, %v2703
        %2705 = vmatmul.f32.gmra.mxu0 %v2672
        %v2706 = vpop.f32.mrf.mxu0
        %v2707 = vadd.f32 %v2292, %v2706
        %2708 = vmatmul.f32.gmra.mxu0 %v2675
        %v2709 = vpop.f32.mrf.mxu0
        %v2710 = vadd.f32 %v2292, %v2709
        %2711 = vmatmul.f32.gmra.mxu0 %v2678
        %v2712 = vpop.f32.mrf.mxu0
        %v2713 = vadd.f32 %v2292, %v2712
        %2714 = vmatmul.f32.gmra.mxu0 %v2681
        %v2715 = vpop.f32.mrf.mxu0
        %v2716 = vadd.f32 %v2292, %v2715
        %2717 = vdwg.mxu0
        %v2718 = vmax.f32 %v2701, 0.0
        %v2719 = vmax.f32 %v2704, 0.0
        %v2720 = vmax.f32 %v2707, 0.0
        %v2721 = vmax.f32 %v2710, 0.0
        %v2722 = vmax.f32 %v2713, 0.0
        %v2723 = vmax.f32 %v2716, 0.0
        %2724 = vst.msk [vmem:[#allocation4 + $0x30] sm:$0xff] %vm244, %v2718
        %2725 = vst.msk [vmem:[#allocation4 + $0x38] sm:$0xff] %vm244, %v2719
        %2726 = vst.msk [vmem:[#allocation4 + $0x40] sm:$0xff] %vm244, %v2720
        %2727 = vst.msk [vmem:[#allocation4 + $0x48] sm:$0xff] %vm244, %v2721
        %2728 = vst.msk [vmem:[#allocation4 + $0x50] sm:$0xff] %vm244, %v2722
        %2729 = vst.msk [vmem:[#allocation4 + $0x58] sm:$0xff] %vm244, %v2723
        %v2730 = vld [vmem:[#allocation4] sm:$0xff]
        %v2731 = vld [vmem:[#allocation4 + $0x8] sm:$0xff]
        %v2732 = vld [vmem:[#allocation4 + $0x10] sm:$0xff]
        %v2733 = vld [vmem:[#allocation4 + $0x18] sm:$0xff]
        %2734 = vst.msk [vmem:[#allocation6] sm:$0xff] %vm244, %v2730
        %2735 = vst.msk [vmem:[#allocation6 + $0x8] sm:$0xff] %vm244, %v2731
        %2736 = vst.msk [vmem:[#allocation6 + $0x10] sm:$0xff] %vm244, %v2732
        %2737 = vst.msk [vmem:[#allocation6 + $0x18] sm:$0xff] %vm244, %v2733
        %v2738 = vld [vmem:[#allocation4 + $0x1] sm:$0xff]
        %v2739 = vld [vmem:[#allocation4 + $0x9] sm:$0xff]
        %v2740 = vld [vmem:[#allocation4 + $0x11] sm:$0xff]
        %v2741 = vld [vmem:[#allocation4 + $0x19] sm:$0xff]
        %2746 = vrot.lane.b32.xlu0 %v2738, 8
        %v2747 = vpop.permute.xlu0 %2746
        %2748 = vrot.lane.b32.xlu0 %v2739, 8
        %v2749 = vpop.permute.xlu0 %2748
        %2750 = vrot.lane.b32.xlu0 %v2740, 8
        %v2751 = vpop.permute.xlu0 %2750
        %2752 = vrot.lane.b32.xlu0 %v2741, 8
        %v2753 = vpop.permute.xlu0 %2752
        %2758 = vst.msk [vmem:[#allocation6] sm:$0xff] %vm1015, %v2747
        %2759 = vst.msk [vmem:[#allocation6 + $0x8] sm:$0xff] %vm1015, %v2749
        %2760 = vst.msk [vmem:[#allocation6 + $0x10] sm:$0xff] %vm1015, %v2751
        %2761 = vst.msk [vmem:[#allocation6 + $0x18] sm:$0xff] %vm1015, %v2753
        %v2762 = vld [vmem:[#allocation4 + $0x2] sm:$0xff]
        %v2763 = vld [vmem:[#allocation4 + $0xa] sm:$0xff]
        %v2764 = vld [vmem:[#allocation4 + $0x12] sm:$0xff]
        %v2765 = vld [vmem:[#allocation4 + $0x1a] sm:$0xff]
        %2770 = vrot.lane.b32.xlu0 %v2762, 16
        %v2771 = vpop.permute.xlu0 %2770
        %2772 = vrot.lane.b32.xlu0 %v2763, 16
        %v2773 = vpop.permute.xlu0 %2772
        %2774 = vrot.lane.b32.xlu0 %v2764, 16
        %v2775 = vpop.permute.xlu0 %2774
        %2776 = vrot.lane.b32.xlu0 %v2765, 16
        %v2777 = vpop.permute.xlu0 %2776
        %2782 = vst.msk [vmem:[#allocation6] sm:$0xff] %vm1064, %v2771
        %2783 = vst.msk [vmem:[#allocation6 + $0x8] sm:$0xff] %vm1064, %v2773
        %2784 = vst.msk [vmem:[#allocation6 + $0x10] sm:$0xff] %vm1064, %v2775
        %2785 = vst.msk [vmem:[#allocation6 + $0x18] sm:$0xff] %vm1064, %v2777
        %v2786 = vld [vmem:[#allocation4 + $0x8] sm:$0xff]
        %v2787 = vld [vmem:[#allocation4 + $0x10] sm:$0xff]
        %v2788 = vld [vmem:[#allocation4 + $0x18] sm:$0xff]
        %v2789 = vld [vmem:[#allocation4 + $0x20] sm:$0xff]
        %2794 = vrot.lane.b32.xlu0 %v2786, 24
        %v2795 = vpop.permute.xlu0 %2794
        %2796 = vrot.lane.b32.xlu0 %v2787, 24
        %v2797 = vpop.permute.xlu0 %2796
        %2798 = vrot.lane.b32.xlu0 %v2788, 24
        %v2799 = vpop.permute.xlu0 %2798
        %2800 = vrot.lane.b32.xlu0 %v2789, 24
        %v2801 = vpop.permute.xlu0 %2800
        %2806 = vst.msk [vmem:[#allocation6] sm:$0xff] %vm1113, %v2795
        %2807 = vst.msk [vmem:[#allocation6 + $0x8] sm:$0xff] %vm1113, %v2797
        %2808 = vst.msk [vmem:[#allocation6 + $0x10] sm:$0xff] %vm1113, %v2799
        %2809 = vst.msk [vmem:[#allocation6 + $0x18] sm:$0xff] %vm1113, %v2801
        %v2810 = vld [vmem:[#allocation4 + $0x9] sm:$0xff]
        %v2811 = vld [vmem:[#allocation4 + $0x11] sm:$0xff]
        %v2812 = vld [vmem:[#allocation4 + $0x19] sm:$0xff]
        %v2813 = vld [vmem:[#allocation4 + $0x21] sm:$0xff]
        %2818 = vrot.lane.b32.xlu0 %v2810, 32
        %v2819 = vpop.permute.xlu0 %2818
        %2820 = vrot.lane.b32.xlu0 %v2811, 32
        %v2821 = vpop.permute.xlu0 %2820
        %2822 = vrot.lane.b32.xlu0 %v2812, 32
        %v2823 = vpop.permute.xlu0 %2822
        %2824 = vrot.lane.b32.xlu0 %v2813, 32
        %v2825 = vpop.permute.xlu0 %2824
        %2830 = vst.msk [vmem:[#allocation6] sm:$0xff] %vm1162, %v2819
        %2831 = vst.msk [vmem:[#allocation6 + $0x8] sm:$0xff] %vm1162, %v2821
        %2832 = vst.msk [vmem:[#allocation6 + $0x10] sm:$0xff] %vm1162, %v2823
        %2833 = vst.msk [vmem:[#allocation6 + $0x18] sm:$0xff] %vm1162, %v2825
        %v2834 = vld [vmem:[#allocation4 + $0xa] sm:$0xff]
        %v2835 = vld [vmem:[#allocation4 + $0x12] sm:$0xff]
        %v2836 = vld [vmem:[#allocation4 + $0x1a] sm:$0xff]
        %v2837 = vld [vmem:[#allocation4 + $0x22] sm:$0xff]
        %2842 = vrot.lane.b32.xlu0 %v2834, 40
        %v2843 = vpop.permute.xlu0 %2842
        %2844 = vrot.lane.b32.xlu0 %v2835, 40
        %v2845 = vpop.permute.xlu0 %2844
        %2846 = vrot.lane.b32.xlu0 %v2836, 40
        %v2847 = vpop.permute.xlu0 %2846
        %2848 = vrot.lane.b32.xlu0 %v2837, 40
        %v2849 = vpop.permute.xlu0 %2848
        %2854 = vst.msk [vmem:[#allocation6] sm:$0xff] %vm1211, %v2843
        %2855 = vst.msk [vmem:[#allocation6 + $0x8] sm:$0xff] %vm1211, %v2845
        %2856 = vst.msk [vmem:[#allocation6 + $0x10] sm:$0xff] %vm1211, %v2847
        %2857 = vst.msk [vmem:[#allocation6 + $0x18] sm:$0xff] %vm1211, %v2849
        %v2858 = vld [vmem:[#allocation4 + $0x10] sm:$0xff]
        %v2859 = vld [vmem:[#allocation4 + $0x18] sm:$0xff]
        %v2860 = vld [vmem:[#allocation4 + $0x20] sm:$0xff]
        %v2861 = vld [vmem:[#allocation4 + $0x28] sm:$0xff]
        %2866 = vrot.lane.b32.xlu0 %v2858, 48
        %v2867 = vpop.permute.xlu0 %2866
        %2868 = vrot.lane.b32.xlu0 %v2859, 48
        %v2869 = vpop.permute.xlu0 %2868
        %2870 = vrot.lane.b32.xlu0 %v2860, 48
        %v2871 = vpop.permute.xlu0 %2870
        %2872 = vrot.lane.b32.xlu0 %v2861, 48
        %v2873 = vpop.permute.xlu0 %2872
        %2878 = vst.msk [vmem:[#allocation6] sm:$0xff] %vm1260, %v2867
        %2879 = vst.msk [vmem:[#allocation6 + $0x8] sm:$0xff] %vm1260, %v2869
        %2880 = vst.msk [vmem:[#allocation6 + $0x10] sm:$0xff] %vm1260, %v2871
        %2881 = vst.msk [vmem:[#allocation6 + $0x18] sm:$0xff] %vm1260, %v2873
        %v2882 = vld [vmem:[#allocation4 + $0x11] sm:$0xff]
        %v2883 = vld [vmem:[#allocation4 + $0x19] sm:$0xff]
        %v2884 = vld [vmem:[#allocation4 + $0x21] sm:$0xff]
        %v2885 = vld [vmem:[#allocation4 + $0x29] sm:$0xff]
        %2890 = vrot.lane.b32.xlu0 %v2882, 56
        %v2891 = vpop.permute.xlu0 %2890
        %2892 = vrot.lane.b32.xlu0 %v2883, 56
        %v2893 = vpop.permute.xlu0 %2892
        %2894 = vrot.lane.b32.xlu0 %v2884, 56
        %v2895 = vpop.permute.xlu0 %2894
        %2896 = vrot.lane.b32.xlu0 %v2885, 56
        %v2897 = vpop.permute.xlu0 %2896
        %2902 = vst.msk [vmem:[#allocation6] sm:$0xff] %vm1309, %v2891
        %2903 = vst.msk [vmem:[#allocation6 + $0x8] sm:$0xff] %vm1309, %v2893
        %2904 = vst.msk [vmem:[#allocation6 + $0x10] sm:$0xff] %vm1309, %v2895
        %2905 = vst.msk [vmem:[#allocation6 + $0x18] sm:$0xff] %vm1309, %v2897
        %v2906 = vld [vmem:[#allocation4 + $0x12] sm:$0xff]
        %v2907 = vld [vmem:[#allocation4 + $0x1a] sm:$0xff]
        %v2908 = vld [vmem:[#allocation4 + $0x22] sm:$0xff]
        %v2909 = vld [vmem:[#allocation4 + $0x2a] sm:$0xff]
        %2914 = vrot.lane.b32.xlu0 %v2906, 64
        %v2915 = vpop.permute.xlu0 %2914
        %2916 = vrot.lane.b32.xlu0 %v2907, 64
        %v2917 = vpop.permute.xlu0 %2916
        %2918 = vrot.lane.b32.xlu0 %v2908, 64
        %v2919 = vpop.permute.xlu0 %2918
        %2920 = vrot.lane.b32.xlu0 %v2909, 64
        %v2921 = vpop.permute.xlu0 %2920
        %2926 = vst.msk [vmem:[#allocation6] sm:$0xff] %vm1358, %v2915
        %2927 = vst.msk [vmem:[#allocation6 + $0x8] sm:$0xff] %vm1358, %v2917
        %2928 = vst.msk [vmem:[#allocation6 + $0x10] sm:$0xff] %vm1358, %v2919
        %2929 = vst.msk [vmem:[#allocation6 + $0x18] sm:$0xff] %vm1358, %v2921
        %v2930 = vld [vmem:[#allocation6] sm:$0xff]
        %v2931 = vld [vmem:[#allocation6 + $0x8] sm:$0xff]
        %v2932 = vld [vmem:[#allocation6 + $0x10] sm:$0xff]
        %v2933 = vld [vmem:[#allocation6 + $0x18] sm:$0xff]
        %2934 = vrot.lane.b32.xlu0 %v233, 112
        %v2935 = vpop.permute.xlu0 %2934
        %2936 = vrot.lane.b32.xlu0 %v234, 112
        %v2937 = vpop.permute.xlu0 %2936
        %2938 = vrot.lane.b32.xlu0 %v235, 112
        %v2939 = vpop.permute.xlu0 %2938
        %2940 = vrot.lane.b32.xlu0 %v236, 112
        %v2941 = vpop.permute.xlu0 %2940
        %2942 = vrot.lane.b32.xlu0 %v237, 112
        %v2943 = vpop.permute.xlu0 %2942
        %2944 = vrot.lane.b32.xlu0 %v238, 112
        %v2945 = vpop.permute.xlu0 %2944
        %2946 = vrot.lane.b32.xlu0 %v239, 112
        %v2947 = vpop.permute.xlu0 %2946
        %2948 = vrot.lane.b32.xlu0 %v240, 112
        %v2949 = vpop.permute.xlu0 %2948
        %2950 = vrot.lane.b32.xlu0 %v241, 112
        %v2951 = vpop.permute.xlu0 %2950
        %2961 = vrot.lane.b32.xlu0 %v321, 104
        %v2962 = vpop.permute.xlu0 %2961
        %v2965 = vsel %vm1378, %v2930, 0
        %v2968 = vsel %vm1378, %v2931, 0
        %v2971 = vsel %vm1378, %v2932, 0
        %v2974 = vsel %vm1378, %v2933, 0
        %2976 = vmatpush.msra.mxu0 0.0
        %2977 = vmatpush.msra.mxu0 0.0
        %2978 = vmatpush.msra.mxu0 0.0
        %2979 = vmatpush.msra.mxu0 0.0
        %2980 = vmatpush.msra.mxu0 0.0
        %2981 = vmatpush.msra.mxu0 0.0
        %2982 = vmatpush.msra.mxu0 0.0
        %2983 = vmatpush.msra.mxu0 %v2951
        %2984 = vmatpush.msra.mxu0 %v2949
        %2985 = vmatpush.msra.mxu0 %v2947
        %2986 = vmatpush.msra.mxu0 %v2945
        %2987 = vmatpush.msra.mxu0 %v2943
        %2988 = vmatpush.msra.mxu0 %v2941
        %2989 = vmatpush.msra.mxu0 %v2939
        %2990 = vmatpush.msra.mxu0 %v2937
        %2991 = vmatpush.msra.mxu0 %v2935
        %2992 = vmatmul.f32.gmra.mxu0 %v2965
        %v2993 = vpop.f32.mrf.mxu0
        %v2994 = vadd.f32 %v2962, %v2993
        %2995 = vmatmul.f32.gmra.mxu0 %v2968
        %v2996 = vpop.f32.mrf.mxu0
        %v2997 = vadd.f32 %v2962, %v2996
        %2998 = vmatmul.f32.gmra.mxu0 %v2971
        %v2999 = vpop.f32.mrf.mxu0
        %v3000 = vadd.f32 %v2962, %v2999
        %3001 = vmatmul.f32.gmra.mxu0 %v2974
        %v3002 = vpop.f32.mrf.mxu0
        %v3003 = vadd.f32 %v2962, %v3002
        %3004 = vdwg.mxu0
        %v3005 = vmax.f32 %v2994, 0.0
        %v3006 = vmax.f32 %v2997, 0.0
        %v3007 = vmax.f32 %v3000, 0.0
        %v3008 = vmax.f32 %v3003, 0.0
        %vm3009 = vcmask 130048
        %3010 = vst.msk [vmem:[#allocation5] sm:$0xff] %vm3009, %v3005
        %3011 = vst.msk [vmem:[#allocation5 + $0x8] sm:$0xff] %vm3009, %v3006
        %3012 = vst.msk [vmem:[#allocation5 + $0x10] sm:$0xff] %vm3009, %v3007
        %3013 = vst.msk [vmem:[#allocation5 + $0x18] sm:$0xff] %vm3009, %v3008
        %v3014 = vld [vmem:[#allocation4 + $0x30] sm:$0xff]
        %v3015 = vld [vmem:[#allocation4 + $0x38] sm:$0xff]
        %v3016 = vld [vmem:[#allocation4 + $0x40] sm:$0xff]
        %v3017 = vld [vmem:[#allocation4 + $0x48] sm:$0xff]
        %3018 = vst.msk [vmem:[#allocation6] sm:$0xff] %vm244, %v3014
        %3019 = vst.msk [vmem:[#allocation6 + $0x8] sm:$0xff] %vm244, %v3015
        %3020 = vst.msk [vmem:[#allocation6 + $0x10] sm:$0xff] %vm244, %v3016
        %3021 = vst.msk [vmem:[#allocation6 + $0x18] sm:$0xff] %vm244, %v3017
        %v3022 = vld [vmem:[#allocation4 + $0x31] sm:$0xff]
        %v3023 = vld [vmem:[#allocation4 + $0x39] sm:$0xff]
        %v3024 = vld [vmem:[#allocation4 + $0x41] sm:$0xff]
        %v3025 = vld [vmem:[#allocation4 + $0x49] sm:$0xff]
        %3030 = vrot.lane.b32.xlu0 %v3022, 8
        %v3031 = vpop.permute.xlu0 %3030
        %3032 = vrot.lane.b32.xlu0 %v3023, 8
        %v3033 = vpop.permute.xlu0 %3032
        %3034 = vrot.lane.b32.xlu0 %v3024, 8
        %v3035 = vpop.permute.xlu0 %3034
        %3036 = vrot.lane.b32.xlu0 %v3025, 8
        %v3037 = vpop.permute.xlu0 %3036
        %3042 = vst.msk [vmem:[#allocation6] sm:$0xff] %vm1015, %v3031
        %3043 = vst.msk [vmem:[#allocation6 + $0x8] sm:$0xff] %vm1015, %v3033
        %3044 = vst.msk [vmem:[#allocation6 + $0x10] sm:$0xff] %vm1015, %v3035
        %3045 = vst.msk [vmem:[#allocation6 + $0x18] sm:$0xff] %vm1015, %v3037
        %v3046 = vld [vmem:[#allocation4 + $0x32] sm:$0xff]
        %v3047 = vld [vmem:[#allocation4 + $0x3a] sm:$0xff]
        %v3048 = vld [vmem:[#allocation4 + $0x42] sm:$0xff]
        %v3049 = vld [vmem:[#allocation4 + $0x4a] sm:$0xff]
        %3054 = vrot.lane.b32.xlu0 %v3046, 16
        %v3055 = vpop.permute.xlu0 %3054
        %3056 = vrot.lane.b32.xlu0 %v3047, 16
        %v3057 = vpop.permute.xlu0 %3056
        %3058 = vrot.lane.b32.xlu0 %v3048, 16
        %v3059 = vpop.permute.xlu0 %3058
        %3060 = vrot.lane.b32.xlu0 %v3049, 16
        %v3061 = vpop.permute.xlu0 %3060
        %3066 = vst.msk [vmem:[#allocation6] sm:$0xff] %vm1064, %v3055
        %3067 = vst.msk [vmem:[#allocation6 + $0x8] sm:$0xff] %vm1064, %v3057
        %3068 = vst.msk [vmem:[#allocation6 + $0x10] sm:$0xff] %vm1064, %v3059
        %3069 = vst.msk [vmem:[#allocation6 + $0x18] sm:$0xff] %vm1064, %v3061
        %v3070 = vld [vmem:[#allocation4 + $0x38] sm:$0xff]
        %v3071 = vld [vmem:[#allocation4 + $0x40] sm:$0xff]
        %v3072 = vld [vmem:[#allocation4 + $0x48] sm:$0xff]
        %v3073 = vld [vmem:[#allocation4 + $0x50] sm:$0xff]
        %3078 = vrot.lane.b32.xlu0 %v3070, 24
        %v3079 = vpop.permute.xlu0 %3078
        %3080 = vrot.lane.b32.xlu0 %v3071, 24
        %v3081 = vpop.permute.xlu0 %3080
        %3082 = vrot.lane.b32.xlu0 %v3072, 24
        %v3083 = vpop.permute.xlu0 %3082
        %3084 = vrot.lane.b32.xlu0 %v3073, 24
        %v3085 = vpop.permute.xlu0 %3084
        %3090 = vst.msk [vmem:[#allocation6] sm:$0xff] %vm1113, %v3079
        %3091 = vst.msk [vmem:[#allocation6 + $0x8] sm:$0xff] %vm1113, %v3081
        %3092 = vst.msk [vmem:[#allocation6 + $0x10] sm:$0xff] %vm1113, %v3083
        %3093 = vst.msk [vmem:[#allocation6 + $0x18] sm:$0xff] %vm1113, %v3085
        %v3094 = vld [vmem:[#allocation4 + $0x39] sm:$0xff]
        %v3095 = vld [vmem:[#allocation4 + $0x41] sm:$0xff]
        %v3096 = vld [vmem:[#allocation4 + $0x49] sm:$0xff]
        %v3097 = vld [vmem:[#allocation4 + $0x51] sm:$0xff]
        %3102 = vrot.lane.b32.xlu0 %v3094, 32
        %v3103 = vpop.permute.xlu0 %3102
        %3104 = vrot.lane.b32.xlu0 %v3095, 32
        %v3105 = vpop.permute.xlu0 %3104
        %3106 = vrot.lane.b32.xlu0 %v3096, 32
        %v3107 = vpop.permute.xlu0 %3106
        %3108 = vrot.lane.b32.xlu0 %v3097, 32
        %v3109 = vpop.permute.xlu0 %3108
        %3114 = vst.msk [vmem:[#allocation6] sm:$0xff] %vm1162, %v3103
        %3115 = vst.msk [vmem:[#allocation6 + $0x8] sm:$0xff] %vm1162, %v3105
        %3116 = vst.msk [vmem:[#allocation6 + $0x10] sm:$0xff] %vm1162, %v3107
        %3117 = vst.msk [vmem:[#allocation6 + $0x18] sm:$0xff] %vm1162, %v3109
        %v3118 = vld [vmem:[#allocation4 + $0x3a] sm:$0xff]
        %v3119 = vld [vmem:[#allocation4 + $0x42] sm:$0xff]
        %v3120 = vld [vmem:[#allocation4 + $0x4a] sm:$0xff]
        %v3121 = vld [vmem:[#allocation4 + $0x52] sm:$0xff]
        %3126 = vrot.lane.b32.xlu0 %v3118, 40
        %v3127 = vpop.permute.xlu0 %3126
        %3128 = vrot.lane.b32.xlu0 %v3119, 40
        %v3129 = vpop.permute.xlu0 %3128
        %3130 = vrot.lane.b32.xlu0 %v3120, 40
        %v3131 = vpop.permute.xlu0 %3130
        %3132 = vrot.lane.b32.xlu0 %v3121, 40
        %v3133 = vpop.permute.xlu0 %3132
        %3138 = vst.msk [vmem:[#allocation6] sm:$0xff] %vm1211, %v3127
        %3139 = vst.msk [vmem:[#allocation6 + $0x8] sm:$0xff] %vm1211, %v3129
        %3140 = vst.msk [vmem:[#allocation6 + $0x10] sm:$0xff] %vm1211, %v3131
        %3141 = vst.msk [vmem:[#allocation6 + $0x18] sm:$0xff] %vm1211, %v3133
        %v3142 = vld [vmem:[#allocation4 + $0x40] sm:$0xff]
        %v3143 = vld [vmem:[#allocation4 + $0x48] sm:$0xff]
        %v3144 = vld [vmem:[#allocation4 + $0x50] sm:$0xff]
        %v3145 = vld [vmem:[#allocation4 + $0x58] sm:$0xff]
        %3150 = vrot.lane.b32.xlu0 %v3142, 48
        %v3151 = vpop.permute.xlu0 %3150
        %3152 = vrot.lane.b32.xlu0 %v3143, 48
        %v3153 = vpop.permute.xlu0 %3152
        %3154 = vrot.lane.b32.xlu0 %v3144, 48
        %v3155 = vpop.permute.xlu0 %3154
        %3156 = vrot.lane.b32.xlu0 %v3145, 48
        %v3157 = vpop.permute.xlu0 %3156
        %3162 = vst.msk [vmem:[#allocation6] sm:$0xff] %vm1260, %v3151
        %3163 = vst.msk [vmem:[#allocation6 + $0x8] sm:$0xff] %vm1260, %v3153
        %3164 = vst.msk [vmem:[#allocation6 + $0x10] sm:$0xff] %vm1260, %v3155
        %3165 = vst.msk [vmem:[#allocation6 + $0x18] sm:$0xff] %vm1260, %v3157
        %v3166 = vld [vmem:[#allocation4 + $0x41] sm:$0xff]
        %v3167 = vld [vmem:[#allocation4 + $0x49] sm:$0xff]
        %v3168 = vld [vmem:[#allocation4 + $0x51] sm:$0xff]
        %v3169 = vld [vmem:[#allocation4 + $0x59] sm:$0xff]
        %3174 = vrot.lane.b32.xlu0 %v3166, 56
        %v3175 = vpop.permute.xlu0 %3174
        %3176 = vrot.lane.b32.xlu0 %v3167, 56
        %v3177 = vpop.permute.xlu0 %3176
        %3178 = vrot.lane.b32.xlu0 %v3168, 56
        %v3179 = vpop.permute.xlu0 %3178
        %3180 = vrot.lane.b32.xlu0 %v3169, 56
        %v3181 = vpop.permute.xlu0 %3180
        %3186 = vst.msk [vmem:[#allocation6] sm:$0xff] %vm1309, %v3175
        %3187 = vst.msk [vmem:[#allocation6 + $0x8] sm:$0xff] %vm1309, %v3177
        %3188 = vst.msk [vmem:[#allocation6 + $0x10] sm:$0xff] %vm1309, %v3179
        %3189 = vst.msk [vmem:[#allocation6 + $0x18] sm:$0xff] %vm1309, %v3181
        %v3190 = vld [vmem:[#allocation4 + $0x42] sm:$0xff]
        %v3191 = vld [vmem:[#allocation4 + $0x4a] sm:$0xff]
        %v3192 = vld [vmem:[#allocation4 + $0x52] sm:$0xff]
        %v3193 = vld [vmem:[#allocation4 + $0x5a] sm:$0xff]
        %3198 = vrot.lane.b32.xlu0 %v3190, 64
        %v3199 = vpop.permute.xlu0 %3198
        %3200 = vrot.lane.b32.xlu0 %v3191, 64
        %v3201 = vpop.permute.xlu0 %3200
        %3202 = vrot.lane.b32.xlu0 %v3192, 64
        %v3203 = vpop.permute.xlu0 %3202
        %3204 = vrot.lane.b32.xlu0 %v3193, 64
        %v3205 = vpop.permute.xlu0 %3204
        %3210 = vst.msk [vmem:[#allocation6] sm:$0xff] %vm1358, %v3199
        %3211 = vst.msk [vmem:[#allocation6 + $0x8] sm:$0xff] %vm1358, %v3201
        %3212 = vst.msk [vmem:[#allocation6 + $0x10] sm:$0xff] %vm1358, %v3203
        %3213 = vst.msk [vmem:[#allocation6 + $0x18] sm:$0xff] %vm1358, %v3205
        %v3214 = vld [vmem:[#allocation6] sm:$0xff]
        %v3215 = vld [vmem:[#allocation6 + $0x8] sm:$0xff]
        %v3216 = vld [vmem:[#allocation6 + $0x10] sm:$0xff]
        %v3217 = vld [vmem:[#allocation6 + $0x18] sm:$0xff]
        %v3219 = vsel %vm1378, %v3214, 0
        %v3222 = vsel %vm1378, %v3215, 0
        %v3225 = vsel %vm1378, %v3216, 0
        %v3228 = vsel %vm1378, %v3217, 0
        %3230 = vmatpush.msra.mxu0 0.0
        %3231 = vmatpush.msra.mxu0 0.0
        %3232 = vmatpush.msra.mxu0 0.0
        %3233 = vmatpush.msra.mxu0 0.0
        %3234 = vmatpush.msra.mxu0 0.0
        %3235 = vmatpush.msra.mxu0 0.0
        %3236 = vmatpush.msra.mxu0 0.0
        %3237 = vmatpush.msra.mxu0 %v2951
        %3238 = vmatpush.msra.mxu0 %v2949
        %3239 = vmatpush.msra.mxu0 %v2947
        %3240 = vmatpush.msra.mxu0 %v2945
        %3241 = vmatpush.msra.mxu0 %v2943
        %3242 = vmatpush.msra.mxu0 %v2941
        %3243 = vmatpush.msra.mxu0 %v2939
        %3244 = vmatpush.msra.mxu0 %v2937
        %3245 = vmatpush.msra.mxu0 %v2935
        %3246 = vmatmul.f32.gmra.mxu0 %v3219
        %v3247 = vpop.f32.mrf.mxu0
        %v3248 = vadd.f32 %v2962, %v3247
        %3249 = vmatmul.f32.gmra.mxu0 %v3222
        %v3250 = vpop.f32.mrf.mxu0
        %v3251 = vadd.f32 %v2962, %v3250
        %3252 = vmatmul.f32.gmra.mxu0 %v3225
        %v3253 = vpop.f32.mrf.mxu0
        %v3254 = vadd.f32 %v2962, %v3253
        %3255 = vmatmul.f32.gmra.mxu0 %v3228
        %v3256 = vpop.f32.mrf.mxu0
        %v3257 = vadd.f32 %v2962, %v3256
        %3258 = vdwg.mxu0
        %v3259 = vmax.f32 %v3248, 0.0
        %v3260 = vmax.f32 %v3251, 0.0
        %v3261 = vmax.f32 %v3254, 0.0
        %v3262 = vmax.f32 %v3257, 0.0
        %3263 = vst.msk [vmem:[#allocation5 + $0x20] sm:$0xff] %vm3009, %v3259
        %3264 = vst.msk [vmem:[#allocation5 + $0x28] sm:$0xff] %vm3009, %v3260
        %3265 = vst.msk [vmem:[#allocation5 + $0x30] sm:$0xff] %vm3009, %v3261
        %3266 = vst.msk [vmem:[#allocation5 + $0x38] sm:$0xff] %vm3009, %v3262
        %v3267 = vld [vmem:[#allocation5] sm:$0x1]
        %v3268 = vld [vmem:[#allocation5 + $0x20] sm:$0x1]
        %v3270 = vrot.slane %v3268, 7
        %vm3272 = vcmask 1040384
        %v3273 = vsel %vm3272, %v3267, %v3270
        %v3274 = vld [vmem:[%s3] sm:$0xff]
        %v3275 = vld [vmem:[%s3 + $0x8] sm:$0xff]
        %v3276 = vld [vmem:[#allocation5 + $0x1] sm:$0x1]
        %v3277 = vld [vmem:[#allocation5 + $0x21] sm:$0x1]
        %v3279 = vrot.slane %v3277, 7
        %v3281 = vsel %vm3272, %v3276, %v3279
        %s3282 = scalar_lea.vmem %s3, 16
        %v3283 = vld [vmem:[%s3282] sm:$0xff]
        %v3284 = vld [vmem:[%s3282 + $0x8] sm:$0xff]
        %v3286 = vsel %vm3009, %v3281, 0
        %3288 = vmatpush.msra.mxu0 0.0
        %3289 = vmatpush.msra.mxu0 0.0
        %3290 = vmatpush.msra.mxu0 0.0
        %3291 = vmatpush.msra.mxu0 0.0
        %3292 = vmatpush.msra.mxu0 0.0
        %3293 = vmatpush.msra.mxu0 0.0
        %3294 = vmatpush.msra.mxu0 0.0
        %3295 = vmatpush.msra.mxu0 0.0
        %3296 = vmatpush.msra.mxu0 0.0
        %3297 = vmatpush.msra.mxu0 0.0
        %3298 = vmatpush.msra.mxu0 0.0
        %3299 = vmatpush.msra.mxu0 0.0
        %3300 = vmatpush.msra.mxu0 0.0
        %3301 = vmatpush.msra.mxu0 0.0
        %3302 = vmatpush.msra.mxu0 %v3284
        %3303 = vmatpush.msra.mxu0 %v3283
        %3304 = vmatmul.f32.gmra.mxu0 %v3286
        %v3305 = vpop.f32.mrf.mxu0
        %v3306 = vadd.f32 0.0, %v3305
        %3307 = vdwg.mxu0
        %v3309 = vsel %vm3009, %v3273, 0
        %3311 = vmatpush.msra.mxu0 0.0
        %3312 = vmatpush.msra.mxu0 0.0
        %3313 = vmatpush.msra.mxu0 0.0
        %3314 = vmatpush.msra.mxu0 0.0
        %3315 = vmatpush.msra.mxu0 0.0
        %3316 = vmatpush.msra.mxu0 0.0
        %3317 = vmatpush.msra.mxu0 0.0
        %3318 = vmatpush.msra.mxu0 0.0
        %3319 = vmatpush.msra.mxu0 0.0
        %3320 = vmatpush.msra.mxu0 0.0
        %3321 = vmatpush.msra.mxu0 0.0
        %3322 = vmatpush.msra.mxu0 0.0
        %3323 = vmatpush.msra.mxu0 0.0
        %3324 = vmatpush.msra.mxu0 0.0
        %3325 = vmatpush.msra.mxu0 %v3275
        %3326 = vmatpush.msra.mxu0 %v3274
        %3327 = vmatmul.f32.gmra.mxu0 %v3309
        %v3328 = vpop.f32.mrf.mxu0
        %v3329 = vadd.f32 %v3306, %v3328
        %3330 = vdwg.mxu0
        %v3331 = vld [vmem:[#allocation5 + $0x2] sm:$0x1]
        %v3332 = vld [vmem:[#allocation5 + $0x22] sm:$0x1]
        %v3334 = vrot.slane %v3332, 7
        %v3336 = vsel %vm3272, %v3331, %v3334
        %s3337 = scalar_lea.vmem %s3, 32
        %v3338 = vld [vmem:[%s3337] sm:$0xff]
        %v3339 = vld [vmem:[%s3337 + $0x8] sm:$0xff]
        %v3341 = vsel %vm3009, %v3336, 0
        %3343 = vmatpush.msra.mxu0 0.0
        %3344 = vmatpush.msra.mxu0 0.0
        %3345 = vmatpush.msra.mxu0 0.0
        %3346 = vmatpush.msra.mxu0 0.0
        %3347 = vmatpush.msra.mxu0 0.0
        %3348 = vmatpush.msra.mxu0 0.0
        %3349 = vmatpush.msra.mxu0 0.0
        %3350 = vmatpush.msra.mxu0 0.0
        %3351 = vmatpush.msra.mxu0 0.0
        %3352 = vmatpush.msra.mxu0 0.0
        %3353 = vmatpush.msra.mxu0 0.0
        %3354 = vmatpush.msra.mxu0 0.0
        %3355 = vmatpush.msra.mxu0 0.0
        %3356 = vmatpush.msra.mxu0 0.0
        %3357 = vmatpush.msra.mxu0 %v3339
        %3358 = vmatpush.msra.mxu0 %v3338
        %3359 = vmatmul.f32.gmra.mxu0 %v3341
        %v3360 = vpop.f32.mrf.mxu0
        %v3361 = vadd.f32 0.0, %v3360
        %3362 = vdwg.mxu0
        %v3363 = vadd.f32 %v3329, %v3361
        %v3364 = vld [vmem:[#allocation5 + $0x8] sm:$0x1]
        %v3365 = vld [vmem:[#allocation5 + $0x28] sm:$0x1]
        %v3367 = vrot.slane %v3365, 7
        %v3369 = vsel %vm3272, %v3364, %v3367
        %s3370 = scalar_lea.vmem %s3, 48
        %v3371 = vld [vmem:[%s3370] sm:$0xff]
        %v3372 = vld [vmem:[%s3370 + $0x8] sm:$0xff]
        %v3374 = vsel %vm3009, %v3369, 0
        %3376 = vmatpush.msra.mxu0 0.0
        %3377 = vmatpush.msra.mxu0 0.0
        %3378 = vmatpush.msra.mxu0 0.0
        %3379 = vmatpush.msra.mxu0 0.0
        %3380 = vmatpush.msra.mxu0 0.0
        %3381 = vmatpush.msra.mxu0 0.0
        %3382 = vmatpush.msra.mxu0 0.0
        %3383 = vmatpush.msra.mxu0 0.0
        %3384 = vmatpush.msra.mxu0 0.0
        %3385 = vmatpush.msra.mxu0 0.0
        %3386 = vmatpush.msra.mxu0 0.0
        %3387 = vmatpush.msra.mxu0 0.0
        %3388 = vmatpush.msra.mxu0 0.0
        %3389 = vmatpush.msra.mxu0 0.0
        %3390 = vmatpush.msra.mxu0 %v3372
        %3391 = vmatpush.msra.mxu0 %v3371
        %3392 = vmatmul.f32.gmra.mxu0 %v3374
        %v3393 = vpop.f32.mrf.mxu0
        %v3394 = vadd.f32 0.0, %v3393
        %3395 = vdwg.mxu0
        %v3396 = vadd.f32 %v3363, %v3394
        %v3397 = vld [vmem:[#allocation5 + $0x9] sm:$0x1]
        %v3398 = vld [vmem:[#allocation5 + $0x29] sm:$0x1]
        %v3400 = vrot.slane %v3398, 7
        %v3402 = vsel %vm3272, %v3397, %v3400
        %s3403 = scalar_lea.vmem %s3, 64
        %v3404 = vld [vmem:[%s3403] sm:$0xff]
        %v3405 = vld [vmem:[%s3403 + $0x8] sm:$0xff]
        %v3407 = vsel %vm3009, %v3402, 0
        %3409 = vmatpush.msra.mxu0 0.0
        %3410 = vmatpush.msra.mxu0 0.0
        %3411 = vmatpush.msra.mxu0 0.0
        %3412 = vmatpush.msra.mxu0 0.0
        %3413 = vmatpush.msra.mxu0 0.0
        %3414 = vmatpush.msra.mxu0 0.0
        %3415 = vmatpush.msra.mxu0 0.0
        %3416 = vmatpush.msra.mxu0 0.0
        %3417 = vmatpush.msra.mxu0 0.0
        %3418 = vmatpush.msra.mxu0 0.0
        %3419 = vmatpush.msra.mxu0 0.0
        %3420 = vmatpush.msra.mxu0 0.0
        %3421 = vmatpush.msra.mxu0 0.0
        %3422 = vmatpush.msra.mxu0 0.0
        %3423 = vmatpush.msra.mxu0 %v3405
        %3424 = vmatpush.msra.mxu0 %v3404
        %3425 = vmatmul.f32.gmra.mxu0 %v3407
        %v3426 = vpop.f32.mrf.mxu0
        %v3427 = vadd.f32 0.0, %v3426
        %3428 = vdwg.mxu0
        %v3429 = vadd.f32 %v3396, %v3427
        %v3430 = vld [vmem:[#allocation5 + $0xa] sm:$0x1]
        %v3431 = vld [vmem:[#allocation5 + $0x2a] sm:$0x1]
        %v3433 = vrot.slane %v3431, 7
        %v3435 = vsel %vm3272, %v3430, %v3433
        %s3436 = scalar_lea.vmem %s3, 80
        %v3437 = vld [vmem:[%s3436] sm:$0xff]
        %v3438 = vld [vmem:[%s3436 + $0x8] sm:$0xff]
        %v3440 = vsel %vm3009, %v3435, 0
        %3442 = vmatpush.msra.mxu0 0.0
        %3443 = vmatpush.msra.mxu0 0.0
        %3444 = vmatpush.msra.mxu0 0.0
        %3445 = vmatpush.msra.mxu0 0.0
        %3446 = vmatpush.msra.mxu0 0.0
        %3447 = vmatpush.msra.mxu0 0.0
        %3448 = vmatpush.msra.mxu0 0.0
        %3449 = vmatpush.msra.mxu0 0.0
        %3450 = vmatpush.msra.mxu0 0.0
        %3451 = vmatpush.msra.mxu0 0.0
        %3452 = vmatpush.msra.mxu0 0.0
        %3453 = vmatpush.msra.mxu0 0.0
        %3454 = vmatpush.msra.mxu0 0.0
        %3455 = vmatpush.msra.mxu0 0.0
        %3456 = vmatpush.msra.mxu0 %v3438
        %3457 = vmatpush.msra.mxu0 %v3437
        %3458 = vmatmul.f32.gmra.mxu0 %v3440
        %v3459 = vpop.f32.mrf.mxu0
        %v3460 = vadd.f32 0.0, %v3459
        %3461 = vdwg.mxu0
        %v3462 = vadd.f32 %v3429, %v3460
        %v3463 = vld [vmem:[#allocation5 + $0x10] sm:$0x1]
        %v3464 = vld [vmem:[#allocation5 + $0x30] sm:$0x1]
        %v3466 = vrot.slane %v3464, 7
        %v3468 = vsel %vm3272, %v3463, %v3466
        %s3469 = scalar_lea.vmem %s3, 96
        %v3470 = vld [vmem:[%s3469] sm:$0xff]
        %v3471 = vld [vmem:[%s3469 + $0x8] sm:$0xff]
        %v3473 = vsel %vm3009, %v3468, 0
        %3475 = vmatpush.msra.mxu0 0.0
        %3476 = vmatpush.msra.mxu0 0.0
        %3477 = vmatpush.msra.mxu0 0.0
        %3478 = vmatpush.msra.mxu0 0.0
        %3479 = vmatpush.msra.mxu0 0.0
        %3480 = vmatpush.msra.mxu0 0.0
        %3481 = vmatpush.msra.mxu0 0.0
        %3482 = vmatpush.msra.mxu0 0.0
        %3483 = vmatpush.msra.mxu0 0.0
        %3484 = vmatpush.msra.mxu0 0.0
        %3485 = vmatpush.msra.mxu0 0.0
        %3486 = vmatpush.msra.mxu0 0.0
        %3487 = vmatpush.msra.mxu0 0.0
        %3488 = vmatpush.msra.mxu0 0.0
        %3489 = vmatpush.msra.mxu0 %v3471
        %3490 = vmatpush.msra.mxu0 %v3470
        %3491 = vmatmul.f32.gmra.mxu0 %v3473
        %v3492 = vpop.f32.mrf.mxu0
        %v3493 = vadd.f32 0.0, %v3492
        %3494 = vdwg.mxu0
        %v3495 = vadd.f32 %v3462, %v3493
        %v3496 = vld [vmem:[#allocation5 + $0x11] sm:$0x1]
        %v3497 = vld [vmem:[#allocation5 + $0x31] sm:$0x1]
        %v3499 = vrot.slane %v3497, 7
        %v3501 = vsel %vm3272, %v3496, %v3499
        %s3502 = scalar_lea.vmem %s3, 112
        %v3503 = vld [vmem:[%s3502] sm:$0xff]
        %v3504 = vld [vmem:[%s3502 + $0x8] sm:$0xff]
        %v3506 = vsel %vm3009, %v3501, 0
        %3508 = vmatpush.msra.mxu0 0.0
        %3509 = vmatpush.msra.mxu0 0.0
        %3510 = vmatpush.msra.mxu0 0.0
        %3511 = vmatpush.msra.mxu0 0.0
        %3512 = vmatpush.msra.mxu0 0.0
        %3513 = vmatpush.msra.mxu0 0.0
        %3514 = vmatpush.msra.mxu0 0.0
        %3515 = vmatpush.msra.mxu0 0.0
        %3516 = vmatpush.msra.mxu0 0.0
        %3517 = vmatpush.msra.mxu0 0.0
        %3518 = vmatpush.msra.mxu0 0.0
        %3519 = vmatpush.msra.mxu0 0.0
        %3520 = vmatpush.msra.mxu0 0.0
        %3521 = vmatpush.msra.mxu0 0.0
        %3522 = vmatpush.msra.mxu0 %v3504
        %3523 = vmatpush.msra.mxu0 %v3503
        %3524 = vmatmul.f32.gmra.mxu0 %v3506
        %v3525 = vpop.f32.mrf.mxu0
        %v3526 = vadd.f32 0.0, %v3525
        %3527 = vdwg.mxu0
        %v3528 = vadd.f32 %v3495, %v3526
        %v3529 = vld [vmem:[#allocation5 + $0x12] sm:$0x1]
        %v3530 = vld [vmem:[#allocation5 + $0x32] sm:$0x1]
        %v3532 = vrot.slane %v3530, 7
        %v3534 = vsel %vm3272, %v3529, %v3532
        %s3535 = scalar_lea.vmem %s3, 128
        %v3536 = vld [vmem:[%s3535] sm:$0xff]
        %v3537 = vld [vmem:[%s3535 + $0x8] sm:$0xff]
        %v3539 = vsel %vm3009, %v3534, 0
        %3541 = vmatpush.msra.mxu0 0.0
        %3542 = vmatpush.msra.mxu0 0.0
        %3543 = vmatpush.msra.mxu0 0.0
        %3544 = vmatpush.msra.mxu0 0.0
        %3545 = vmatpush.msra.mxu0 0.0
        %3546 = vmatpush.msra.mxu0 0.0
        %3547 = vmatpush.msra.mxu0 0.0
        %3548 = vmatpush.msra.mxu0 0.0
        %3549 = vmatpush.msra.mxu0 0.0
        %3550 = vmatpush.msra.mxu0 0.0
        %3551 = vmatpush.msra.mxu0 0.0
        %3552 = vmatpush.msra.mxu0 0.0
        %3553 = vmatpush.msra.mxu0 0.0
        %3554 = vmatpush.msra.mxu0 0.0
        %3555 = vmatpush.msra.mxu0 %v3537
        %3556 = vmatpush.msra.mxu0 %v3536
        %3557 = vmatmul.f32.gmra.mxu0 %v3539
        %v3558 = vpop.f32.mrf.mxu0
        %v3559 = vadd.f32 0.0, %v3558
        %3560 = vdwg.mxu0
        %v3561 = vadd.f32 %v3528, %v3559
        %v3562 = vld [vmem:[#allocation5 + $0x18] sm:$0x1]
        %v3563 = vld [vmem:[#allocation5 + $0x38] sm:$0x1]
        %v3565 = vrot.slane %v3563, 7
        %v3567 = vsel %vm3272, %v3562, %v3565
        %s3568 = scalar_lea.vmem %s3, 144
        %v3569 = vld [vmem:[%s3568] sm:$0xff]
        %v3570 = vld [vmem:[%s3568 + $0x8] sm:$0xff]
        %v3572 = vsel %vm3009, %v3567, 0
        %3574 = vmatpush.msra.mxu0 0.0
        %3575 = vmatpush.msra.mxu0 0.0
        %3576 = vmatpush.msra.mxu0 0.0
        %3577 = vmatpush.msra.mxu0 0.0
        %3578 = vmatpush.msra.mxu0 0.0
        %3579 = vmatpush.msra.mxu0 0.0
        %3580 = vmatpush.msra.mxu0 0.0
        %3581 = vmatpush.msra.mxu0 0.0
        %3582 = vmatpush.msra.mxu0 0.0
        %3583 = vmatpush.msra.mxu0 0.0
        %3584 = vmatpush.msra.mxu0 0.0
        %3585 = vmatpush.msra.mxu0 0.0
        %3586 = vmatpush.msra.mxu0 0.0
        %3587 = vmatpush.msra.mxu0 0.0
        %3588 = vmatpush.msra.mxu0 %v3570
        %3589 = vmatpush.msra.mxu0 %v3569
        %3590 = vmatmul.f32.gmra.mxu0 %v3572
        %v3591 = vpop.f32.mrf.mxu0
        %v3592 = vadd.f32 0.0, %v3591
        %3593 = vdwg.mxu0
        %v3594 = vadd.f32 %v3561, %v3592
        %v3595 = vld [vmem:[#allocation5 + $0x19] sm:$0x1]
        %v3596 = vld [vmem:[#allocation5 + $0x39] sm:$0x1]
        %v3598 = vrot.slane %v3596, 7
        %v3600 = vsel %vm3272, %v3595, %v3598
        %s3601 = scalar_lea.vmem %s3, 160
        %v3602 = vld [vmem:[%s3601] sm:$0xff]
        %v3603 = vld [vmem:[%s3601 + $0x8] sm:$0xff]
        %v3605 = vsel %vm3009, %v3600, 0
        %3607 = vmatpush.msra.mxu0 0.0
        %3608 = vmatpush.msra.mxu0 0.0
        %3609 = vmatpush.msra.mxu0 0.0
        %3610 = vmatpush.msra.mxu0 0.0
        %3611 = vmatpush.msra.mxu0 0.0
        %3612 = vmatpush.msra.mxu0 0.0
        %3613 = vmatpush.msra.mxu0 0.0
        %3614 = vmatpush.msra.mxu0 0.0
        %3615 = vmatpush.msra.mxu0 0.0
        %3616 = vmatpush.msra.mxu0 0.0
        %3617 = vmatpush.msra.mxu0 0.0
        %3618 = vmatpush.msra.mxu0 0.0
        %3619 = vmatpush.msra.mxu0 0.0
        %3620 = vmatpush.msra.mxu0 0.0
        %3621 = vmatpush.msra.mxu0 %v3603
        %3622 = vmatpush.msra.mxu0 %v3602
        %3623 = vmatmul.f32.gmra.mxu0 %v3605
        %v3624 = vpop.f32.mrf.mxu0
        %v3625 = vadd.f32 0.0, %v3624
        %3626 = vdwg.mxu0
        %v3627 = vadd.f32 %v3594, %v3625
        %v3628 = vld [vmem:[#allocation5 + $0x1a] sm:$0x1]
        %v3629 = vld [vmem:[#allocation5 + $0x3a] sm:$0x1]
        %v3631 = vrot.slane %v3629, 7
        %v3633 = vsel %vm3272, %v3628, %v3631
        %s3634 = scalar_lea.vmem %s3, 176
        %v3635 = vld [vmem:[%s3634] sm:$0xff]
        %v3636 = vld [vmem:[%s3634 + $0x8] sm:$0xff]
        %v3638 = vsel %vm3009, %v3633, 0
        %3640 = vmatpush.msra.mxu0 0.0
        %3641 = vmatpush.msra.mxu0 0.0
        %3642 = vmatpush.msra.mxu0 0.0
        %3643 = vmatpush.msra.mxu0 0.0
        %3644 = vmatpush.msra.mxu0 0.0
        %3645 = vmatpush.msra.mxu0 0.0
        %3646 = vmatpush.msra.mxu0 0.0
        %3647 = vmatpush.msra.mxu0 0.0
        %3648 = vmatpush.msra.mxu0 0.0
        %3649 = vmatpush.msra.mxu0 0.0
        %3650 = vmatpush.msra.mxu0 0.0
        %3651 = vmatpush.msra.mxu0 0.0
        %3652 = vmatpush.msra.mxu0 0.0
        %3653 = vmatpush.msra.mxu0 0.0
        %3654 = vmatpush.msra.mxu0 %v3636
        %3655 = vmatpush.msra.mxu0 %v3635
        %3656 = vmatmul.f32.gmra.mxu0 %v3638
        %v3657 = vpop.f32.mrf.mxu0
        %v3658 = vadd.f32 0.0, %v3657
        %3659 = vdwg.mxu0
        %v3660 = vadd.f32 %v3627, %v3658
        %3661 = vrot.lane.b32.xlu0 %v321, 88
        %v3662 = vpop.permute.xlu0 %3661
        %v3664 = vadd.f32 %v3660, %v3662
        %v3665 = vld [vmem:[%s4] sm:$0xff]
        %v3666 = vld [vmem:[%s4 + $0x8] sm:$0xff]
        %v3667 = vld [vmem:[%s4 + $0x10] sm:$0xff]
        %v3668 = vld [vmem:[%s4 + $0x18] sm:$0xff]
        %v3669 = vld [vmem:[%s4 + $0x20] sm:$0xff]
        %v3670 = vld [vmem:[%s4 + $0x28] sm:$0xff]
        %v3671 = vld [vmem:[%s4 + $0x30] sm:$0xff]
        %v3672 = vld [vmem:[%s4 + $0x38] sm:$0xff]
        %3673 = vrot.lane.b32.xlu0 %v321, 24
        %v3674 = vpop.permute.xlu0 %3673
        %vm3676 = vcmask 523264
        %v3678 = vsel %vm3676, %v3664, 0
        %3680 = vmatpush.msra.mxu0 0.0
        %3681 = vmatpush.msra.mxu0 0.0
        %3682 = vmatpush.msra.mxu0 0.0
        %3683 = vmatpush.msra.mxu0 0.0
        %3684 = vmatpush.msra.mxu0 0.0
        %3685 = vmatpush.msra.mxu0 0.0
        %3686 = vmatpush.msra.mxu0 0.0
        %3687 = vmatpush.msra.mxu0 0.0
        %3688 = vmatpush.msra.mxu0 %v3672
        %3689 = vmatpush.msra.mxu0 %v3671
        %3690 = vmatpush.msra.mxu0 %v3670
        %3691 = vmatpush.msra.mxu0 %v3669
        %3692 = vmatpush.msra.mxu0 %v3668
        %3693 = vmatpush.msra.mxu0 %v3667
        %3694 = vmatpush.msra.mxu0 %v3666
        %3695 = vmatpush.msra.mxu0 %v3665
        %3696 = vmatmul.f32.gmra.mxu0 %v3678
        %v3697 = vpop.f32.mrf.mxu0
        %v3698 = vadd.f32 %v3674, %v3697
        %3699 = vdwg.mxu0
        %vm3700 = vcmask 41984
        %v3701 = vsel %vm3700, %v3698, -inf
        %3702 = vmax.xlane.f32.xlu0 %v3701
        %v3703 = vpop.xlane.xlu0 %3702
        %v3704 = vsub.f32 %v3698, %v3703
        %v3705 = vmul.f32 %v3704, 1.442695
        %v3706 = vpow.pop %v3705
        %v3707 = vsel %vm3700, %v3706, 0.0
        %3708 = vadd.xlane.f32.xlu0 %v3707
        %v3709 = vpop.xlane.xlu0 %3708
        %v3710 = vrcp.pop %v3709
        %v3711 = vmul.f32 %v3709, %v3710
        %v3712 = vsub.f32 1.0, %v3711
        %v3713 = vmul.f32 %v3710, %v3712
        %v3714 = vadd.f32 %v3710, %v3713
        %vm3715 = vweird.f32 %v3709
        %vm3716 = vweird.f32 %v3710
        %vm3717 = vmor %vm3715, %vm3716
        %v3718 = vsel %vm3717, %v3710, %v3714
        %v3719 = vand.u32 2147483647, %v3709
        %vm3720 = vcmp.eq.f32.partialorder %v3719, 8.507059e+37
        %v3721 = vand.u32 %v3709, 2147483648
        %v3722 = vor.u32 1.1754944e-38, %v3721
        %v3723 = vsel %vm3720, %v3722, %v3718
        %v3724 = vmul.f32 %v3706, %v3723
        %3725 = vst.msk [vmem:[%s217] sm:$0x3] %vm3700, %v3724
        %s3726 = sand.u32 %s137, 1
        %s3727 = scalar_lea.sflag [#allocation8], %s3726
        %s3728 = sand.u32 %s137, 1
        %s3729 = smul.addr %s3728, 2
        %s3730 = scalar_lea.vmem [#allocation7], %s3729
        // Predicated region
        $region41: #{actor_forward.1} parent=39 // pred_check
          %p3731 = pneg %p147
        $region42: #{actor_forward.1} parent=39 // pred_check_branch
          %3733 = sbr.rel (%p3731) target = $region44
        $region43: #{actor_forward.1} parent=39 // pred_region
          %3735 = vsyncadd %s3727, 0
          %s3736 = smul.addr %s19, 2
          %s3737 = scalar_lea.hbm %s5, %s3736
          %s3739 = sshll.u32 %s3730, 4
          %s3740 = int_to_ptr.vmem [resolvable:$true] %s3739
          %s3741 = sshll.u32 %s3737, 4
          %s3742 = int_to_ptr.hbm [resolvable:$true] %s3741
          %3744 = dma.vmem_to_hbm [thread:$0]  %s3740, 32, %s3742, %s3727
        $region44: #{actor_forward.1} parent=39 // pred_fallthru
          _
      $region40: #{actor_forward.1} parent=5 // pred_fallthru
        _
      %p3745 = scmp.le.s32.totalorder 2, %s14
      // Predicated region
      $region45: #{actor_forward.1} parent=5 // pred_check
        %p3746 = pneg %p3745
      $region46: #{actor_forward.1} parent=5 // pred_check_branch
        %3748 = sbr.rel (%p3746) target = $region48
      $region47: #{actor_forward.1} parent=5 // pred_region
        %s3749 = ssub.s32 %s14, 2
        // Predicated region
        $region49: #{actor_forward.1} parent=47 // pred_check
          %p3750 = pneg %p153
        $region50: #{actor_forward.1} parent=47 // pred_check_branch
          %3752 = sbr.rel (%p3750) target = $region52
        $region51: #{actor_forward.1} parent=47 // pred_region
          %s3753 = sand.u32 %s138, 1
          %s3754 = scalar_lea.sflag [#allocation8], %s3753
          %s3755 = sand.u32 %s138, 1
          %s3756 = smul.addr %s3755, 2
          %s3757 = scalar_lea.vmem [#allocation7], %s3756
          %3759 = dma.done %s3754, 32
        $region52: #{actor_forward.1} parent=47 // pred_fallthru
          _
      $region48: #{actor_forward.1} parent=5 // pred_fallthru
        _
    $region6: #{actor_forward.1} parent=1 // loop_footer
      %s18 = sadd.s32 1, %s14
    $region7: #{actor_forward.1} parent=1 // loop_footer_branch
      %13 = sbr.rel target = $region3
    $region8: #{actor_forward.1} parent=1 // loop_exit
      _
    %3760 = vsyncpa [#allocation8], 1
    %s3761 = scalar_lea.sflag [#allocation8], 1
    %3762 = vsyncpa %s3761, 1

</llo_original>
